<compile_context>
chip_gen: v6e
topology: v6e:2x2x1
jax: 0.10.0
libtpu: 0.0.40
codegen_flags: <defaults>
</compile_context>

<pallas_src>
import functools

import jax
import jax.numpy as jnp
from jax.experimental import pallas as pl
from jax.experimental.pallas import tpu as pltpu

C = 64          # ResidualUnit is hard-wired to 64 channels
BN_EPS = 1e-5


# ---------------------------------------------------------------------------
# In-kernel helpers
# ---------------------------------------------------------------------------
def _fill_dx_blocks(pad_ref, stage_ref, base, img, *, H, W):
    """Write one (HW, C) f32 image into the dx-replicated bf16 halo scratch.

    pad_ref rows [base+W, base+W+HW), per flat pixel q = h*W + w:
      cols [0,  C)  = img[h, w-1]   (0 at w == 0)
      cols [C, 2C)  = img[h, w]
      cols [2C,3C)  = img[h, w+1]   (0 at w == W-1)
    plus W zero halo rows above and below, so each 3x3-conv dy tap group is one
    contiguous (M, 3C) slice of pad_ref (no masking / concat at matmul time).
    """
    HW = H * W
    RPI = (H + 2) * W

    # Zero only the halo rows (scratch persists across grid steps / cores, so this
    # is done every step; it is 2*W rows per image, not the whole scratch).
    pad_ref[base:base + W, :] = jnp.zeros((W, 3 * C), jnp.bfloat16)
    pad_ref[base + W + HW:base + RPI, :] = jnp.zeros((W, 3 * C), jnp.bfloat16)
    stage_ref[base:base + W, :] = jnp.zeros((W, C), jnp.float32)
    stage_ref[base + W + HW:base + RPI, :] = jnp.zeros((W, C), jnp.float32)

    # Stage the image in f32 so the +/-1-row shifted copies are plain offset reads.
    stage_ref[base + W:base + W + HW, :] = img

    cb = img.astype(jnp.bfloat16)
    # Border mask is recomputed here (short live range) instead of being hoisted
    # across the whole unrolled body.
    col = jax.lax.broadcasted_iota(jnp.int32, (HW, C), 0) % W
    zero = jnp.zeros_like(cb)

    down = stage_ref[base + W - 1:base + W - 1 + HW, :].astype(jnp.bfloat16)
    left = jnp.where(col == 0, zero, down)          # pixel (h, w-1); 0 at w == 0
    up = stage_ref[base + W + 1:base + W + 1 + HW, :].astype(jnp.bfloat16)
    right = jnp.where(col == W - 1, zero, up)       # pixel (h, w+1); 0 at w == W-1

    pad_ref[base + W:base + W + HW, :] = jnp.concatenate([left, cb, right], axis=1)


def _conv3x3_stacked(pad_ref, w_ref, *, MT, W):
    """3x3 'same' conv over all stacked images: 3 (MT, 3C) @ (3C, C) bf16 MXU matmuls.

    Output row r of the result is the conv output for the scratch row r + W; the
    rows that correspond to halo rows are discarded by the caller.
    """
    acc = jnp.dot(pad_ref[0:MT, :], w_ref[0], preferred_element_type=jnp.float32)
    acc = acc + jnp.dot(pad_ref[W:W + MT, :], w_ref[1],
                        preferred_element_type=jnp.float32)
    acc = acc + jnp.dot(pad_ref[2 * W:2 * W + MT, :], w_ref[2],
                        preferred_element_type=jnp.float32)
    return acc


# ---------------------------------------------------------------------------
# Pallas kernel
# ---------------------------------------------------------------------------
def residual_unit_kernel(x_ref, w1_ref, w2_ref, prm_ref, out_ref,
                         xpad_ref, midpad_ref, stage_ref, *, H, W, NB):
    HW = H * W
    RPI = (H + 2) * W          # rows per image in the halo'd scratch (W pad each side)
    MT = NB * RPI - 2 * W      # stacked matmul M; image b's outputs are rows
                               # [b*RPI, b*RPI + HW) of the matmul result

    # Packed per-channel parameters: rows = s1, b1, alpha, s2, b2 (one DMA).
    s1 = prm_ref[0:1, :]
    b1 = prm_ref[1:2, :]
    alpha = prm_ref[2:3, :]
    s2 = prm_ref[3:4, :]
    b2 = prm_ref[4:5, :]

    # conv1: Conv2d(64, 64, 3, 1, 'same').  Intermediates never touch HBM.
    for b in range(NB):                              # NB is capped small (<= 4)
        _fill_dx_blocks(xpad_ref, stage_ref, b * RPI, x_ref[b], H=H, W=W)
    y1 = _conv3x3_stacked(xpad_ref, w1_ref, MT=MT, W=W)

    # BN1 (folded scale/shift) + per-channel PReLU, then build the conv2 input.
    for b in range(NB):
        y = y1[b * RPI:b * RPI + HW, :] * s1 + b1
        y = jnp.where(y > 0.0, y, alpha * y)
        _fill_dx_blocks(midpad_ref, stage_ref, b * RPI, y, H=H, W=W)

    # conv2: Conv2d(64, 64, 3, 1, 'same') + BN2, then residual add.
    y2 = _conv3x3_stacked(midpad_ref, w2_ref, MT=MT, W=W)
    for b in range(NB):
        o = y2[b * RPI:b * RPI + HW, :] * s2 + b2 + x_ref[b]
        out_ref[b] = o.astype(out_ref.dtype)


# ---------------------------------------------------------------------------
# pallas_call wrapper
# ---------------------------------------------------------------------------
def _pick_batch_block(N, H, W, vmem_cap):
    """Largest NB (<= 4, divides N) that fits the VMEM budget and keeps >= 2 grid
    steps when possible (v7x has 2 TensorCores; a 1-step 'parallel' grid idles one)."""
    HW = H * W
    RPI = (H + 2) * W
    budget = vmem_cap // 2          # headroom for weights, temporaries, pipelining
    best = 1
    for nb in range(1, min(N, 4) + 1):
        if N % nb:
            continue
        if N >= 2 and N // nb < 2:
            continue                # keep at least 2 grid steps for megacore
        mtot = nb * RPI
        need = (2 * 2 * nb * HW * C * 4          # double-buffered x + out blocks (f32)
                + 2 * mtot * 3 * C * 2           # xpad + midpad halo scratches (bf16)
                + mtot * C * 4                   # f32 staging scratch
                + 2 * mtot * C * 4)              # f32 conv accumulator temporaries
        if need <= budget:
            best = nb
    return best


def residual_unit_forward(x_nhwc, params, *, batch_block=None):
    """x_nhwc: (N, H, W, 64) float32. Returns (N, H, W, 64) float32."""
    N, H, W, Cc = x_nhwc.shape
    assert Cc == C
    HW = H * W
    RPI = (H + 2) * W

    # Generation-aware VMEM budget (v5e/v6e: 128 MiB, v7x: 64 MiB physical).
    try:
        info = pltpu.get_tpu_info()
        vmem_cap = int(getattr(info, "vmem_capacity_bytes", 64 * 1024 * 1024))
    except Exception:
        vmem_cap = 64 * 1024 * 1024  # conservative default (v7x-sized)

    if batch_block is None:
        batch_block = _pick_batch_block(N, H, W, vmem_cap)
    NB = batch_block
    assert N % NB == 0

    # Weights regrouped as (dy, dx*C + ci, co) and pre-cast to bf16 for the MXU.
    w1 = params["w1"].reshape(3, 3 * C, C).astype(jnp.bfloat16)
    w2 = params["w2"].reshape(3, 3 * C, C).astype(jnp.bfloat16)

    # Pack the five per-channel rows into one sublane-aligned (8, C) array.
    prm = jnp.zeros((8, C), jnp.float32)
    prm = prm.at[0].set(params["s1"]).at[1].set(params["b1"])
    prm = prm.at[2].set(params["alpha"]).at[3].set(params["s2"]).at[4].set(params["b2"])

    x_flat = x_nhwc.reshape(N, HW, C)                # metadata-only reshape

    kern = functools.partial(residual_unit_kernel, H=H, W=W, NB=NB)
    out_flat = pl.pallas_call(
        kern,
        out_shape=jax.ShapeDtypeStruct((N, HW, C), jnp.float32),
        grid=(N // NB,),
        in_specs=[
            pl.BlockSpec((NB, HW, C), lambda g: (g, 0, 0)),      # x (f32, contiguous DMA)
            pl.BlockSpec((3, 3 * C, C), lambda g: (0, 0, 0)),    # w1 (bf16)
            pl.BlockSpec((3, 3 * C, C), lambda g: (0, 0, 0)),    # w2 (bf16)
            pl.BlockSpec((8, C), lambda g: (0, 0)),              # packed BN/PReLU params
        ],
        out_specs=pl.BlockSpec((NB, HW, C), lambda g: (g, 0, 0)),
        scratch_shapes=[
            pltpu.VMEM((NB * RPI, 3 * C), jnp.bfloat16),         # conv1 halo'd input
            pltpu.VMEM((NB * RPI, 3 * C), jnp.bfloat16),         # conv2 halo'd input
            pltpu.VMEM((NB * RPI, C), jnp.float32),              # f32 staging (shift src)
        ],
        compiler_params=pltpu.CompilerParams(
            dimension_semantics=("parallel",),
            vmem_limit_bytes=int(vmem_cap * 3 // 4),
        ),
    )(x_flat, w1, w2, prm)
    return out_flat.reshape(N, H, W, C)


# ---------------------------------------------------------------------------
# Deterministic parameter construction (synthetic; mirrors __init__ shapes)
# ---------------------------------------------------------------------------
def _fold_bn(gamma, beta, mean, var, conv_bias):
    scale = gamma / jnp.sqrt(var + BN_EPS)
    shift = beta + scale * (conv_bias - mean)
    return scale, shift


def init_params(key):
    ks = jax.random.split(key, 12)
    # Conv weights stored as (kh, kw, Cin, Cout) (HWIO), equivalent to a transposed
    # PyTorch (Cout, Cin, kh, kw) tensor.
    w1 = jax.random.normal(ks[0], (3, 3, C, C), jnp.float32) * 0.05
    b1_conv = jax.random.normal(ks[1], (C,), jnp.float32) * 0.05
    w2 = jax.random.normal(ks[2], (3, 3, C, C), jnp.float32) * 0.05
    b2_conv = jax.random.normal(ks[3], (C,), jnp.float32) * 0.05

    g1 = 1.0 + 0.1 * jax.random.normal(ks[4], (C,), jnp.float32)
    be1 = 0.1 * jax.random.normal(ks[5], (C,), jnp.float32)
    m1 = 0.1 * jax.random.normal(ks[6], (C,), jnp.float32)
    v1 = jax.random.uniform(ks[7], (C,), jnp.float32, 0.5, 1.5)

    g2 = 1.0 + 0.1 * jax.random.normal(ks[8], (C,), jnp.float32)
    be2 = 0.1 * jax.random.normal(ks[9], (C,), jnp.float32)
    m2 = 0.1 * jax.random.normal(ks[10], (C,), jnp.float32)
    v2 = jax.random.uniform(ks[11], (C,), jnp.float32, 0.5, 1.5)

    alpha = jnp.full((C,), 0.25, jnp.float32)   # PReLU(64) default init

    s1, sh1 = _fold_bn(g1, be1, m1, v1, b1_conv)
    s2, sh2 = _fold_bn(g2, be2, m2, v2, b2_conv)
    return {"w1": w1, "s1": s1, "b1": sh1, "alpha": alpha,
            "w2": w2, "s2": s2, "b2": sh2}


# ---------------------------------------------------------------------------
# Pure-JAX reference with the same numerics as the kernel (bf16 MXU operands,
# f32 accumulation, f32 BN/PReLU epilogues) for the correctness check.
# ---------------------------------------------------------------------------
def ref_forward(x_nhwc, params):
    def conv(x, w):
        return jax.lax.conv_general_dilated(
            x.astype(jnp.bfloat16), w.astype(jnp.bfloat16),
            window_strides=(1, 1), padding="SAME",
            dimension_numbers=("NHWC", "HWIO", "NHWC"),
            preferred_element_type=jnp.float32)

    s1 = params["s1"].reshape(1, 1, 1, C)
    b1 = params["b1"].reshape(1, 1, 1, C)
    s2 = params["s2"].reshape(1, 1, 1, C)
    b2 = params["b2"].reshape(1, 1, 1, C)
    alpha = params["alpha"].reshape(1, 1, 1, C)

    y = conv(x_nhwc, params["w1"]) * s1 + b1
    y = jnp.where(y > 0.0, y, alpha * y)
    y2 = conv(y, params["w2"]) * s2 + b2
    return x_nhwc + y2


# ---------------------------------------------------------------------------
if __name__ == "__main__":
    key = jax.random.PRNGKey(0)
    kx, kp = jax.random.split(key)

    # PyTorch-style NCHW input: batch=2, channels=64 (fixed by the module), 16x16.
    x_nchw = jax.random.normal(kx, (2, C, 16, 16), jnp.float32)
    params = init_params(kp)

    x_nhwc = jnp.transpose(x_nchw, (0, 2, 3, 1))
    out_nhwc = residual_unit_forward(x_nhwc, params)
    out_nchw = jnp.transpose(out_nhwc, (0, 3, 1, 2))
    out_nchw = jax.block_until_ready(out_nchw)

    ref_nchw = jnp.transpose(ref_forward(x_nhwc, params), (0, 3, 1, 2))
    assert out_nchw.shape == x_nchw.shape and out_nchw.dtype == jnp.float32
    assert jnp.allclose(out_nchw, ref_nchw, atol=5e-3, rtol=5e-3), \
        "mismatch vs JAX reference"

    print("KERNEL_OK")
</pallas_src>

<mosaic_0001>
module attributes {stable_mosaic.version = 11 : i64} {
  func.func @residual_unit_kernel(%arg0: i32, %arg1: memref<1x256x64xf32, #tpu.memory_space<vmem>>, %arg2: memref<3x192x64xbf16, #tpu.memory_space<vmem>>, %arg3: memref<3x192x64xbf16, #tpu.memory_space<vmem>>, %arg4: memref<8x64xf32, #tpu.memory_space<vmem>>, %arg5: memref<1x256x64xf32, #tpu.memory_space<vmem>>, %arg6: memref<288x192xbf16, #tpu.memory_space<vmem>>, %arg7: memref<288x192xbf16, #tpu.memory_space<vmem>>, %arg8: memref<288x64xf32, #tpu.memory_space<vmem>>) attributes {dimension_semantics = [#tpu.dimension_semantics<parallel>], iteration_bounds = array<i64: 2>, scalar_prefetch = 0 : i64, scratch_operands = 3 : i64, tpu.core_type = #tpu.core_type<tc>, window_params = [{transform_indices = @transform_0, window_bounds = array<i64: 1, 256, 64>}, {pipeline_mode = #tpu.pipeline_mode<synchronous>, transform_indices = @transform_1, window_bounds = array<i64: 3, 192, 64>}, {pipeline_mode = #tpu.pipeline_mode<synchronous>, transform_indices = @transform_2, window_bounds = array<i64: 3, 192, 64>}, {pipeline_mode = #tpu.pipeline_mode<synchronous>, transform_indices = @transform_3, window_bounds = array<i64: 8, 64>}, {transform_indices = @transform_4, window_bounds = array<i64: 1, 256, 64>}]} {
    %c0 = arith.constant 0 : index
    %c0_0 = arith.constant 0 : index
    %0 = vector.load %arg4[%c0, %c0_0] : memref<8x64xf32, #tpu.memory_space<vmem>>, vector<1x64xf32>
    %c1 = arith.constant 1 : index
    %c0_1 = arith.constant 0 : index
    %1 = vector.load %arg4[%c1, %c0_1] : memref<8x64xf32, #tpu.memory_space<vmem>>, vector<1x64xf32>
    %c2 = arith.constant 2 : index
    %c0_2 = arith.constant 0 : index
    %2 = vector.load %arg4[%c2, %c0_2] : memref<8x64xf32, #tpu.memory_space<vmem>>, vector<1x64xf32>
    %c3 = arith.constant 3 : index
    %c0_3 = arith.constant 0 : index
    %3 = vector.load %arg4[%c3, %c0_3] : memref<8x64xf32, #tpu.memory_space<vmem>>, vector<1x64xf32>
    %c4 = arith.constant 4 : index
    %c0_4 = arith.constant 0 : index
    %4 = vector.load %arg4[%c4, %c0_4] : memref<8x64xf32, #tpu.memory_space<vmem>>, vector<1x64xf32>
    %c0_5 = arith.constant 0 : index
    %c0_6 = arith.constant 0 : index
    %c0_7 = arith.constant 0 : index
    %5 = vector.load %arg1[%c0_5, %c0_6, %c0_7] : memref<1x256x64xf32, #tpu.memory_space<vmem>>, vector<1x256x64xf32>
    %6 = vector.shape_cast %5 : vector<1x256x64xf32> to vector<256x64xf32>
    %cst = arith.constant 0.000000e+00 : bf16
    %7 = vector.broadcast %cst : bf16 to vector<16x192xbf16>
    %c0_8 = arith.constant 0 : index
    %c0_9 = arith.constant 0 : index
    %8 = vector.load %arg6[%c0_8, %c0_9] : memref<288x192xbf16, #tpu.memory_space<vmem>>, vector<16x192xbf16>
    tpu.vector_store %arg6[%c0_8, %c0_9], %7 {strides = array<i32>} : memref<288x192xbf16, #tpu.memory_space<vmem>>, vector<16x192xbf16>,
    %cst_10 = arith.constant 0.000000e+00 : bf16
    %9 = vector.broadcast %cst_10 : bf16 to vector<16x192xbf16>
    %c272 = arith.constant 272 : index
    %c0_11 = arith.constant 0 : index
    %10 = vector.load %arg6[%c272, %c0_11] : memref<288x192xbf16, #tpu.memory_space<vmem>>, vector<16x192xbf16>
    tpu.vector_store %arg6[%c272, %c0_11], %9 {strides = array<i32>} : memref<288x192xbf16, #tpu.memory_space<vmem>>, vector<16x192xbf16>,
    %cst_12 = arith.constant 0.000000e+00 : f32
    %11 = vector.broadcast %cst_12 : f32 to vector<16x64xf32>
    %c0_13 = arith.constant 0 : index
    %c0_14 = arith.constant 0 : index
    %12 = vector.load %arg8[%c0_13, %c0_14] : memref<288x64xf32, #tpu.memory_space<vmem>>, vector<16x64xf32>
    tpu.vector_store %arg8[%c0_13, %c0_14], %11 {strides = array<i32>} : memref<288x64xf32, #tpu.memory_space<vmem>>, vector<16x64xf32>,
    %cst_15 = arith.constant 0.000000e+00 : f32
    %13 = vector.broadcast %cst_15 : f32 to vector<16x64xf32>
    %c272_16 = arith.constant 272 : index
    %c0_17 = arith.constant 0 : index
    %14 = vector.load %arg8[%c272_16, %c0_17] : memref<288x64xf32, #tpu.memory_space<vmem>>, vector<16x64xf32>
    tpu.vector_store %arg8[%c272_16, %c0_17], %13 {strides = array<i32>} : memref<288x64xf32, #tpu.memory_space<vmem>>, vector<16x64xf32>,
    %c16 = arith.constant 16 : index
    %c0_18 = arith.constant 0 : index
    %15 = vector.load %arg8[%c16, %c0_18] : memref<288x64xf32, #tpu.memory_space<vmem>>, vector<256x64xf32>
    tpu.vector_store %arg8[%c16, %c0_18], %6 {strides = array<i32>} : memref<288x64xf32, #tpu.memory_space<vmem>>, vector<256x64xf32>,
    %16 = arith.truncf %6 : vector<256x64xf32> to vector<256x64xbf16>
    %17 = tpu.iota {dimensions = array<i32: 0>} : vector<256x64xi32>
    %c16_i32 = arith.constant 16 : i32
    %c0_i32 = arith.constant 0 : i32
    %18 = arith.cmpi eq, %c16_i32, %c0_i32 : i32
    %c1_i32 = arith.constant 1 : i32
    %19 = arith.select %18, %c1_i32, %c16_i32 : i32
    %20 = vector.broadcast %19 : i32 to vector<256x64xi32>
    %21 = arith.remsi %17, %20 : vector<256x64xi32>
    %c0_i32_19 = arith.constant 0 : i32
    %22 = vector.broadcast %c0_i32_19 : i32 to vector<256x64xi32>
    %23 = arith.cmpi ne, %21, %22 : vector<256x64xi32>
    %c0_i32_20 = arith.constant 0 : i32
    %24 = vector.broadcast %c0_i32_20 : i32 to vector<256x64xi32>
    %25 = arith.cmpi slt, %21, %24 : vector<256x64xi32>
    %c0_i32_21 = arith.constant 0 : i32
    %26 = arith.cmpi slt, %19, %c0_i32_21 : i32
    %27 = vector.broadcast %26 : i1 to vector<256x64xi1>
    %28 = vector.broadcast %27 : vector<256x64xi1> to vector<256x64xi1>
    %29 = arith.xori %25, %28 : vector<256x64xi1>
    %30 = arith.andi %29, %23 : vector<256x64xi1>
    %31 = vector.broadcast %19 : i32 to vector<256x64xi32>
    %32 = arith.addi %21, %31 : vector<256x64xi32>
    %33 = arith.select %30, %32, %21 : vector<256x64xi1>, vector<256x64xi32>
    %cst_22 = arith.constant 0.000000e+00 : bf16
    %34 = vector.broadcast %cst_22 : bf16 to vector<256x64xbf16>
    %c15 = arith.constant 15 : index
    %c0_23 = arith.constant 0 : index
    %35 = vector.load %arg8[%c15, %c0_23] : memref<288x64xf32, #tpu.memory_space<vmem>>, vector<256x64xf32>
    %36 = arith.truncf %35 : vector<256x64xf32> to vector<256x64xbf16>
    %c0_i32_24 = arith.constant 0 : i32
    %37 = vector.broadcast %c0_i32_24 : i32 to vector<256x64xi32>
    %38 = arith.cmpi eq, %33, %37 : vector<256x64xi32>
    %39 = arith.select %38, %34, %36 : vector<256x64xi1>, vector<256x64xbf16>
    %c17 = arith.constant 17 : index
    %c0_25 = arith.constant 0 : index
    %40 = vector.load %arg8[%c17, %c0_25] : memref<288x64xf32, #tpu.memory_space<vmem>>, vector<256x64xf32>
    %41 = arith.truncf %40 : vector<256x64xf32> to vector<256x64xbf16>
    %c15_i32 = arith.constant 15 : i32
    %42 = vector.broadcast %c15_i32 : i32 to vector<256x64xi32>
    %43 = arith.cmpi eq, %33, %42 : vector<256x64xi32>
    %44 = arith.select %43, %34, %41 : vector<256x64xi1>, vector<256x64xbf16>
    %45 = tpu.concatenate %39, %16, %44 in 1 : vector<256x64xbf16>, vector<256x64xbf16>, vector<256x64xbf16> -> vector<256x192xbf16>
    %c16_26 = arith.constant 16 : index
    %c0_27 = arith.constant 0 : index
    %46 = vector.load %arg6[%c16_26, %c0_27] : memref<288x192xbf16, #tpu.memory_space<vmem>>, vector<256x192xbf16>
    tpu.vector_store %arg6[%c16_26, %c0_27], %45 {strides = array<i32>} : memref<288x192xbf16, #tpu.memory_space<vmem>>, vector<256x192xbf16>,
    %c0_28 = arith.constant 0 : index
    %c0_29 = arith.constant 0 : index
    %47 = vector.load %arg6[%c0_28, %c0_29] : memref<288x192xbf16, #tpu.memory_space<vmem>>, vector<256x192xbf16>
    %c0_30 = arith.constant 0 : index
    %c0_31 = arith.constant 0 : index
    %c0_32 = arith.constant 0 : index
    %48 = vector.load %arg2[%c0_30, %c0_31, %c0_32] : memref<3x192x64xbf16, #tpu.memory_space<vmem>>, vector<1x192x64xbf16>
    %49 = vector.shape_cast %48 : vector<1x192x64xbf16> to vector<192x64xbf16>
    %cst_33 = arith.constant dense<0.000000e+00> : vector<256x64xf32>
    %50 = tpu.matmul %47, %49, %cst_33 {dimension_numbers = #tpu.dot_dimension_numbers<[1], [0], [0], [1], [0, 0, 1, 1], [], []>} : vector<256x192xbf16>, vector<192x64xbf16>, vector<256x64xf32> -> vector<256x64xf32>
    %c16_34 = arith.constant 16 : index
    %c0_35 = arith.constant 0 : index
    %51 = vector.load %arg6[%c16_34, %c0_35] : memref<288x192xbf16, #tpu.memory_space<vmem>>, vector<256x192xbf16>
    %c1_36 = arith.constant 1 : index
    %c0_37 = arith.constant 0 : index
    %c0_38 = arith.constant 0 : index
    %52 = vector.load %arg2[%c1_36, %c0_37, %c0_38] : memref<3x192x64xbf16, #tpu.memory_space<vmem>>, vector<1x192x64xbf16>
    %53 = vector.shape_cast %52 : vector<1x192x64xbf16> to vector<192x64xbf16>
    %cst_39 = arith.constant dense<0.000000e+00> : vector<256x64xf32>
    %54 = tpu.matmul %51, %53, %cst_39 {dimension_numbers = #tpu.dot_dimension_numbers<[1], [0], [0], [1], [0, 0, 1, 1], [], []>} : vector<256x192xbf16>, vector<192x64xbf16>, vector<256x64xf32> -> vector<256x64xf32>
    %55 = arith.addf %50, %54 : vector<256x64xf32>
    %c32 = arith.constant 32 : index
    %c0_40 = arith.constant 0 : index
    %56 = vector.load %arg6[%c32, %c0_40] : memref<288x192xbf16, #tpu.memory_space<vmem>>, vector<256x192xbf16>
    %c2_41 = arith.constant 2 : index
    %c0_42 = arith.constant 0 : index
    %c0_43 = arith.constant 0 : index
    %57 = vector.load %arg2[%c2_41, %c0_42, %c0_43] : memref<3x192x64xbf16, #tpu.memory_space<vmem>>, vector<1x192x64xbf16>
    %58 = vector.shape_cast %57 : vector<1x192x64xbf16> to vector<192x64xbf16>
    %cst_44 = arith.constant dense<0.000000e+00> : vector<256x64xf32>
    %59 = tpu.matmul %56, %58, %cst_44 {dimension_numbers = #tpu.dot_dimension_numbers<[1], [0], [0], [1], [0, 0, 1, 1], [], []>} : vector<256x192xbf16>, vector<192x64xbf16>, vector<256x64xf32> -> vector<256x64xf32>
    %60 = arith.addf %55, %59 : vector<256x64xf32>
    %61 = vector.broadcast %0 : vector<1x64xf32> to vector<256x64xf32>
    %62 = arith.mulf %60, %61 : vector<256x64xf32>
    %63 = vector.broadcast %1 : vector<1x64xf32> to vector<256x64xf32>
    %64 = arith.addf %62, %63 : vector<256x64xf32>
    %cst_45 = arith.constant 0.000000e+00 : f32
    %65 = vector.broadcast %cst_45 : f32 to vector<256x64xf32>
    %66 = arith.cmpf ogt, %64, %65 : vector<256x64xf32>
    %67 = vector.broadcast %2 : vector<1x64xf32> to vector<256x64xf32>
    %68 = arith.mulf %67, %64 : vector<256x64xf32>
    %69 = arith.select %66, %64, %68 : vector<256x64xi1>, vector<256x64xf32>
    %cst_46 = arith.constant 0.000000e+00 : bf16
    %70 = vector.broadcast %cst_46 : bf16 to vector<16x192xbf16>
    %c0_47 = arith.constant 0 : index
    %c0_48 = arith.constant 0 : index
    %71 = vector.load %arg7[%c0_47, %c0_48] : memref<288x192xbf16, #tpu.memory_space<vmem>>, vector<16x192xbf16>
    tpu.vector_store %arg7[%c0_47, %c0_48], %70 {strides = array<i32>} : memref<288x192xbf16, #tpu.memory_space<vmem>>, vector<16x192xbf16>,
    %cst_49 = arith.constant 0.000000e+00 : bf16
    %72 = vector.broadcast %cst_49 : bf16 to vector<16x192xbf16>
    %c272_50 = arith.constant 272 : index
    %c0_51 = arith.constant 0 : index
    %73 = vector.load %arg7[%c272_50, %c0_51] : memref<288x192xbf16, #tpu.memory_space<vmem>>, vector<16x192xbf16>
    tpu.vector_store %arg7[%c272_50, %c0_51], %72 {strides = array<i32>} : memref<288x192xbf16, #tpu.memory_space<vmem>>, vector<16x192xbf16>,
    %cst_52 = arith.constant 0.000000e+00 : f32
    %74 = vector.broadcast %cst_52 : f32 to vector<16x64xf32>
    %c0_53 = arith.constant 0 : index
    %c0_54 = arith.constant 0 : index
    %75 = vector.load %arg8[%c0_53, %c0_54] : memref<288x64xf32, #tpu.memory_space<vmem>>, vector<16x64xf32>
    tpu.vector_store %arg8[%c0_53, %c0_54], %74 {strides = array<i32>} : memref<288x64xf32, #tpu.memory_space<vmem>>, vector<16x64xf32>,
    %cst_55 = arith.constant 0.000000e+00 : f32
    %76 = vector.broadcast %cst_55 : f32 to vector<16x64xf32>
    %c272_56 = arith.constant 272 : index
    %c0_57 = arith.constant 0 : index
    %77 = vector.load %arg8[%c272_56, %c0_57] : memref<288x64xf32, #tpu.memory_space<vmem>>, vector<16x64xf32>
    tpu.vector_store %arg8[%c272_56, %c0_57], %76 {strides = array<i32>} : memref<288x64xf32, #tpu.memory_space<vmem>>, vector<16x64xf32>,
    %c16_58 = arith.constant 16 : index
    %c0_59 = arith.constant 0 : index
    %78 = vector.load %arg8[%c16_58, %c0_59] : memref<288x64xf32, #tpu.memory_space<vmem>>, vector<256x64xf32>
    tpu.vector_store %arg8[%c16_58, %c0_59], %69 {strides = array<i32>} : memref<288x64xf32, #tpu.memory_space<vmem>>, vector<256x64xf32>,
    %79 = arith.truncf %69 : vector<256x64xf32> to vector<256x64xbf16>
    %80 = tpu.iota {dimensions = array<i32: 0>} : vector<256x64xi32>
    %c16_i32_60 = arith.constant 16 : i32
    %c0_i32_61 = arith.constant 0 : i32
    %81 = arith.cmpi eq, %c16_i32_60, %c0_i32_61 : i32
    %c1_i32_62 = arith.constant 1 : i32
    %82 = arith.select %81, %c1_i32_62, %c16_i32_60 : i32
    %83 = vector.broadcast %82 : i32 to vector<256x64xi32>
    %84 = arith.remsi %80, %83 : vector<256x64xi32>
    %c0_i32_63 = arith.constant 0 : i32
    %85 = vector.broadcast %c0_i32_63 : i32 to vector<256x64xi32>
    %86 = arith.cmpi ne, %84, %85 : vector<256x64xi32>
    %c0_i32_64 = arith.constant 0 : i32
    %87 = vector.broadcast %c0_i32_64 : i32 to vector<256x64xi32>
    %88 = arith.cmpi slt, %84, %87 : vector<256x64xi32>
    %c0_i32_65 = arith.constant 0 : i32
    %89 = arith.cmpi slt, %82, %c0_i32_65 : i32
    %90 = vector.broadcast %89 : i1 to vector<256x64xi1>
    %91 = vector.broadcast %90 : vector<256x64xi1> to vector<256x64xi1>
    %92 = arith.xori %88, %91 : vector<256x64xi1>
    %93 = arith.andi %92, %86 : vector<256x64xi1>
    %94 = vector.broadcast %82 : i32 to vector<256x64xi32>
    %95 = arith.addi %84, %94 : vector<256x64xi32>
    %96 = arith.select %93, %95, %84 : vector<256x64xi1>, vector<256x64xi32>
    %cst_66 = arith.constant 0.000000e+00 : bf16
    %97 = vector.broadcast %cst_66 : bf16 to vector<256x64xbf16>
    %c15_67 = arith.constant 15 : index
    %c0_68 = arith.constant 0 : index
    %98 = vector.load %arg8[%c15_67, %c0_68] : memref<288x64xf32, #tpu.memory_space<vmem>>, vector<256x64xf32>
    %99 = arith.truncf %98 : vector<256x64xf32> to vector<256x64xbf16>
    %c0_i32_69 = arith.constant 0 : i32
    %100 = vector.broadcast %c0_i32_69 : i32 to vector<256x64xi32>
    %101 = arith.cmpi eq, %96, %100 : vector<256x64xi32>
    %102 = arith.select %101, %97, %99 : vector<256x64xi1>, vector<256x64xbf16>
    %c17_70 = arith.constant 17 : index
    %c0_71 = arith.constant 0 : index
    %103 = vector.load %arg8[%c17_70, %c0_71] : memref<288x64xf32, #tpu.memory_space<vmem>>, vector<256x64xf32>
    %104 = arith.truncf %103 : vector<256x64xf32> to vector<256x64xbf16>
    %c15_i32_72 = arith.constant 15 : i32
    %105 = vector.broadcast %c15_i32_72 : i32 to vector<256x64xi32>
    %106 = arith.cmpi eq, %96, %105 : vector<256x64xi32>
    %107 = arith.select %106, %97, %104 : vector<256x64xi1>, vector<256x64xbf16>
    %108 = tpu.concatenate %102, %79, %107 in 1 : vector<256x64xbf16>, vector<256x64xbf16>, vector<256x64xbf16> -> vector<256x192xbf16>
    %c16_73 = arith.constant 16 : index
    %c0_74 = arith.constant 0 : index
    %109 = vector.load %arg7[%c16_73, %c0_74] : memref<288x192xbf16, #tpu.memory_space<vmem>>, vector<256x192xbf16>
    tpu.vector_store %arg7[%c16_73, %c0_74], %108 {strides = array<i32>} : memref<288x192xbf16, #tpu.memory_space<vmem>>, vector<256x192xbf16>,
    %c0_75 = arith.constant 0 : index
    %c0_76 = arith.constant 0 : index
    %110 = vector.load %arg7[%c0_75, %c0_76] : memref<288x192xbf16, #tpu.memory_space<vmem>>, vector<256x192xbf16>
    %c0_77 = arith.constant 0 : index
    %c0_78 = arith.constant 0 : index
    %c0_79 = arith.constant 0 : index
    %111 = vector.load %arg3[%c0_77, %c0_78, %c0_79] : memref<3x192x64xbf16, #tpu.memory_space<vmem>>, vector<1x192x64xbf16>
    %112 = vector.shape_cast %111 : vector<1x192x64xbf16> to vector<192x64xbf16>
    %cst_80 = arith.constant dense<0.000000e+00> : vector<256x64xf32>
    %113 = tpu.matmul %110, %112, %cst_80 {dimension_numbers = #tpu.dot_dimension_numbers<[1], [0], [0], [1], [0, 0, 1, 1], [], []>} : vector<256x192xbf16>, vector<192x64xbf16>, vector<256x64xf32> -> vector<256x64xf32>
    %c16_81 = arith.constant 16 : index
    %c0_82 = arith.constant 0 : index
    %114 = vector.load %arg7[%c16_81, %c0_82] : memref<288x192xbf16, #tpu.memory_space<vmem>>, vector<256x192xbf16>
    %c1_83 = arith.constant 1 : index
    %c0_84 = arith.constant 0 : index
    %c0_85 = arith.constant 0 : index
    %115 = vector.load %arg3[%c1_83, %c0_84, %c0_85] : memref<3x192x64xbf16, #tpu.memory_space<vmem>>, vector<1x192x64xbf16>
    %116 = vector.shape_cast %115 : vector<1x192x64xbf16> to vector<192x64xbf16>
    %cst_86 = arith.constant dense<0.000000e+00> : vector<256x64xf32>
    %117 = tpu.matmul %114, %116, %cst_86 {dimension_numbers = #tpu.dot_dimension_numbers<[1], [0], [0], [1], [0, 0, 1, 1], [], []>} : vector<256x192xbf16>, vector<192x64xbf16>, vector<256x64xf32> -> vector<256x64xf32>
    %118 = arith.addf %113, %117 : vector<256x64xf32>
    %c32_87 = arith.constant 32 : index
    %c0_88 = arith.constant 0 : index
    %119 = vector.load %arg7[%c32_87, %c0_88] : memref<288x192xbf16, #tpu.memory_space<vmem>>, vector<256x192xbf16>
    %c2_89 = arith.constant 2 : index
    %c0_90 = arith.constant 0 : index
    %c0_91 = arith.constant 0 : index
    %120 = vector.load %arg3[%c2_89, %c0_90, %c0_91] : memref<3x192x64xbf16, #tpu.memory_space<vmem>>, vector<1x192x64xbf16>
    %121 = vector.shape_cast %120 : vector<1x192x64xbf16> to vector<192x64xbf16>
    %cst_92 = arith.constant dense<0.000000e+00> : vector<256x64xf32>
    %122 = tpu.matmul %119, %121, %cst_92 {dimension_numbers = #tpu.dot_dimension_numbers<[1], [0], [0], [1], [0, 0, 1, 1], [], []>} : vector<256x192xbf16>, vector<192x64xbf16>, vector<256x64xf32> -> vector<256x64xf32>
    %123 = arith.addf %118, %122 : vector<256x64xf32>
    %124 = vector.broadcast %3 : vector<1x64xf32> to vector<256x64xf32>
    %125 = arith.mulf %123, %124 : vector<256x64xf32>
    %126 = vector.broadcast %4 : vector<1x64xf32> to vector<256x64xf32>
    %127 = arith.addf %125, %126 : vector<256x64xf32>
    %c0_93 = arith.constant 0 : index
    %c0_94 = arith.constant 0 : index
    %c0_95 = arith.constant 0 : index
    %128 = vector.load %arg1[%c0_93, %c0_94, %c0_95] : memref<1x256x64xf32, #tpu.memory_space<vmem>>, vector<1x256x64xf32>
    %129 = vector.shape_cast %128 : vector<1x256x64xf32> to vector<256x64xf32>
    %130 = arith.addf %127, %129 : vector<256x64xf32>
    %c0_96 = arith.constant 0 : index
    %c0_97 = arith.constant 0 : index
    %c0_98 = arith.constant 0 : index
    %131 = vector.load %arg5[%c0_96, %c0_97, %c0_98] : memref<1x256x64xf32, #tpu.memory_space<vmem>>, vector<1x256x64xf32>
    %132 = vector.shape_cast %131 : vector<1x256x64xf32> to vector<256x64xf32>
    %133 = vector.shape_cast %130 : vector<256x64xf32> to vector<1x256x64xf32>
    tpu.vector_store %arg5[%c0_96, %c0_97, %c0_98], %133 {strides = array<i32>} : memref<1x256x64xf32, #tpu.memory_space<vmem>>, vector<1x256x64xf32>,
    return
  }
  func.func @transform_0(%arg0: i32) -> (i32, i32, i32) {
    %c0_i32 = arith.constant 0 : i32
    %c0_i32_0 = arith.constant 0 : i32
    %c0_i32_1 = arith.constant 0 : i32
    return %arg0, %c0_i32, %c0_i32_0 : i32, i32, i32
  }
  func.func @transform_1(%arg0: i32) -> (i32, i32, i32) {
    %c0_i32 = arith.constant 0 : i32
    %c0_i32_0 = arith.constant 0 : i32
    %c0_i32_1 = arith.constant 0 : i32
    %c0_i32_2 = arith.constant 0 : i32
    return %c0_i32, %c0_i32_0, %c0_i32_1 : i32, i32, i32
  }
  func.func @transform_2(%arg0: i32) -> (i32, i32, i32) {
    %c0_i32 = arith.constant 0 : i32
    %c0_i32_0 = arith.constant 0 : i32
    %c0_i32_1 = arith.constant 0 : i32
    %c0_i32_2 = arith.constant 0 : i32
    return %c0_i32, %c0_i32_0, %c0_i32_1 : i32, i32, i32
  }
  func.func @transform_3(%arg0: i32) -> (i32, i32) {
    %c0_i32 = arith.constant 0 : i32
    %c0_i32_0 = arith.constant 0 : i32
    %c0_i32_1 = arith.constant 0 : i32
    return %c0_i32, %c0_i32_0 : i32, i32
  }
  func.func @transform_4(%arg0: i32) -> (i32, i32, i32) {
    %c0_i32 = arith.constant 0 : i32
    %c0_i32_0 = arith.constant 0 : i32
    %c0_i32_1 = arith.constant 0 : i32
    return %arg0, %c0_i32, %c0_i32_0 : i32, i32, i32
  }
}

</mosaic_0001>

<llo_original>
// kernel: tpu_custom_call.1
$region0: #{tpu_custom_call.1}
  #allocation0 [shape = 'u32[]', space=smem, size = 0x4, offset = 0x4, fixed_abs, tag = 'smem constant byte address 0x4 - core index']
  #allocation1 [shape = 'u32[144,128]{1,0:T(1,128)}', space=vmem, size = 0x12000, scoped, tag = 'internal scratch']
  #allocation2 [shape = 'bf16[288,192]{1,0:T(8,128)(2,1)}', space=vmem, size = 0x24000, scoped, tag = 'scratch operand']
  #allocation3 [shape = 'bf16[288,192]{1,0:T(8,128)(2,1)}', space=vmem, size = 0x24000, scoped, tag = 'scratch operand']
  #allocation4 [shape = 'f32[288,64]{1,0:T(8,128)}', space=vmem, size = 0x24000, scoped, tag = 'scratch operand']
  %s0 = inlined_call_operand.vmem [shape: f32[2,256,64], index: 0, kind: input, shape index: {}]
  %s1 = inlined_call_operand.vmem [shape: bf16[3,192,64], index: 1, kind: input, shape index: {}]
  %s2 = inlined_call_operand.vmem [shape: bf16[3,192,64], index: 2, kind: input, shape index: {}]
  %s3 = inlined_call_operand.vmem [shape: f32[8,64], index: 3, kind: input, shape index: {}]
  %s4 = inlined_call_operand.vmem [shape: f32[2,256,64], index: 4, kind: output, shape index: {}]
  %s5 = sld [smem:[#allocation0]]
  $region49: #{tpu_custom_call.1} parent=0
    _
  %s7 = ssub.s32 1, %s5
  %s8 = scalar_select 0, %s7, %s5
  loop: start=0, step=1, limit=4
  $region2: #{tpu_custom_call.1} parent=0 // loop_pre_header
    _
  $region3: #{tpu_custom_call.1} parent=0 // loop_header
    %s10 = sphi 0, %s14
    %p11 = scmp.ge.s32.totalorder %s10, 4
    %s20 = sphi 0, %s22
    %s23 = sphi 0, %s20
    %s24 = sphi 0, %s23
    %s40 = sphi 0, %s24
    %s44 = sphi 0, %s44
    %s46 = sphi 0, %s44
    %s47 = sphi 0, %s46
    %s61 = sphi 0, %s47
    %s65 = sphi 0, %s65
    %s67 = sphi 0, %s65
    %s68 = sphi 0, %s67
    %s82 = sphi 0, %s68
    %s86 = sphi 0, %s86
    %s88 = sphi 0, %s86
    %s89 = sphi 0, %s88
    %s103 = sphi 0, %s89
    %s109 = sphi 0, %s111
    %s112 = sphi 0, %s109
    %s113 = sphi 0, %s112
    %s129 = sphi 0, %s113
  $region4: #{tpu_custom_call.1} parent=0 // loop_header_branch
    %13 = sbr.rel (%p11) target = $region8
  $region5: #{tpu_custom_call.1} parent=0 // loop_body
    %s15 = ssub.s32 %s10, 1
    %s16 = ssub.s32 %s10, 2
    %s17 = sadd.s32 %s10, 1
    %s18 = ssub.s32 %s10, %s17
    %p19 = scmp.eq.s32.totalorder %s18, 0
    %s21 = sadd.s32 %s20, 1
    %s22 = scalar_select %p19, %s20, %s21
    %p25 = pneg %p19
    %p26 = scmp.eq.s32.totalorder %s10, 1
    %p27 = por %p25, %p26
    %p28 = scmp.ne.s32.totalorder %s20, %s23
    %p29 = scmp.eq.s32.totalorder %s10, 0
    %p30 = por %p28, %p29
    %p31 = scmp.ne.s32.totalorder %s20, %s23
    %p32 = scmp.eq.s32.totalorder %s15, 1
    %p33 = por %p31, %p32
    %p34 = scmp.ne.s32.totalorder %s23, %s24
    %p35 = scmp.eq.s32.totalorder %s15, 0
    %p36 = por %p34, %p35
    %p37 = scmp.ne.s32.totalorder %s23, %s24
    %p38 = scmp.eq.s32.totalorder %s16, 1
    %p39 = por %p37, %p38
    %p41 = scmp.ne.s32.totalorder %s24, %s40
    %p42 = scmp.eq.s32.totalorder %s16, 0
    %p43 = por %p41, %p42
    %s45 = sadd.s32 %s44, 1
    %p48 = scmp.eq.s32.totalorder %s10, 1
    %p49 = scmp.ne.s32.totalorder %s44, %s46
    %p50 = scmp.eq.s32.totalorder %s10, 0
    %p51 = por %p49, %p50
    %p52 = scmp.ne.s32.totalorder %s44, %s46
    %p53 = scmp.eq.s32.totalorder %s15, 1
    %p54 = por %p52, %p53
    %p55 = scmp.ne.s32.totalorder %s46, %s47
    %p56 = scmp.eq.s32.totalorder %s15, 0
    %p57 = por %p55, %p56
    %p58 = scmp.ne.s32.totalorder %s46, %s47
    %p59 = scmp.eq.s32.totalorder %s16, 1
    %p60 = por %p58, %p59
    %p62 = scmp.ne.s32.totalorder %s47, %s61
    %p63 = scmp.eq.s32.totalorder %s16, 0
    %p64 = por %p62, %p63
    %s66 = sadd.s32 %s65, 1
    %p69 = scmp.eq.s32.totalorder %s10, 1
    %p70 = scmp.ne.s32.totalorder %s65, %s67
    %p71 = scmp.eq.s32.totalorder %s10, 0
    %p72 = por %p70, %p71
    %p73 = scmp.ne.s32.totalorder %s65, %s67
    %p74 = scmp.eq.s32.totalorder %s15, 1
    %p75 = por %p73, %p74
    %p76 = scmp.ne.s32.totalorder %s67, %s68
    %p77 = scmp.eq.s32.totalorder %s15, 0
    %p78 = por %p76, %p77
    %p79 = scmp.ne.s32.totalorder %s67, %s68
    %p80 = scmp.eq.s32.totalorder %s16, 1
    %p81 = por %p79, %p80
    %p83 = scmp.ne.s32.totalorder %s68, %s82
    %p84 = scmp.eq.s32.totalorder %s16, 0
    %p85 = por %p83, %p84
    %s87 = sadd.s32 %s86, 1
    %p90 = scmp.eq.s32.totalorder %s10, 1
    %p91 = scmp.ne.s32.totalorder %s86, %s88
    %p92 = scmp.eq.s32.totalorder %s10, 0
    %p93 = por %p91, %p92
    %p94 = scmp.ne.s32.totalorder %s86, %s88
    %p95 = scmp.eq.s32.totalorder %s15, 1
    %p96 = por %p94, %p95
    %p97 = scmp.ne.s32.totalorder %s88, %s89
    %p98 = scmp.eq.s32.totalorder %s15, 0
    %p99 = por %p97, %p98
    %p100 = scmp.ne.s32.totalorder %s88, %s89
    %p101 = scmp.eq.s32.totalorder %s16, 1
    %p102 = por %p100, %p101
    %p104 = scmp.ne.s32.totalorder %s89, %s103
    %p105 = scmp.eq.s32.totalorder %s16, 0
    %p106 = por %p104, %p105
    %s107 = ssub.s32 %s10, %s17
    %p108 = scmp.eq.s32.totalorder %s107, 0
    %s110 = sadd.s32 %s109, 1
    %s111 = scalar_select %p108, %s109, %s110
    %p114 = pneg %p108
    %p115 = scmp.eq.s32.totalorder %s10, 1
    %p116 = por %p114, %p115
    %p117 = scmp.ne.s32.totalorder %s109, %s112
    %p118 = scmp.eq.s32.totalorder %s10, 0
    %p119 = por %p117, %p118
    %p120 = scmp.ne.s32.totalorder %s109, %s112
    %p121 = scmp.eq.s32.totalorder %s15, 1
    %p122 = por %p120, %p121
    %p123 = scmp.ne.s32.totalorder %s112, %s113
    %p124 = scmp.eq.s32.totalorder %s15, 0
    %p125 = por %p123, %p124
    %p126 = scmp.ne.s32.totalorder %s112, %s113
    %p127 = scmp.eq.s32.totalorder %s16, 1
    %p128 = por %p126, %p127
    %p130 = scmp.ne.s32.totalorder %s113, %s129
    %p131 = scmp.eq.s32.totalorder %s16, 0
    %p132 = por %p130, %p131
    %p133 = scmp.le.s32.totalorder 1, %s10
    %p134 = scmp.lt.s32.totalorder %s10, 3
    %p135 = pnand %p133, %p134
    %p136 = pneg %p135
    // Predicated region
    $region9: #{tpu_custom_call.1} parent=5 // pred_check
      _
    $region10: #{tpu_custom_call.1} parent=5 // pred_check_branch
      %138 = sbr.rel (%p135) target = $region12
    $region11: #{tpu_custom_call.1} parent=5 // pred_region
      %s139 = ssub.s32 %s10, 1
      // Predicated region
      $region13: #{tpu_custom_call.1} parent=11 // pred_check
        %p140 = pneg %p57
      $region14: #{tpu_custom_call.1} parent=11 // pred_check_branch
        %142 = sbr.rel (%p140) target = $region16
      $region15: #{tpu_custom_call.1} parent=11 // pred_region
        _
      $region16: #{tpu_custom_call.1} parent=11 // pred_fallthru
        _
      // Predicated region
      $region17: #{tpu_custom_call.1} parent=11 // pred_check
        %p143 = pneg %p78
      $region18: #{tpu_custom_call.1} parent=11 // pred_check_branch
        %145 = sbr.rel (%p143) target = $region20
      $region19: #{tpu_custom_call.1} parent=11 // pred_region
        _
      $region20: #{tpu_custom_call.1} parent=11 // pred_fallthru
        _
      // Predicated region
      $region21: #{tpu_custom_call.1} parent=11 // pred_check
        %p146 = pneg %p99
      $region22: #{tpu_custom_call.1} parent=11 // pred_check_branch
        %148 = sbr.rel (%p146) target = $region24
      $region23: #{tpu_custom_call.1} parent=11 // pred_region
        _
      $region24: #{tpu_custom_call.1} parent=11 // pred_fallthru
        _
    $region12: #{tpu_custom_call.1} parent=5 // pred_fallthru
      _
    %p149 = scmp.lt.s32.totalorder %s10, 2
    // Predicated region
    $region25: #{tpu_custom_call.1} parent=5 // pred_check
      %p150 = pneg %p149
    $region26: #{tpu_custom_call.1} parent=5 // pred_check_branch
      %152 = sbr.rel (%p150) target = $region28
    $region27: #{tpu_custom_call.1} parent=5 // pred_region
      // Predicated region
      $region29: #{tpu_custom_call.1} parent=27 // pred_check
        %p153 = pneg %p30
      $region30: #{tpu_custom_call.1} parent=27 // pred_check_branch
        %155 = sbr.rel (%p153) target = $region32
      $region31: #{tpu_custom_call.1} parent=27 // pred_region
        %p156 = scmp.lt.s32.totalorder %s10, 1
        %s157 = scalar_select %p156, %s10, 1
        %s158 = smul.addr %s157, 32
        %s159 = smul.addr %s158, 8
        %s160 = scalar_lea.vmem %s0, %s159
      $region32: #{tpu_custom_call.1} parent=27 // pred_fallthru
        _
    $region28: #{tpu_custom_call.1} parent=5 // pred_fallthru
      _
    %p161 = scmp.le.s32.totalorder 1, %s10
    %p162 = scmp.lt.s32.totalorder %s10, 3
    %p163 = pnand %p161, %p162
    %p164 = pneg %p163
    // Predicated region
    $region33: #{tpu_custom_call.1} parent=5 // pred_check
      _
    $region34: #{tpu_custom_call.1} parent=5 // pred_check_branch
      %166 = sbr.rel (%p163) target = $region36
    $region35: #{tpu_custom_call.1} parent=5 // pred_region
      %s167 = ssub.s32 %s10, 1
      %p168 = scmp.lt.s32.totalorder %s15, 1
      %s169 = scalar_select %p168, %s15, 1
      %s170 = smul.addr %s169, 32
      %s171 = smul.addr %s170, 8
      %s172 = scalar_lea.vmem %s0, %s171
      %p173 = pneg %p36
      %p174 = pneg %p33
      %p175 = pneg %p57
      %p176 = pneg %p54
      %p177 = pneg %p78
      %p178 = pneg %p75
      %p179 = pneg %p99
      %p180 = pneg %p96
      %p181 = pneg %p125
      %p182 = pneg %p122
      %p183 = scmp.lt.s32.totalorder %s15, 1
      %s184 = scalar_select %p183, %s15, 1
      %s185 = smul.addr %s184, 32
      %s186 = smul.addr %s185, 8
      %s187 = scalar_lea.vmem %s4, %s186
      %p188 = scmp.lt.s32.totalorder %s15, 1
      %s189 = scalar_select %p188, %s15, 1
      %s190 = smul.addr %s189, 32
      %s191 = smul.addr %s190, 8
      %s192 = scalar_lea.vmem %s0, %s191
      %p193 = scmp.lt.s32.totalorder %s15, 1
      %s194 = scalar_select %p193, %s15, 1
      %s195 = smul.addr %s194, 32
      %s196 = smul.addr %s195, 8
      %s197 = scalar_lea.vmem %s4, %s196
      %v201 = vld [vmem:[%s3] sm:$0x1]
      %v202 = vld [vmem:[%s3 + $0x1] sm:$0x1]
      %v203 = vld [vmem:[%s3 + $0x2] sm:$0x1]
      %v204 = vld [vmem:[%s3 + $0x3] sm:$0x1]
      %v205 = vld [vmem:[%s3 + $0x4] sm:$0x1]
      %v206 = vld [vmem:[%s192] sm:$0xff]
      %v207 = vld [vmem:[%s192 + $0x8] sm:$0xff]
      %v208 = vld [vmem:[%s192 + $0x10] sm:$0xff]
      %v209 = vld [vmem:[%s192 + $0x18] sm:$0xff]
      %v210 = vld [vmem:[%s192 + $0x20] sm:$0xff]
      %v211 = vld [vmem:[%s192 + $0x28] sm:$0xff]
      %v212 = vld [vmem:[%s192 + $0x30] sm:$0xff]
      %v213 = vld [vmem:[%s192 + $0x38] sm:$0xff]
      %v214 = vld [vmem:[%s192 + $0x40] sm:$0xff]
      %v215 = vld [vmem:[%s192 + $0x48] sm:$0xff]
      %v216 = vld [vmem:[%s192 + $0x50] sm:$0xff]
      %v217 = vld [vmem:[%s192 + $0x58] sm:$0xff]
      %v218 = vld [vmem:[%s192 + $0x60] sm:$0xff]
      %v219 = vld [vmem:[%s192 + $0x68] sm:$0xff]
      %v220 = vld [vmem:[%s192 + $0x70] sm:$0xff]
      %v221 = vld [vmem:[%s192 + $0x78] sm:$0xff]
      %v222 = vld [vmem:[%s192 + $0x80] sm:$0xff]
      %v223 = vld [vmem:[%s192 + $0x88] sm:$0xff]
      %v224 = vld [vmem:[%s192 + $0x90] sm:$0xff]
      %v225 = vld [vmem:[%s192 + $0x98] sm:$0xff]
      %v226 = vld [vmem:[%s192 + $0xa0] sm:$0xff]
      %v227 = vld [vmem:[%s192 + $0xa8] sm:$0xff]
      %v228 = vld [vmem:[%s192 + $0xb0] sm:$0xff]
      %v229 = vld [vmem:[%s192 + $0xb8] sm:$0xff]
      %v230 = vld [vmem:[%s192 + $0xc0] sm:$0xff]
      %v231 = vld [vmem:[%s192 + $0xc8] sm:$0xff]
      %v232 = vld [vmem:[%s192 + $0xd0] sm:$0xff]
      %v233 = vld [vmem:[%s192 + $0xd8] sm:$0xff]
      %v234 = vld [vmem:[%s192 + $0xe0] sm:$0xff]
      %v235 = vld [vmem:[%s192 + $0xe8] sm:$0xff]
      %v236 = vld [vmem:[%s192 + $0xf0] sm:$0xff]
      %v237 = vld [vmem:[%s192 + $0xf8] sm:$0xff]
      %vm238 = vcmask 1043456
      %vm239 = vcmask 523268
      %vm240 = vmor %vm239, %vm238
      %241 = vst.msk [vmem:[#allocation2] sm:$0xff] %vm240, 0
      %242 = vst.msk [vmem:[#allocation2 + $0x8] sm:$0xff] %vm240, 0
      %243 = vst.msk [vmem:[#allocation2 + $0x110] sm:$0xff] %vm240, 0
      %244 = vst.msk [vmem:[#allocation2 + $0x118] sm:$0xff] %vm240, 0
      %vm245 = vcmask 523264
      %246 = vst.msk [vmem:[#allocation4] sm:$0xff] %vm245, 0.0
      %247 = vst.msk [vmem:[#allocation4 + $0x8] sm:$0xff] %vm245, 0.0
      %248 = vst.msk [vmem:[#allocation4 + $0x110] sm:$0xff] %vm245, 0.0
      %249 = vst.msk [vmem:[#allocation4 + $0x118] sm:$0xff] %vm245, 0.0
      %250 = vst.msk [vmem:[#allocation4 + $0x10] sm:$0xff] %vm245, %v206
      %251 = vst.msk [vmem:[#allocation4 + $0x18] sm:$0xff] %vm245, %v207
      %252 = vst.msk [vmem:[#allocation4 + $0x20] sm:$0xff] %vm245, %v208
      %253 = vst.msk [vmem:[#allocation4 + $0x28] sm:$0xff] %vm245, %v209
      %254 = vst.msk [vmem:[#allocation4 + $0x30] sm:$0xff] %vm245, %v210
      %255 = vst.msk [vmem:[#allocation4 + $0x38] sm:$0xff] %vm245, %v211
      %256 = vst.msk [vmem:[#allocation4 + $0x40] sm:$0xff] %vm245, %v212
      %257 = vst.msk [vmem:[#allocation4 + $0x48] sm:$0xff] %vm245, %v213
      %258 = vst.msk [vmem:[#allocation4 + $0x50] sm:$0xff] %vm245, %v214
      %259 = vst.msk [vmem:[#allocation4 + $0x58] sm:$0xff] %vm245, %v215
      %260 = vst.msk [vmem:[#allocation4 + $0x60] sm:$0xff] %vm245, %v216
      %261 = vst.msk [vmem:[#allocation4 + $0x68] sm:$0xff] %vm245, %v217
      %262 = vst.msk [vmem:[#allocation4 + $0x70] sm:$0xff] %vm245, %v218
      %263 = vst.msk [vmem:[#allocation4 + $0x78] sm:$0xff] %vm245, %v219
      %264 = vst.msk [vmem:[#allocation4 + $0x80] sm:$0xff] %vm245, %v220
      %265 = vst.msk [vmem:[#allocation4 + $0x88] sm:$0xff] %vm245, %v221
      %266 = vst.msk [vmem:[#allocation4 + $0x90] sm:$0xff] %vm245, %v222
      %267 = vst.msk [vmem:[#allocation4 + $0x98] sm:$0xff] %vm245, %v223
      %268 = vst.msk [vmem:[#allocation4 + $0xa0] sm:$0xff] %vm245, %v224
      %269 = vst.msk [vmem:[#allocation4 + $0xa8] sm:$0xff] %vm245, %v225
      %270 = vst.msk [vmem:[#allocation4 + $0xb0] sm:$0xff] %vm245, %v226
      %271 = vst.msk [vmem:[#allocation4 + $0xb8] sm:$0xff] %vm245, %v227
      %272 = vst.msk [vmem:[#allocation4 + $0xc0] sm:$0xff] %vm245, %v228
      %273 = vst.msk [vmem:[#allocation4 + $0xc8] sm:$0xff] %vm245, %v229
      %274 = vst.msk [vmem:[#allocation4 + $0xd0] sm:$0xff] %vm245, %v230
      %275 = vst.msk [vmem:[#allocation4 + $0xd8] sm:$0xff] %vm245, %v231
      %276 = vst.msk [vmem:[#allocation4 + $0xe0] sm:$0xff] %vm245, %v232
      %277 = vst.msk [vmem:[#allocation4 + $0xe8] sm:$0xff] %vm245, %v233
      %278 = vst.msk [vmem:[#allocation4 + $0xf0] sm:$0xff] %vm245, %v234
      %279 = vst.msk [vmem:[#allocation4 + $0xf8] sm:$0xff] %vm245, %v235
      %280 = vst.msk [vmem:[#allocation4 + $0x100] sm:$0xff] %vm245, %v236
      %281 = vst.msk [vmem:[#allocation4 + $0x108] sm:$0xff] %vm245, %v237
      %v282 = vpack.c.bf16 %v207, %v206
      %v283 = vpack.c.bf16 %v209, %v208
      %v284 = vpack.c.bf16 %v211, %v210
      %v285 = vpack.c.bf16 %v213, %v212
      %v286 = vpack.c.bf16 %v215, %v214
      %v287 = vpack.c.bf16 %v217, %v216
      %v288 = vpack.c.bf16 %v219, %v218
      %v289 = vpack.c.bf16 %v221, %v220
      %v290 = vpack.c.bf16 %v223, %v222
      %v291 = vpack.c.bf16 %v225, %v224
      %v292 = vpack.c.bf16 %v227, %v226
      %v293 = vpack.c.bf16 %v229, %v228
      %v294 = vpack.c.bf16 %v231, %v230
      %v295 = vpack.c.bf16 %v233, %v232
      %v296 = vpack.c.bf16 %v235, %v234
      %v297 = vpack.c.bf16 %v237, %v236
      %v298 = vlaneseq
      %v299 = vshrl.u32 %v298, 7
      %v300 = vadd.s32 %v299, 8
      %v301 = vadd.s32 %v299, 16
      %v302 = vadd.s32 %v299, 24
      %v303 = vadd.s32 %v299, 32
      %v304 = vadd.s32 %v299, 40
      %v305 = vadd.s32 %v299, 48
      %v306 = vadd.s32 %v299, 56
      %v307 = vadd.s32 %v299, 64
      %v308 = vadd.s32 %v299, 72
      %v309 = vadd.s32 %v299, 80
      %v310 = vadd.s32 %v299, 88
      %v311 = vadd.s32 %v299, 96
      %v312 = vadd.s32 %v299, 104
      %v313 = vadd.s32 %v299, 112
      %v314 = vadd.s32 %v299, 120
      %v315 = vadd.s32 %v299, 128
      %v316 = vadd.s32 %v299, 136
      %v317 = vadd.s32 %v299, 144
      %v318 = vadd.s32 %v299, 152
      %v319 = vadd.s32 %v299, 160
      %v320 = vadd.s32 %v299, 168
      %v321 = vadd.s32 %v299, 176
      %v322 = vadd.s32 %v299, 184
      %v323 = vadd.s32 %v299, 192
      %v324 = vadd.s32 %v299, 200
      %v325 = vadd.s32 %v299, 208
      %v326 = vadd.s32 %v299, 216
      %v327 = vadd.s32 %v299, 224
      %v328 = vadd.s32 %v299, 232
      %v329 = vadd.s32 %v299, 240
      %v330 = vadd.s32 %v299, 248
      %vm331 = vcmp.lt.s32.totalorder %v299, 0
      %v332 = vsub.s32 0, %v299
      %v333 = vsel %vm331, %v332, %v299
      %v334 = vshrl.u32 %v333, 4
      %v335 = vand.u32 %v333, 15
      %v336 = vsub.s32 0, %v335
      %v337 = vsel %vm331, %v336, %v335
      %vm338 = vcmp.lt.s32.totalorder %v300, 0
      %v339 = vsub.s32 0, %v300
      %v340 = vsel %vm338, %v339, %v300
      %v341 = vshrl.u32 %v340, 4
      %v342 = vand.u32 %v340, 15
      %v343 = vsub.s32 0, %v342
      %v344 = vsel %vm338, %v343, %v342
      %vm345 = vcmp.lt.s32.totalorder %v301, 0
      %v346 = vsub.s32 0, %v301
      %v347 = vsel %vm345, %v346, %v301
      %v348 = vshrl.u32 %v347, 4
      %v349 = vand.u32 %v347, 15
      %v350 = vsub.s32 0, %v349
      %v351 = vsel %vm345, %v350, %v349
      %vm352 = vcmp.lt.s32.totalorder %v302, 0
      %v353 = vsub.s32 0, %v302
      %v354 = vsel %vm352, %v353, %v302
      %v355 = vshrl.u32 %v354, 4
      %v356 = vand.u32 %v354, 15
      %v357 = vsub.s32 0, %v356
      %v358 = vsel %vm352, %v357, %v356
      %vm359 = vcmp.lt.s32.totalorder %v303, 0
      %v360 = vsub.s32 0, %v303
      %v361 = vsel %vm359, %v360, %v303
      %v362 = vshrl.u32 %v361, 4
      %v363 = vand.u32 %v361, 15
      %v364 = vsub.s32 0, %v363
      %v365 = vsel %vm359, %v364, %v363
      %vm366 = vcmp.lt.s32.totalorder %v304, 0
      %v367 = vsub.s32 0, %v304
      %v368 = vsel %vm366, %v367, %v304
      %v369 = vshrl.u32 %v368, 4
      %v370 = vand.u32 %v368, 15
      %v371 = vsub.s32 0, %v370
      %v372 = vsel %vm366, %v371, %v370
      %vm373 = vcmp.lt.s32.totalorder %v305, 0
      %v374 = vsub.s32 0, %v305
      %v375 = vsel %vm373, %v374, %v305
      %v376 = vshrl.u32 %v375, 4
      %v377 = vand.u32 %v375, 15
      %v378 = vsub.s32 0, %v377
      %v379 = vsel %vm373, %v378, %v377
      %vm380 = vcmp.lt.s32.totalorder %v306, 0
      %v381 = vsub.s32 0, %v306
      %v382 = vsel %vm380, %v381, %v306
      %v383 = vshrl.u32 %v382, 4
      %v384 = vand.u32 %v382, 15
      %v385 = vsub.s32 0, %v384
      %v386 = vsel %vm380, %v385, %v384
      %vm387 = vcmp.lt.s32.totalorder %v307, 0
      %v388 = vsub.s32 0, %v307
      %v389 = vsel %vm387, %v388, %v307
      %v390 = vshrl.u32 %v389, 4
      %v391 = vand.u32 %v389, 15
      %v392 = vsub.s32 0, %v391
      %v393 = vsel %vm387, %v392, %v391
      %vm394 = vcmp.lt.s32.totalorder %v308, 0
      %v395 = vsub.s32 0, %v308
      %v396 = vsel %vm394, %v395, %v308
      %v397 = vshrl.u32 %v396, 4
      %v398 = vand.u32 %v396, 15
      %v399 = vsub.s32 0, %v398
      %v400 = vsel %vm394, %v399, %v398
      %vm401 = vcmp.lt.s32.totalorder %v309, 0
      %v402 = vsub.s32 0, %v309
      %v403 = vsel %vm401, %v402, %v309
      %v404 = vshrl.u32 %v403, 4
      %v405 = vand.u32 %v403, 15
      %v406 = vsub.s32 0, %v405
      %v407 = vsel %vm401, %v406, %v405
      %vm408 = vcmp.lt.s32.totalorder %v310, 0
      %v409 = vsub.s32 0, %v310
      %v410 = vsel %vm408, %v409, %v310
      %v411 = vshrl.u32 %v410, 4
      %v412 = vand.u32 %v410, 15
      %v413 = vsub.s32 0, %v412
      %v414 = vsel %vm408, %v413, %v412
      %vm415 = vcmp.lt.s32.totalorder %v311, 0
      %v416 = vsub.s32 0, %v311
      %v417 = vsel %vm415, %v416, %v311
      %v418 = vshrl.u32 %v417, 4
      %v419 = vand.u32 %v417, 15
      %v420 = vsub.s32 0, %v419
      %v421 = vsel %vm415, %v420, %v419
      %vm422 = vcmp.lt.s32.totalorder %v312, 0
      %v423 = vsub.s32 0, %v312
      %v424 = vsel %vm422, %v423, %v312
      %v425 = vshrl.u32 %v424, 4
      %v426 = vand.u32 %v424, 15
      %v427 = vsub.s32 0, %v426
      %v428 = vsel %vm422, %v427, %v426
      %vm429 = vcmp.lt.s32.totalorder %v313, 0
      %v430 = vsub.s32 0, %v313
      %v431 = vsel %vm429, %v430, %v313
      %v432 = vshrl.u32 %v431, 4
      %v433 = vand.u32 %v431, 15
      %v434 = vsub.s32 0, %v433
      %v435 = vsel %vm429, %v434, %v433
      %vm436 = vcmp.lt.s32.totalorder %v314, 0
      %v437 = vsub.s32 0, %v314
      %v438 = vsel %vm436, %v437, %v314
      %v439 = vshrl.u32 %v438, 4
      %v440 = vand.u32 %v438, 15
      %v441 = vsub.s32 0, %v440
      %v442 = vsel %vm436, %v441, %v440
      %vm443 = vcmp.lt.s32.totalorder %v315, 0
      %v444 = vsub.s32 0, %v315
      %v445 = vsel %vm443, %v444, %v315
      %v446 = vshrl.u32 %v445, 4
      %v447 = vand.u32 %v445, 15
      %v448 = vsub.s32 0, %v447
      %v449 = vsel %vm443, %v448, %v447
      %vm450 = vcmp.lt.s32.totalorder %v316, 0
      %v451 = vsub.s32 0, %v316
      %v452 = vsel %vm450, %v451, %v316
      %v453 = vshrl.u32 %v452, 4
      %v454 = vand.u32 %v452, 15
      %v455 = vsub.s32 0, %v454
      %v456 = vsel %vm450, %v455, %v454
      %vm457 = vcmp.lt.s32.totalorder %v317, 0
      %v458 = vsub.s32 0, %v317
      %v459 = vsel %vm457, %v458, %v317
      %v460 = vshrl.u32 %v459, 4
      %v461 = vand.u32 %v459, 15
      %v462 = vsub.s32 0, %v461
      %v463 = vsel %vm457, %v462, %v461
      %vm464 = vcmp.lt.s32.totalorder %v318, 0
      %v465 = vsub.s32 0, %v318
      %v466 = vsel %vm464, %v465, %v318
      %v467 = vshrl.u32 %v466, 4
      %v468 = vand.u32 %v466, 15
      %v469 = vsub.s32 0, %v468
      %v470 = vsel %vm464, %v469, %v468
      %vm471 = vcmp.lt.s32.totalorder %v319, 0
      %v472 = vsub.s32 0, %v319
      %v473 = vsel %vm471, %v472, %v319
      %v474 = vshrl.u32 %v473, 4
      %v475 = vand.u32 %v473, 15
      %v476 = vsub.s32 0, %v475
      %v477 = vsel %vm471, %v476, %v475
      %vm478 = vcmp.lt.s32.totalorder %v320, 0
      %v479 = vsub.s32 0, %v320
      %v480 = vsel %vm478, %v479, %v320
      %v481 = vshrl.u32 %v480, 4
      %v482 = vand.u32 %v480, 15
      %v483 = vsub.s32 0, %v482
      %v484 = vsel %vm478, %v483, %v482
      %vm485 = vcmp.lt.s32.totalorder %v321, 0
      %v486 = vsub.s32 0, %v321
      %v487 = vsel %vm485, %v486, %v321
      %v488 = vshrl.u32 %v487, 4
      %v489 = vand.u32 %v487, 15
      %v490 = vsub.s32 0, %v489
      %v491 = vsel %vm485, %v490, %v489
      %vm492 = vcmp.lt.s32.totalorder %v322, 0
      %v493 = vsub.s32 0, %v322
      %v494 = vsel %vm492, %v493, %v322
      %v495 = vshrl.u32 %v494, 4
      %v496 = vand.u32 %v494, 15
      %v497 = vsub.s32 0, %v496
      %v498 = vsel %vm492, %v497, %v496
      %vm499 = vcmp.lt.s32.totalorder %v323, 0
      %v500 = vsub.s32 0, %v323
      %v501 = vsel %vm499, %v500, %v323
      %v502 = vshrl.u32 %v501, 4
      %v503 = vand.u32 %v501, 15
      %v504 = vsub.s32 0, %v503
      %v505 = vsel %vm499, %v504, %v503
      %vm506 = vcmp.lt.s32.totalorder %v324, 0
      %v507 = vsub.s32 0, %v324
      %v508 = vsel %vm506, %v507, %v324
      %v509 = vshrl.u32 %v508, 4
      %v510 = vand.u32 %v508, 15
      %v511 = vsub.s32 0, %v510
      %v512 = vsel %vm506, %v511, %v510
      %vm513 = vcmp.lt.s32.totalorder %v325, 0
      %v514 = vsub.s32 0, %v325
      %v515 = vsel %vm513, %v514, %v325
      %v516 = vshrl.u32 %v515, 4
      %v517 = vand.u32 %v515, 15
      %v518 = vsub.s32 0, %v517
      %v519 = vsel %vm513, %v518, %v517
      %vm520 = vcmp.lt.s32.totalorder %v326, 0
      %v521 = vsub.s32 0, %v326
      %v522 = vsel %vm520, %v521, %v326
      %v523 = vshrl.u32 %v522, 4
      %v524 = vand.u32 %v522, 15
      %v525 = vsub.s32 0, %v524
      %v526 = vsel %vm520, %v525, %v524
      %vm527 = vcmp.lt.s32.totalorder %v327, 0
      %v528 = vsub.s32 0, %v327
      %v529 = vsel %vm527, %v528, %v327
      %v530 = vshrl.u32 %v529, 4
      %v531 = vand.u32 %v529, 15
      %v532 = vsub.s32 0, %v531
      %v533 = vsel %vm527, %v532, %v531
      %vm534 = vcmp.lt.s32.totalorder %v328, 0
      %v535 = vsub.s32 0, %v328
      %v536 = vsel %vm534, %v535, %v328
      %v537 = vshrl.u32 %v536, 4
      %v538 = vand.u32 %v536, 15
      %v539 = vsub.s32 0, %v538
      %v540 = vsel %vm534, %v539, %v538
      %vm541 = vcmp.lt.s32.totalorder %v329, 0
      %v542 = vsub.s32 0, %v329
      %v543 = vsel %vm541, %v542, %v329
      %v544 = vshrl.u32 %v543, 4
      %v545 = vand.u32 %v543, 15
      %v546 = vsub.s32 0, %v545
      %v547 = vsel %vm541, %v546, %v545
      %vm548 = vcmp.lt.s32.totalorder %v330, 0
      %v549 = vsub.s32 0, %v330
      %v550 = vsel %vm548, %v549, %v330
      %v551 = vshrl.u32 %v550, 4
      %v552 = vand.u32 %v550, 15
      %v553 = vsub.s32 0, %v552
      %v554 = vsel %vm548, %v553, %v552
      %vm555 = vcmp.ne.s32.totalorder %v337, 0
      %vm556 = vcmp.ne.s32.totalorder %v344, 0
      %vm557 = vcmp.ne.s32.totalorder %v351, 0
      %vm558 = vcmp.ne.s32.totalorder %v358, 0
      %vm559 = vcmp.ne.s32.totalorder %v365, 0
      %vm560 = vcmp.ne.s32.totalorder %v372, 0
      %vm561 = vcmp.ne.s32.totalorder %v379, 0
      %vm562 = vcmp.ne.s32.totalorder %v386, 0
      %vm563 = vcmp.ne.s32.totalorder %v393, 0
      %vm564 = vcmp.ne.s32.totalorder %v400, 0
      %vm565 = vcmp.ne.s32.totalorder %v407, 0
      %vm566 = vcmp.ne.s32.totalorder %v414, 0
      %vm567 = vcmp.ne.s32.totalorder %v421, 0
      %vm568 = vcmp.ne.s32.totalorder %v428, 0
      %vm569 = vcmp.ne.s32.totalorder %v435, 0
      %vm570 = vcmp.ne.s32.totalorder %v442, 0
      %vm571 = vcmp.ne.s32.totalorder %v449, 0
      %vm572 = vcmp.ne.s32.totalorder %v456, 0
      %vm573 = vcmp.ne.s32.totalorder %v463, 0
      %vm574 = vcmp.ne.s32.totalorder %v470, 0
      %vm575 = vcmp.ne.s32.totalorder %v477, 0
      %vm576 = vcmp.ne.s32.totalorder %v484, 0
      %vm577 = vcmp.ne.s32.totalorder %v491, 0
      %vm578 = vcmp.ne.s32.totalorder %v498, 0
      %vm579 = vcmp.ne.s32.totalorder %v505, 0
      %vm580 = vcmp.ne.s32.totalorder %v512, 0
      %vm581 = vcmp.ne.s32.totalorder %v519, 0
      %vm582 = vcmp.ne.s32.totalorder %v526, 0
      %vm583 = vcmp.ne.s32.totalorder %v533, 0
      %vm584 = vcmp.ne.s32.totalorder %v540, 0
      %vm585 = vcmp.ne.s32.totalorder %v547, 0
      %vm586 = vcmp.ne.s32.totalorder %v554, 0
      %vm587 = vcmp.lt.s32.totalorder %v337, 0
      %vm588 = vcmp.lt.s32.totalorder %v344, 0
      %vm589 = vcmp.lt.s32.totalorder %v351, 0
      %vm590 = vcmp.lt.s32.totalorder %v358, 0
      %vm591 = vcmp.lt.s32.totalorder %v365, 0
      %vm592 = vcmp.lt.s32.totalorder %v372, 0
      %vm593 = vcmp.lt.s32.totalorder %v379, 0
      %vm594 = vcmp.lt.s32.totalorder %v386, 0
      %vm595 = vcmp.lt.s32.totalorder %v393, 0
      %vm596 = vcmp.lt.s32.totalorder %v400, 0
      %vm597 = vcmp.lt.s32.totalorder %v407, 0
      %vm598 = vcmp.lt.s32.totalorder %v414, 0
      %vm599 = vcmp.lt.s32.totalorder %v421, 0
      %vm600 = vcmp.lt.s32.totalorder %v428, 0
      %vm601 = vcmp.lt.s32.totalorder %v435, 0
      %vm602 = vcmp.lt.s32.totalorder %v442, 0
      %vm603 = vcmp.lt.s32.totalorder %v449, 0
      %vm604 = vcmp.lt.s32.totalorder %v456, 0
      %vm605 = vcmp.lt.s32.totalorder %v463, 0
      %vm606 = vcmp.lt.s32.totalorder %v470, 0
      %vm607 = vcmp.lt.s32.totalorder %v477, 0
      %vm608 = vcmp.lt.s32.totalorder %v484, 0
      %vm609 = vcmp.lt.s32.totalorder %v491, 0
      %vm610 = vcmp.lt.s32.totalorder %v498, 0
      %vm611 = vcmp.lt.s32.totalorder %v505, 0
      %vm612 = vcmp.lt.s32.totalorder %v512, 0
      %vm613 = vcmp.lt.s32.totalorder %v519, 0
      %vm614 = vcmp.lt.s32.totalorder %v526, 0
      %vm615 = vcmp.lt.s32.totalorder %v533, 0
      %vm616 = vcmp.lt.s32.totalorder %v540, 0
      %vm617 = vcmp.lt.s32.totalorder %v547, 0
      %vm618 = vcmp.lt.s32.totalorder %v554, 0
      %vm619 = vmand %vm587, %vm555
      %vm620 = vmand %vm588, %vm556
      %vm621 = vmand %vm589, %vm557
      %vm622 = vmand %vm590, %vm558
      %vm623 = vmand %vm591, %vm559
      %vm624 = vmand %vm592, %vm560
      %vm625 = vmand %vm593, %vm561
      %vm626 = vmand %vm594, %vm562
      %vm627 = vmand %vm595, %vm563
      %vm628 = vmand %vm596, %vm564
      %vm629 = vmand %vm597, %vm565
      %vm630 = vmand %vm598, %vm566
      %vm631 = vmand %vm599, %vm567
      %vm632 = vmand %vm600, %vm568
      %vm633 = vmand %vm601, %vm569
      %vm634 = vmand %vm602, %vm570
      %vm635 = vmand %vm603, %vm571
      %vm636 = vmand %vm604, %vm572
      %vm637 = vmand %vm605, %vm573
      %vm638 = vmand %vm606, %vm574
      %vm639 = vmand %vm607, %vm575
      %vm640 = vmand %vm608, %vm576
      %vm641 = vmand %vm609, %vm577
      %vm642 = vmand %vm610, %vm578
      %vm643 = vmand %vm611, %vm579
      %vm644 = vmand %vm612, %vm580
      %vm645 = vmand %vm613, %vm581
      %vm646 = vmand %vm614, %vm582
      %vm647 = vmand %vm615, %vm583
      %vm648 = vmand %vm616, %vm584
      %vm649 = vmand %vm617, %vm585
      %vm650 = vmand %vm618, %vm586
      %v651 = vadd.s32 %v337, 16
      %v652 = vadd.s32 %v344, 16
      %v653 = vadd.s32 %v351, 16
      %v654 = vadd.s32 %v358, 16
      %v655 = vadd.s32 %v365, 16
      %v656 = vadd.s32 %v372, 16
      %v657 = vadd.s32 %v379, 16
      %v658 = vadd.s32 %v386, 16
      %v659 = vadd.s32 %v393, 16
      %v660 = vadd.s32 %v400, 16
      %v661 = vadd.s32 %v407, 16
      %v662 = vadd.s32 %v414, 16
      %v663 = vadd.s32 %v421, 16
      %v664 = vadd.s32 %v428, 16
      %v665 = vadd.s32 %v435, 16
      %v666 = vadd.s32 %v442, 16
      %v667 = vadd.s32 %v449, 16
      %v668 = vadd.s32 %v456, 16
      %v669 = vadd.s32 %v463, 16
      %v670 = vadd.s32 %v470, 16
      %v671 = vadd.s32 %v477, 16
      %v672 = vadd.s32 %v484, 16
      %v673 = vadd.s32 %v491, 16
      %v674 = vadd.s32 %v498, 16
      %v675 = vadd.s32 %v505, 16
      %v676 = vadd.s32 %v512, 16
      %v677 = vadd.s32 %v519, 16
      %v678 = vadd.s32 %v526, 16
      %v679 = vadd.s32 %v533, 16
      %v680 = vadd.s32 %v540, 16
      %v681 = vadd.s32 %v547, 16
      %v682 = vadd.s32 %v554, 16
      %v683 = vsel %vm619, %v651, %v337
      %v684 = vsel %vm620, %v652, %v344
      %v685 = vsel %vm621, %v653, %v351
      %v686 = vsel %vm622, %v654, %v358
      %v687 = vsel %vm623, %v655, %v365
      %v688 = vsel %vm624, %v656, %v372
      %v689 = vsel %vm625, %v657, %v379
      %v690 = vsel %vm626, %v658, %v386
      %v691 = vsel %vm627, %v659, %v393
      %v692 = vsel %vm628, %v660, %v400
      %v693 = vsel %vm629, %v661, %v407
      %v694 = vsel %vm630, %v662, %v414
      %v695 = vsel %vm631, %v663, %v421
      %v696 = vsel %vm632, %v664, %v428
      %v697 = vsel %vm633, %v665, %v435
      %v698 = vsel %vm634, %v666, %v442
      %v699 = vsel %vm635, %v667, %v449
      %v700 = vsel %vm636, %v668, %v456
      %v701 = vsel %vm637, %v669, %v463
      %v702 = vsel %vm638, %v670, %v470
      %v703 = vsel %vm639, %v671, %v477
      %v704 = vsel %vm640, %v672, %v484
      %v705 = vsel %vm641, %v673, %v491
      %v706 = vsel %vm642, %v674, %v498
      %v707 = vsel %vm643, %v675, %v505
      %v708 = vsel %vm644, %v676, %v512
      %v709 = vsel %vm645, %v677, %v519
      %v710 = vsel %vm646, %v678, %v526
      %v711 = vsel %vm647, %v679, %v533
      %v712 = vsel %vm648, %v680, %v540
      %v713 = vsel %vm649, %v681, %v547
      %v714 = vsel %vm650, %v682, %v554
      %v715 = vld [vmem:[#allocation4 + $0xf] sm:$0xff]
      %v716 = vld [vmem:[#allocation4 + $0x17] sm:$0xff]
      %v717 = vld [vmem:[#allocation4 + $0x1f] sm:$0xff]
      %v718 = vld [vmem:[#allocation4 + $0x27] sm:$0xff]
      %v719 = vld [vmem:[#allocation4 + $0x2f] sm:$0xff]
      %v720 = vld [vmem:[#allocation4 + $0x37] sm:$0xff]
      %v721 = vld [vmem:[#allocation4 + $0x3f] sm:$0xff]
      %v722 = vld [vmem:[#allocation4 + $0x47] sm:$0xff]
      %v723 = vld [vmem:[#allocation4 + $0x4f] sm:$0xff]
      %v724 = vld [vmem:[#allocation4 + $0x57] sm:$0xff]
      %v725 = vld [vmem:[#allocation4 + $0x5f] sm:$0xff]
      %v726 = vld [vmem:[#allocation4 + $0x67] sm:$0xff]
      %v727 = vld [vmem:[#allocation4 + $0x6f] sm:$0xff]
      %v728 = vld [vmem:[#allocation4 + $0x77] sm:$0xff]
      %v729 = vld [vmem:[#allocation4 + $0x7f] sm:$0xff]
      %v730 = vld [vmem:[#allocation4 + $0x87] sm:$0xff]
      %v731 = vld [vmem:[#allocation4 + $0x8f] sm:$0xff]
      %v732 = vld [vmem:[#allocation4 + $0x97] sm:$0xff]
      %v733 = vld [vmem:[#allocation4 + $0x9f] sm:$0xff]
      %v734 = vld [vmem:[#allocation4 + $0xa7] sm:$0xff]
      %v735 = vld [vmem:[#allocation4 + $0xaf] sm:$0xff]
      %v736 = vld [vmem:[#allocation4 + $0xb7] sm:$0xff]
      %v737 = vld [vmem:[#allocation4 + $0xbf] sm:$0xff]
      %v738 = vld [vmem:[#allocation4 + $0xc7] sm:$0xff]
      %v739 = vld [vmem:[#allocation4 + $0xcf] sm:$0xff]
      %v740 = vld [vmem:[#allocation4 + $0xd7] sm:$0xff]
      %v741 = vld [vmem:[#allocation4 + $0xdf] sm:$0xff]
      %v742 = vld [vmem:[#allocation4 + $0xe7] sm:$0xff]
      %v743 = vld [vmem:[#allocation4 + $0xef] sm:$0xff]
      %v744 = vld [vmem:[#allocation4 + $0xf7] sm:$0xff]
      %v745 = vld [vmem:[#allocation4 + $0xff] sm:$0xff]
      %v746 = vld [vmem:[#allocation4 + $0x107] sm:$0xff]
      %v747 = vpack.c.bf16 %v716, %v715
      %v748 = vpack.c.bf16 %v718, %v717
      %v749 = vpack.c.bf16 %v720, %v719
      %v750 = vpack.c.bf16 %v722, %v721
      %v751 = vpack.c.bf16 %v724, %v723
      %v752 = vpack.c.bf16 %v726, %v725
      %v753 = vpack.c.bf16 %v728, %v727
      %v754 = vpack.c.bf16 %v730, %v729
      %v755 = vpack.c.bf16 %v732, %v731
      %v756 = vpack.c.bf16 %v734, %v733
      %v757 = vpack.c.bf16 %v736, %v735
      %v758 = vpack.c.bf16 %v738, %v737
      %v759 = vpack.c.bf16 %v740, %v739
      %v760 = vpack.c.bf16 %v742, %v741
      %v761 = vpack.c.bf16 %v744, %v743
      %v762 = vpack.c.bf16 %v746, %v745
      %vm763 = vcmp.eq.s32.totalorder %v683, 0
      %vm764 = vcmp.eq.s32.totalorder %v684, 0
      %vm765 = vcmp.eq.s32.totalorder %v685, 0
      %vm766 = vcmp.eq.s32.totalorder %v686, 0
      %vm767 = vcmp.eq.s32.totalorder %v687, 0
      %vm768 = vcmp.eq.s32.totalorder %v688, 0
      %vm769 = vcmp.eq.s32.totalorder %v689, 0
      %vm770 = vcmp.eq.s32.totalorder %v690, 0
      %vm771 = vcmp.eq.s32.totalorder %v691, 0
      %vm772 = vcmp.eq.s32.totalorder %v692, 0
      %vm773 = vcmp.eq.s32.totalorder %v693, 0
      %vm774 = vcmp.eq.s32.totalorder %v694, 0
      %vm775 = vcmp.eq.s32.totalorder %v695, 0
      %vm776 = vcmp.eq.s32.totalorder %v696, 0
      %vm777 = vcmp.eq.s32.totalorder %v697, 0
      %vm778 = vcmp.eq.s32.totalorder %v698, 0
      %vm779 = vcmp.eq.s32.totalorder %v699, 0
      %vm780 = vcmp.eq.s32.totalorder %v700, 0
      %vm781 = vcmp.eq.s32.totalorder %v701, 0
      %vm782 = vcmp.eq.s32.totalorder %v702, 0
      %vm783 = vcmp.eq.s32.totalorder %v703, 0
      %vm784 = vcmp.eq.s32.totalorder %v704, 0
      %vm785 = vcmp.eq.s32.totalorder %v705, 0
      %vm786 = vcmp.eq.s32.totalorder %v706, 0
      %vm787 = vcmp.eq.s32.totalorder %v707, 0
      %vm788 = vcmp.eq.s32.totalorder %v708, 0
      %vm789 = vcmp.eq.s32.totalorder %v709, 0
      %vm790 = vcmp.eq.s32.totalorder %v710, 0
      %vm791 = vcmp.eq.s32.totalorder %v711, 0
      %vm792 = vcmp.eq.s32.totalorder %v712, 0
      %vm793 = vcmp.eq.s32.totalorder %v713, 0
      %vm794 = vcmp.eq.s32.totalorder %v714, 0
      %vm795 = vmpackc.low %vm763, %vm763
      %vm796 = vmpackc.low %vm764, %vm764
      %vm797 = vmpackc.low %vm765, %vm765
      %vm798 = vmpackc.low %vm766, %vm766
      %vm799 = vmpackc.low %vm767, %vm767
      %vm800 = vmpackc.low %vm768, %vm768
      %vm801 = vmpackc.low %vm769, %vm769
      %vm802 = vmpackc.low %vm770, %vm770
      %vm803 = vmpackc.low %vm771, %vm771
      %vm804 = vmpackc.low %vm772, %vm772
      %vm805 = vmpackc.low %vm773, %vm773
      %vm806 = vmpackc.low %vm774, %vm774
      %vm807 = vmpackc.low %vm775, %vm775
      %vm808 = vmpackc.low %vm776, %vm776
      %vm809 = vmpackc.low %vm777, %vm777
      %vm810 = vmpackc.low %vm778, %vm778
      %vm811 = vmpackc.low %vm779, %vm779
      %vm812 = vmpackc.low %vm780, %vm780
      %vm813 = vmpackc.low %vm781, %vm781
      %vm814 = vmpackc.low %vm782, %vm782
      %vm815 = vmpackc.low %vm783, %vm783
      %vm816 = vmpackc.low %vm784, %vm784
      %vm817 = vmpackc.low %vm785, %vm785
      %vm818 = vmpackc.low %vm786, %vm786
      %vm819 = vmpackc.low %vm787, %vm787
      %vm820 = vmpackc.low %vm788, %vm788
      %vm821 = vmpackc.low %vm789, %vm789
      %vm822 = vmpackc.low %vm790, %vm790
      %vm823 = vmpackc.low %vm791, %vm791
      %vm824 = vmpackc.low %vm792, %vm792
      %vm825 = vmpackc.low %vm793, %vm793
      %vm826 = vmpackc.low %vm794, %vm794
      %v827 = vsel %vm795, 65537, 0
      %v828 = vsel %vm796, 65537, 0
      %v829 = vsel %vm797, 65537, 0
      %v830 = vsel %vm798, 65537, 0
      %v831 = vsel %vm799, 65537, 0
      %v832 = vsel %vm800, 65537, 0
      %v833 = vsel %vm801, 65537, 0
      %v834 = vsel %vm802, 65537, 0
      %v835 = vsel %vm803, 65537, 0
      %v836 = vsel %vm804, 65537, 0
      %v837 = vsel %vm805, 65537, 0
      %v838 = vsel %vm806, 65537, 0
      %v839 = vsel %vm807, 65537, 0
      %v840 = vsel %vm808, 65537, 0
      %v841 = vsel %vm809, 65537, 0
      %v842 = vsel %vm810, 65537, 0
      %v843 = vsel %vm811, 65537, 0
      %v844 = vsel %vm812, 65537, 0
      %v845 = vsel %vm813, 65537, 0
      %v846 = vsel %vm814, 65537, 0
      %v847 = vsel %vm815, 65537, 0
      %v848 = vsel %vm816, 65537, 0
      %v849 = vsel %vm817, 65537, 0
      %v850 = vsel %vm818, 65537, 0
      %v851 = vsel %vm819, 65537, 0
      %v852 = vsel %vm820, 65537, 0
      %v853 = vsel %vm821, 65537, 0
      %v854 = vsel %vm822, 65537, 0
      %v855 = vsel %vm823, 65537, 0
      %v856 = vsel %vm824, 65537, 0
      %v857 = vsel %vm825, 65537, 0
      %v858 = vsel %vm826, 65537, 0
      %v859 = vunpack.c.l.b16 %v827
      %v860 = vunpack.c.l.b16 %v828
      %v861 = vunpack.c.l.b16 %v829
      %v862 = vunpack.c.l.b16 %v830
      %v863 = vunpack.c.l.b16 %v831
      %v864 = vunpack.c.l.b16 %v832
      %v865 = vunpack.c.l.b16 %v833
      %v866 = vunpack.c.l.b16 %v834
      %v867 = vunpack.c.l.b16 %v835
      %v868 = vunpack.c.l.b16 %v836
      %v869 = vunpack.c.l.b16 %v837
      %v870 = vunpack.c.l.b16 %v838
      %v871 = vunpack.c.l.b16 %v839
      %v872 = vunpack.c.l.b16 %v840
      %v873 = vunpack.c.l.b16 %v841
      %v874 = vunpack.c.l.b16 %v842
      %v875 = vunpack.c.l.b16 %v843
      %v876 = vunpack.c.l.b16 %v844
      %v877 = vunpack.c.l.b16 %v845
      %v878 = vunpack.c.l.b16 %v846
      %v879 = vunpack.c.l.b16 %v847
      %v880 = vunpack.c.l.b16 %v848
      %v881 = vunpack.c.l.b16 %v849
      %v882 = vunpack.c.l.b16 %v850
      %v883 = vunpack.c.l.b16 %v851
      %v884 = vunpack.c.l.b16 %v852
      %v885 = vunpack.c.l.b16 %v853
      %v886 = vunpack.c.l.b16 %v854
      %v887 = vunpack.c.l.b16 %v855
      %v888 = vunpack.c.l.b16 %v856
      %v889 = vunpack.c.l.b16 %v857
      %v890 = vunpack.c.l.b16 %v858
      %v891 = vpack.c.b16 %v860, %v859
      %v892 = vpack.c.b16 %v862, %v861
      %v893 = vpack.c.b16 %v864, %v863
      %v894 = vpack.c.b16 %v866, %v865
      %v895 = vpack.c.b16 %v868, %v867
      %v896 = vpack.c.b16 %v870, %v869
      %v897 = vpack.c.b16 %v872, %v871
      %v898 = vpack.c.b16 %v874, %v873
      %v899 = vpack.c.b16 %v876, %v875
      %v900 = vpack.c.b16 %v878, %v877
      %v901 = vpack.c.b16 %v880, %v879
      %v902 = vpack.c.b16 %v882, %v881
      %v903 = vpack.c.b16 %v884, %v883
      %v904 = vpack.c.b16 %v886, %v885
      %v905 = vpack.c.b16 %v888, %v887
      %v906 = vpack.c.b16 %v890, %v889
      %vm907 = vcmp.ne.s16.totalorder %v891, 0
      %vm908 = vcmp.ne.s16.totalorder %v892, 0
      %vm909 = vcmp.ne.s16.totalorder %v893, 0
      %vm910 = vcmp.ne.s16.totalorder %v894, 0
      %vm911 = vcmp.ne.s16.totalorder %v895, 0
      %vm912 = vcmp.ne.s16.totalorder %v896, 0
      %vm913 = vcmp.ne.s16.totalorder %v897, 0
      %vm914 = vcmp.ne.s16.totalorder %v898, 0
      %vm915 = vcmp.ne.s16.totalorder %v899, 0
      %vm916 = vcmp.ne.s16.totalorder %v900, 0
      %vm917 = vcmp.ne.s16.totalorder %v901, 0
      %vm918 = vcmp.ne.s16.totalorder %v902, 0
      %vm919 = vcmp.ne.s16.totalorder %v903, 0
      %vm920 = vcmp.ne.s16.totalorder %v904, 0
      %vm921 = vcmp.ne.s16.totalorder %v905, 0
      %vm922 = vcmp.ne.s16.totalorder %v906, 0
      %v923 = vsel %vm907, 0, %v747
      %v924 = vsel %vm908, 0, %v748
      %v925 = vsel %vm909, 0, %v749
      %v926 = vsel %vm910, 0, %v750
      %v927 = vsel %vm911, 0, %v751
      %v928 = vsel %vm912, 0, %v752
      %v929 = vsel %vm913, 0, %v753
      %v930 = vsel %vm914, 0, %v754
      %v931 = vsel %vm915, 0, %v755
      %v932 = vsel %vm916, 0, %v756
      %v933 = vsel %vm917, 0, %v757
      %v934 = vsel %vm918, 0, %v758
      %v935 = vsel %vm919, 0, %v759
      %v936 = vsel %vm920, 0, %v760
      %v937 = vsel %vm921, 0, %v761
      %v938 = vsel %vm922, 0, %v762
      %v939 = vld [vmem:[#allocation4 + $0x11] sm:$0xff]
      %v940 = vld [vmem:[#allocation4 + $0x19] sm:$0xff]
      %v941 = vld [vmem:[#allocation4 + $0x21] sm:$0xff]
      %v942 = vld [vmem:[#allocation4 + $0x29] sm:$0xff]
      %v943 = vld [vmem:[#allocation4 + $0x31] sm:$0xff]
      %v944 = vld [vmem:[#allocation4 + $0x39] sm:$0xff]
      %v945 = vld [vmem:[#allocation4 + $0x41] sm:$0xff]
      %v946 = vld [vmem:[#allocation4 + $0x49] sm:$0xff]
      %v947 = vld [vmem:[#allocation4 + $0x51] sm:$0xff]
      %v948 = vld [vmem:[#allocation4 + $0x59] sm:$0xff]
      %v949 = vld [vmem:[#allocation4 + $0x61] sm:$0xff]
      %v950 = vld [vmem:[#allocation4 + $0x69] sm:$0xff]
      %v951 = vld [vmem:[#allocation4 + $0x71] sm:$0xff]
      %v952 = vld [vmem:[#allocation4 + $0x79] sm:$0xff]
      %v953 = vld [vmem:[#allocation4 + $0x81] sm:$0xff]
      %v954 = vld [vmem:[#allocation4 + $0x89] sm:$0xff]
      %v955 = vld [vmem:[#allocation4 + $0x91] sm:$0xff]
      %v956 = vld [vmem:[#allocation4 + $0x99] sm:$0xff]
      %v957 = vld [vmem:[#allocation4 + $0xa1] sm:$0xff]
      %v958 = vld [vmem:[#allocation4 + $0xa9] sm:$0xff]
      %v959 = vld [vmem:[#allocation4 + $0xb1] sm:$0xff]
      %v960 = vld [vmem:[#allocation4 + $0xb9] sm:$0xff]
      %v961 = vld [vmem:[#allocation4 + $0xc1] sm:$0xff]
      %v962 = vld [vmem:[#allocation4 + $0xc9] sm:$0xff]
      %v963 = vld [vmem:[#allocation4 + $0xd1] sm:$0xff]
      %v964 = vld [vmem:[#allocation4 + $0xd9] sm:$0xff]
      %v965 = vld [vmem:[#allocation4 + $0xe1] sm:$0xff]
      %v966 = vld [vmem:[#allocation4 + $0xe9] sm:$0xff]
      %v967 = vld [vmem:[#allocation4 + $0xf1] sm:$0xff]
      %v968 = vld [vmem:[#allocation4 + $0xf9] sm:$0xff]
      %v969 = vld [vmem:[#allocation4 + $0x101] sm:$0xff]
      %v970 = vld [vmem:[#allocation4 + $0x109] sm:$0xff]
      %v971 = vpack.c.bf16 %v940, %v939
      %v972 = vpack.c.bf16 %v942, %v941
      %v973 = vpack.c.bf16 %v944, %v943
      %v974 = vpack.c.bf16 %v946, %v945
      %v975 = vpack.c.bf16 %v948, %v947
      %v976 = vpack.c.bf16 %v950, %v949
      %v977 = vpack.c.bf16 %v952, %v951
      %v978 = vpack.c.bf16 %v954, %v953
      %v979 = vpack.c.bf16 %v956, %v955
      %v980 = vpack.c.bf16 %v958, %v957
      %v981 = vpack.c.bf16 %v960, %v959
      %v982 = vpack.c.bf16 %v962, %v961
      %v983 = vpack.c.bf16 %v964, %v963
      %v984 = vpack.c.bf16 %v966, %v965
      %v985 = vpack.c.bf16 %v968, %v967
      %v986 = vpack.c.bf16 %v970, %v969
      %vm987 = vcmp.eq.s32.totalorder %v683, 15
      %vm988 = vcmp.eq.s32.totalorder %v684, 15
      %vm989 = vcmp.eq.s32.totalorder %v685, 15
      %vm990 = vcmp.eq.s32.totalorder %v686, 15
      %vm991 = vcmp.eq.s32.totalorder %v687, 15
      %vm992 = vcmp.eq.s32.totalorder %v688, 15
      %vm993 = vcmp.eq.s32.totalorder %v689, 15
      %vm994 = vcmp.eq.s32.totalorder %v690, 15
      %vm995 = vcmp.eq.s32.totalorder %v691, 15
      %vm996 = vcmp.eq.s32.totalorder %v692, 15
      %vm997 = vcmp.eq.s32.totalorder %v693, 15
      %vm998 = vcmp.eq.s32.totalorder %v694, 15
      %vm999 = vcmp.eq.s32.totalorder %v695, 15
      %vm1000 = vcmp.eq.s32.totalorder %v696, 15
      %vm1001 = vcmp.eq.s32.totalorder %v697, 15
      %vm1002 = vcmp.eq.s32.totalorder %v698, 15
      %vm1003 = vcmp.eq.s32.totalorder %v699, 15
      %vm1004 = vcmp.eq.s32.totalorder %v700, 15
      %vm1005 = vcmp.eq.s32.totalorder %v701, 15
      %vm1006 = vcmp.eq.s32.totalorder %v702, 15
      %vm1007 = vcmp.eq.s32.totalorder %v703, 15
      %vm1008 = vcmp.eq.s32.totalorder %v704, 15
      %vm1009 = vcmp.eq.s32.totalorder %v705, 15
      %vm1010 = vcmp.eq.s32.totalorder %v706, 15
      %vm1011 = vcmp.eq.s32.totalorder %v707, 15
      %vm1012 = vcmp.eq.s32.totalorder %v708, 15
      %vm1013 = vcmp.eq.s32.totalorder %v709, 15
      %vm1014 = vcmp.eq.s32.totalorder %v710, 15
      %vm1015 = vcmp.eq.s32.totalorder %v711, 15
      %vm1016 = vcmp.eq.s32.totalorder %v712, 15
      %vm1017 = vcmp.eq.s32.totalorder %v713, 15
      %vm1018 = vcmp.eq.s32.totalorder %v714, 15
      %vm1019 = vmpackc.low %vm987, %vm987
      %vm1020 = vmpackc.low %vm988, %vm988
      %vm1021 = vmpackc.low %vm989, %vm989
      %vm1022 = vmpackc.low %vm990, %vm990
      %vm1023 = vmpackc.low %vm991, %vm991
      %vm1024 = vmpackc.low %vm992, %vm992
      %vm1025 = vmpackc.low %vm993, %vm993
      %vm1026 = vmpackc.low %vm994, %vm994
      %vm1027 = vmpackc.low %vm995, %vm995
      %vm1028 = vmpackc.low %vm996, %vm996
      %vm1029 = vmpackc.low %vm997, %vm997
      %vm1030 = vmpackc.low %vm998, %vm998
      %vm1031 = vmpackc.low %vm999, %vm999
      %vm1032 = vmpackc.low %vm1000, %vm1000
      %vm1033 = vmpackc.low %vm1001, %vm1001
      %vm1034 = vmpackc.low %vm1002, %vm1002
      %vm1035 = vmpackc.low %vm1003, %vm1003
      %vm1036 = vmpackc.low %vm1004, %vm1004
      %vm1037 = vmpackc.low %vm1005, %vm1005
      %vm1038 = vmpackc.low %vm1006, %vm1006
      %vm1039 = vmpackc.low %vm1007, %vm1007
      %vm1040 = vmpackc.low %vm1008, %vm1008
      %vm1041 = vmpackc.low %vm1009, %vm1009
      %vm1042 = vmpackc.low %vm1010, %vm1010
      %vm1043 = vmpackc.low %vm1011, %vm1011
      %vm1044 = vmpackc.low %vm1012, %vm1012
      %vm1045 = vmpackc.low %vm1013, %vm1013
      %vm1046 = vmpackc.low %vm1014, %vm1014
      %vm1047 = vmpackc.low %vm1015, %vm1015
      %vm1048 = vmpackc.low %vm1016, %vm1016
      %vm1049 = vmpackc.low %vm1017, %vm1017
      %vm1050 = vmpackc.low %vm1018, %vm1018
      %v1051 = vsel %vm1019, 65537, 0
      %v1052 = vsel %vm1020, 65537, 0
      %v1053 = vsel %vm1021, 65537, 0
      %v1054 = vsel %vm1022, 65537, 0
      %v1055 = vsel %vm1023, 65537, 0
      %v1056 = vsel %vm1024, 65537, 0
      %v1057 = vsel %vm1025, 65537, 0
      %v1058 = vsel %vm1026, 65537, 0
      %v1059 = vsel %vm1027, 65537, 0
      %v1060 = vsel %vm1028, 65537, 0
      %v1061 = vsel %vm1029, 65537, 0
      %v1062 = vsel %vm1030, 65537, 0
      %v1063 = vsel %vm1031, 65537, 0
      %v1064 = vsel %vm1032, 65537, 0
      %v1065 = vsel %vm1033, 65537, 0
      %v1066 = vsel %vm1034, 65537, 0
      %v1067 = vsel %vm1035, 65537, 0
      %v1068 = vsel %vm1036, 65537, 0
      %v1069 = vsel %vm1037, 65537, 0
      %v1070 = vsel %vm1038, 65537, 0
      %v1071 = vsel %vm1039, 65537, 0
      %v1072 = vsel %vm1040, 65537, 0
      %v1073 = vsel %vm1041, 65537, 0
      %v1074 = vsel %vm1042, 65537, 0
      %v1075 = vsel %vm1043, 65537, 0
      %v1076 = vsel %vm1044, 65537, 0
      %v1077 = vsel %vm1045, 65537, 0
      %v1078 = vsel %vm1046, 65537, 0
      %v1079 = vsel %vm1047, 65537, 0
      %v1080 = vsel %vm1048, 65537, 0
      %v1081 = vsel %vm1049, 65537, 0
      %v1082 = vsel %vm1050, 65537, 0
      %v1083 = vunpack.c.l.b16 %v1051
      %v1084 = vunpack.c.l.b16 %v1052
      %v1085 = vunpack.c.l.b16 %v1053
      %v1086 = vunpack.c.l.b16 %v1054
      %v1087 = vunpack.c.l.b16 %v1055
      %v1088 = vunpack.c.l.b16 %v1056
      %v1089 = vunpack.c.l.b16 %v1057
      %v1090 = vunpack.c.l.b16 %v1058
      %v1091 = vunpack.c.l.b16 %v1059
      %v1092 = vunpack.c.l.b16 %v1060
      %v1093 = vunpack.c.l.b16 %v1061
      %v1094 = vunpack.c.l.b16 %v1062
      %v1095 = vunpack.c.l.b16 %v1063
      %v1096 = vunpack.c.l.b16 %v1064
      %v1097 = vunpack.c.l.b16 %v1065
      %v1098 = vunpack.c.l.b16 %v1066
      %v1099 = vunpack.c.l.b16 %v1067
      %v1100 = vunpack.c.l.b16 %v1068
      %v1101 = vunpack.c.l.b16 %v1069
      %v1102 = vunpack.c.l.b16 %v1070
      %v1103 = vunpack.c.l.b16 %v1071
      %v1104 = vunpack.c.l.b16 %v1072
      %v1105 = vunpack.c.l.b16 %v1073
      %v1106 = vunpack.c.l.b16 %v1074
      %v1107 = vunpack.c.l.b16 %v1075
      %v1108 = vunpack.c.l.b16 %v1076
      %v1109 = vunpack.c.l.b16 %v1077
      %v1110 = vunpack.c.l.b16 %v1078
      %v1111 = vunpack.c.l.b16 %v1079
      %v1112 = vunpack.c.l.b16 %v1080
      %v1113 = vunpack.c.l.b16 %v1081
      %v1114 = vunpack.c.l.b16 %v1082
      %v1115 = vpack.c.b16 %v1084, %v1083
      %v1116 = vpack.c.b16 %v1086, %v1085
      %v1117 = vpack.c.b16 %v1088, %v1087
      %v1118 = vpack.c.b16 %v1090, %v1089
      %v1119 = vpack.c.b16 %v1092, %v1091
      %v1120 = vpack.c.b16 %v1094, %v1093
      %v1121 = vpack.c.b16 %v1096, %v1095
      %v1122 = vpack.c.b16 %v1098, %v1097
      %v1123 = vpack.c.b16 %v1100, %v1099
      %v1124 = vpack.c.b16 %v1102, %v1101
      %v1125 = vpack.c.b16 %v1104, %v1103
      %v1126 = vpack.c.b16 %v1106, %v1105
      %v1127 = vpack.c.b16 %v1108, %v1107
      %v1128 = vpack.c.b16 %v1110, %v1109
      %v1129 = vpack.c.b16 %v1112, %v1111
      %v1130 = vpack.c.b16 %v1114, %v1113
      %vm1131 = vcmp.ne.s16.totalorder %v1115, 0
      %vm1132 = vcmp.ne.s16.totalorder %v1116, 0
      %vm1133 = vcmp.ne.s16.totalorder %v1117, 0
      %vm1134 = vcmp.ne.s16.totalorder %v1118, 0
      %vm1135 = vcmp.ne.s16.totalorder %v1119, 0
      %vm1136 = vcmp.ne.s16.totalorder %v1120, 0
      %vm1137 = vcmp.ne.s16.totalorder %v1121, 0
      %vm1138 = vcmp.ne.s16.totalorder %v1122, 0
      %vm1139 = vcmp.ne.s16.totalorder %v1123, 0
      %vm1140 = vcmp.ne.s16.totalorder %v1124, 0
      %vm1141 = vcmp.ne.s16.totalorder %v1125, 0
      %vm1142 = vcmp.ne.s16.totalorder %v1126, 0
      %vm1143 = vcmp.ne.s16.totalorder %v1127, 0
      %vm1144 = vcmp.ne.s16.totalorder %v1128, 0
      %vm1145 = vcmp.ne.s16.totalorder %v1129, 0
      %vm1146 = vcmp.ne.s16.totalorder %v1130, 0
      %v1147 = vsel %vm1131, 0, %v971
      %v1148 = vsel %vm1132, 0, %v972
      %v1149 = vsel %vm1133, 0, %v973
      %v1150 = vsel %vm1134, 0, %v974
      %v1151 = vsel %vm1135, 0, %v975
      %v1152 = vsel %vm1136, 0, %v976
      %v1153 = vsel %vm1137, 0, %v977
      %v1154 = vsel %vm1138, 0, %v978
      %v1155 = vsel %vm1139, 0, %v979
      %v1156 = vsel %vm1140, 0, %v980
      %v1157 = vsel %vm1141, 0, %v981
      %v1158 = vsel %vm1142, 0, %v982
      %v1159 = vsel %vm1143, 0, %v983
      %v1160 = vsel %vm1144, 0, %v984
      %v1161 = vsel %vm1145, 0, %v985
      %v1162 = vsel %vm1146, 0, %v986
      %1179 = vrot.lane.b32.xlu0 %v282, 64
      %v1180 = vpop.permute.xlu0 %1179
      %1181 = vrot.lane.b32.xlu0 %v283, 64
      %v1182 = vpop.permute.xlu0 %1181
      %1183 = vrot.lane.b32.xlu0 %v284, 64
      %v1184 = vpop.permute.xlu0 %1183
      %1185 = vrot.lane.b32.xlu0 %v285, 64
      %v1186 = vpop.permute.xlu0 %1185
      %1187 = vrot.lane.b32.xlu0 %v286, 64
      %v1188 = vpop.permute.xlu0 %1187
      %1189 = vrot.lane.b32.xlu0 %v287, 64
      %v1190 = vpop.permute.xlu0 %1189
      %1191 = vrot.lane.b32.xlu0 %v288, 64
      %v1192 = vpop.permute.xlu0 %1191
      %1193 = vrot.lane.b32.xlu0 %v289, 64
      %v1194 = vpop.permute.xlu0 %1193
      %1195 = vrot.lane.b32.xlu0 %v290, 64
      %v1196 = vpop.permute.xlu0 %1195
      %1197 = vrot.lane.b32.xlu0 %v291, 64
      %v1198 = vpop.permute.xlu0 %1197
      %1199 = vrot.lane.b32.xlu0 %v292, 64
      %v1200 = vpop.permute.xlu0 %1199
      %1201 = vrot.lane.b32.xlu0 %v293, 64
      %v1202 = vpop.permute.xlu0 %1201
      %1203 = vrot.lane.b32.xlu0 %v294, 64
      %v1204 = vpop.permute.xlu0 %1203
      %1205 = vrot.lane.b32.xlu0 %v295, 64
      %v1206 = vpop.permute.xlu0 %1205
      %1207 = vrot.lane.b32.xlu0 %v296, 64
      %v1208 = vpop.permute.xlu0 %1207
      %1209 = vrot.lane.b32.xlu0 %v297, 64
      %v1210 = vpop.permute.xlu0 %1209
      %v1213 = vsel %vm245, %v923, %v1180
      %v1216 = vsel %vm245, %v924, %v1182
      %v1219 = vsel %vm245, %v925, %v1184
      %v1222 = vsel %vm245, %v926, %v1186
      %v1225 = vsel %vm245, %v927, %v1188
      %v1228 = vsel %vm245, %v928, %v1190
      %v1231 = vsel %vm245, %v929, %v1192
      %v1234 = vsel %vm245, %v930, %v1194
      %v1237 = vsel %vm245, %v931, %v1196
      %v1240 = vsel %vm245, %v932, %v1198
      %v1243 = vsel %vm245, %v933, %v1200
      %v1246 = vsel %vm245, %v934, %v1202
      %v1249 = vsel %vm245, %v935, %v1204
      %v1252 = vsel %vm245, %v936, %v1206
      %v1255 = vsel %vm245, %v937, %v1208
      %v1258 = vsel %vm245, %v938, %v1210
      %v1291 = vunpack.c.l.b16 %v1213
      %v1292 = vunpack.c.l.b16 %v1147
      %v1293 = vunpack.c.h.b16 %v1213
      %v1294 = vunpack.c.h.b16 %v1147
      %v1295 = vunpack.c.l.b16 %v1216
      %v1296 = vunpack.c.l.b16 %v1148
      %v1297 = vunpack.c.h.b16 %v1216
      %v1298 = vunpack.c.h.b16 %v1148
      %v1299 = vunpack.c.l.b16 %v1219
      %v1300 = vunpack.c.l.b16 %v1149
      %v1301 = vunpack.c.h.b16 %v1219
      %v1302 = vunpack.c.h.b16 %v1149
      %v1303 = vunpack.c.l.b16 %v1222
      %v1304 = vunpack.c.l.b16 %v1150
      %v1305 = vunpack.c.h.b16 %v1222
      %v1306 = vunpack.c.h.b16 %v1150
      %v1307 = vunpack.c.l.b16 %v1225
      %v1308 = vunpack.c.l.b16 %v1151
      %v1309 = vunpack.c.h.b16 %v1225
      %v1310 = vunpack.c.h.b16 %v1151
      %v1311 = vunpack.c.l.b16 %v1228
      %v1312 = vunpack.c.l.b16 %v1152
      %v1313 = vunpack.c.h.b16 %v1228
      %v1314 = vunpack.c.h.b16 %v1152
      %v1315 = vunpack.c.l.b16 %v1231
      %v1316 = vunpack.c.l.b16 %v1153
      %v1317 = vunpack.c.h.b16 %v1231
      %v1318 = vunpack.c.h.b16 %v1153
      %v1319 = vunpack.c.l.b16 %v1234
      %v1320 = vunpack.c.l.b16 %v1154
      %v1321 = vunpack.c.h.b16 %v1234
      %v1322 = vunpack.c.h.b16 %v1154
      %v1323 = vunpack.c.l.b16 %v1237
      %v1324 = vunpack.c.l.b16 %v1155
      %v1325 = vunpack.c.h.b16 %v1237
      %v1326 = vunpack.c.h.b16 %v1155
      %v1327 = vunpack.c.l.b16 %v1240
      %v1328 = vunpack.c.l.b16 %v1156
      %v1329 = vunpack.c.h.b16 %v1240
      %v1330 = vunpack.c.h.b16 %v1156
      %v1331 = vunpack.c.l.b16 %v1243
      %v1332 = vunpack.c.l.b16 %v1157
      %v1333 = vunpack.c.h.b16 %v1243
      %v1334 = vunpack.c.h.b16 %v1157
      %v1335 = vunpack.c.l.b16 %v1246
      %v1336 = vunpack.c.l.b16 %v1158
      %v1337 = vunpack.c.h.b16 %v1246
      %v1338 = vunpack.c.h.b16 %v1158
      %v1339 = vunpack.c.l.b16 %v1249
      %v1340 = vunpack.c.l.b16 %v1159
      %v1341 = vunpack.c.h.b16 %v1249
      %v1342 = vunpack.c.h.b16 %v1159
      %v1343 = vunpack.c.l.b16 %v1252
      %v1344 = vunpack.c.l.b16 %v1160
      %v1345 = vunpack.c.h.b16 %v1252
      %v1346 = vunpack.c.h.b16 %v1160
      %v1347 = vunpack.c.l.b16 %v1255
      %v1348 = vunpack.c.l.b16 %v1161
      %v1349 = vunpack.c.h.b16 %v1255
      %v1350 = vunpack.c.h.b16 %v1161
      %v1351 = vunpack.c.l.b16 %v1258
      %v1352 = vunpack.c.l.b16 %v1162
      %v1353 = vunpack.c.h.b16 %v1258
      %v1354 = vunpack.c.h.b16 %v1162
      %v1355 = vpack.c.b16 %v1292, %v1291
      %v1356 = vpack.c.b16 %v1294, %v1293
      %v1357 = vpack.c.b16 %v1296, %v1295
      %v1358 = vpack.c.b16 %v1298, %v1297
      %v1359 = vpack.c.b16 %v1300, %v1299
      %v1360 = vpack.c.b16 %v1302, %v1301
      %v1361 = vpack.c.b16 %v1304, %v1303
      %v1362 = vpack.c.b16 %v1306, %v1305
      %v1363 = vpack.c.b16 %v1308, %v1307
      %v1364 = vpack.c.b16 %v1310, %v1309
      %v1365 = vpack.c.b16 %v1312, %v1311
      %v1366 = vpack.c.b16 %v1314, %v1313
      %v1367 = vpack.c.b16 %v1316, %v1315
      %v1368 = vpack.c.b16 %v1318, %v1317
      %v1369 = vpack.c.b16 %v1320, %v1319
      %v1370 = vpack.c.b16 %v1322, %v1321
      %v1371 = vpack.c.b16 %v1324, %v1323
      %v1372 = vpack.c.b16 %v1326, %v1325
      %v1373 = vpack.c.b16 %v1328, %v1327
      %v1374 = vpack.c.b16 %v1330, %v1329
      %v1375 = vpack.c.b16 %v1332, %v1331
      %v1376 = vpack.c.b16 %v1334, %v1333
      %v1377 = vpack.c.b16 %v1336, %v1335
      %v1378 = vpack.c.b16 %v1338, %v1337
      %v1379 = vpack.c.b16 %v1340, %v1339
      %v1380 = vpack.c.b16 %v1342, %v1341
      %v1381 = vpack.c.b16 %v1344, %v1343
      %v1382 = vpack.c.b16 %v1346, %v1345
      %v1383 = vpack.c.b16 %v1348, %v1347
      %v1384 = vpack.c.b16 %v1350, %v1349
      %v1385 = vpack.c.b16 %v1352, %v1351
      %v1386 = vpack.c.b16 %v1354, %v1353
      %1419 = vst.msk [vmem:[#allocation2 + $0x10] sm:$0xff] %vm240, %v1355
      %1420 = vst.msk [vmem:[#allocation2 + $0x18] sm:$0xff] %vm240, %v1356
      %1421 = vst.msk [vmem:[#allocation2 + $0x20] sm:$0xff] %vm240, %v1357
      %1422 = vst.msk [vmem:[#allocation2 + $0x28] sm:$0xff] %vm240, %v1358
      %1423 = vst.msk [vmem:[#allocation2 + $0x30] sm:$0xff] %vm240, %v1359
      %1424 = vst.msk [vmem:[#allocation2 + $0x38] sm:$0xff] %vm240, %v1360
      %1425 = vst.msk [vmem:[#allocation2 + $0x40] sm:$0xff] %vm240, %v1361
      %1426 = vst.msk [vmem:[#allocation2 + $0x48] sm:$0xff] %vm240, %v1362
      %1427 = vst.msk [vmem:[#allocation2 + $0x50] sm:$0xff] %vm240, %v1363
      %1428 = vst.msk [vmem:[#allocation2 + $0x58] sm:$0xff] %vm240, %v1364
      %1429 = vst.msk [vmem:[#allocation2 + $0x60] sm:$0xff] %vm240, %v1365
      %1430 = vst.msk [vmem:[#allocation2 + $0x68] sm:$0xff] %vm240, %v1366
      %1431 = vst.msk [vmem:[#allocation2 + $0x70] sm:$0xff] %vm240, %v1367
      %1432 = vst.msk [vmem:[#allocation2 + $0x78] sm:$0xff] %vm240, %v1368
      %1433 = vst.msk [vmem:[#allocation2 + $0x80] sm:$0xff] %vm240, %v1369
      %1434 = vst.msk [vmem:[#allocation2 + $0x88] sm:$0xff] %vm240, %v1370
      %1435 = vst.msk [vmem:[#allocation2 + $0x90] sm:$0xff] %vm240, %v1371
      %1436 = vst.msk [vmem:[#allocation2 + $0x98] sm:$0xff] %vm240, %v1372
      %1437 = vst.msk [vmem:[#allocation2 + $0xa0] sm:$0xff] %vm240, %v1373
      %1438 = vst.msk [vmem:[#allocation2 + $0xa8] sm:$0xff] %vm240, %v1374
      %1439 = vst.msk [vmem:[#allocation2 + $0xb0] sm:$0xff] %vm240, %v1375
      %1440 = vst.msk [vmem:[#allocation2 + $0xb8] sm:$0xff] %vm240, %v1376
      %1441 = vst.msk [vmem:[#allocation2 + $0xc0] sm:$0xff] %vm240, %v1377
      %1442 = vst.msk [vmem:[#allocation2 + $0xc8] sm:$0xff] %vm240, %v1378
      %1443 = vst.msk [vmem:[#allocation2 + $0xd0] sm:$0xff] %vm240, %v1379
      %1444 = vst.msk [vmem:[#allocation2 + $0xd8] sm:$0xff] %vm240, %v1380
      %1445 = vst.msk [vmem:[#allocation2 + $0xe0] sm:$0xff] %vm240, %v1381
      %1446 = vst.msk [vmem:[#allocation2 + $0xe8] sm:$0xff] %vm240, %v1382
      %1447 = vst.msk [vmem:[#allocation2 + $0xf0] sm:$0xff] %vm240, %v1383
      %1448 = vst.msk [vmem:[#allocation2 + $0xf8] sm:$0xff] %vm240, %v1384
      %1449 = vst.msk [vmem:[#allocation2 + $0x100] sm:$0xff] %vm240, %v1385
      %1450 = vst.msk [vmem:[#allocation2 + $0x108] sm:$0xff] %vm240, %v1386
      %v1451 = vld [vmem:[#allocation2] sm:$0xff]
      %v1452 = vld [vmem:[#allocation2 + $0x8] sm:$0xff]
      %v1453 = vld [vmem:[#allocation2 + $0x10] sm:$0xff]
      %v1454 = vld [vmem:[#allocation2 + $0x18] sm:$0xff]
      %v1455 = vld [vmem:[#allocation2 + $0x20] sm:$0xff]
      %v1456 = vld [vmem:[#allocation2 + $0x28] sm:$0xff]
      %v1457 = vld [vmem:[#allocation2 + $0x30] sm:$0xff]
      %v1458 = vld [vmem:[#allocation2 + $0x38] sm:$0xff]
      %v1459 = vld [vmem:[#allocation2 + $0x40] sm:$0xff]
      %v1460 = vld [vmem:[#allocation2 + $0x48] sm:$0xff]
      %v1461 = vld [vmem:[#allocation2 + $0x50] sm:$0xff]
      %v1462 = vld [vmem:[#allocation2 + $0x58] sm:$0xff]
      %v1463 = vld [vmem:[#allocation2 + $0x60] sm:$0xff]
      %v1464 = vld [vmem:[#allocation2 + $0x68] sm:$0xff]
      %v1465 = vld [vmem:[#allocation2 + $0x70] sm:$0xff]
      %v1466 = vld [vmem:[#allocation2 + $0x78] sm:$0xff]
      %v1467 = vld [vmem:[#allocation2 + $0x80] sm:$0xff]
      %v1468 = vld [vmem:[#allocation2 + $0x88] sm:$0xff]
      %v1469 = vld [vmem:[#allocation2 + $0x90] sm:$0xff]
      %v1470 = vld [vmem:[#allocation2 + $0x98] sm:$0xff]
      %v1471 = vld [vmem:[#allocation2 + $0xa0] sm:$0xff]
      %v1472 = vld [vmem:[#allocation2 + $0xa8] sm:$0xff]
      %v1473 = vld [vmem:[#allocation2 + $0xb0] sm:$0xff]
      %v1474 = vld [vmem:[#allocation2 + $0xb8] sm:$0xff]
      %v1475 = vld [vmem:[#allocation2 + $0xc0] sm:$0xff]
      %v1476 = vld [vmem:[#allocation2 + $0xc8] sm:$0xff]
      %v1477 = vld [vmem:[#allocation2 + $0xd0] sm:$0xff]
      %v1478 = vld [vmem:[#allocation2 + $0xd8] sm:$0xff]
      %v1479 = vld [vmem:[#allocation2 + $0xe0] sm:$0xff]
      %v1480 = vld [vmem:[#allocation2 + $0xe8] sm:$0xff]
      %v1481 = vld [vmem:[#allocation2 + $0xf0] sm:$0xff]
      %v1482 = vld [vmem:[#allocation2 + $0xf8] sm:$0xff]
      %v1483 = vld [vmem:[%s1] sm:$0xf]
      %v1484 = vld [vmem:[%s1 + $0x4] sm:$0xf]
      %v1485 = vld [vmem:[%s1 + $0x8] sm:$0xf]
      %v1486 = vld [vmem:[%s1 + $0xc] sm:$0xf]
      %v1487 = vld [vmem:[%s1 + $0x10] sm:$0xf]
      %v1488 = vld [vmem:[%s1 + $0x14] sm:$0xf]
      %v1489 = vld [vmem:[%s1 + $0x18] sm:$0xf]
      %v1490 = vld [vmem:[%s1 + $0x1c] sm:$0xf]
      %v1491 = vld [vmem:[%s1 + $0x20] sm:$0xf]
      %v1492 = vld [vmem:[%s1 + $0x24] sm:$0xf]
      %v1493 = vld [vmem:[%s1 + $0x28] sm:$0xf]
      %v1494 = vld [vmem:[%s1 + $0x2c] sm:$0xf]
      %v1495 = vld [vmem:[%s1 + $0x30] sm:$0xf]
      %v1496 = vld [vmem:[%s1 + $0x34] sm:$0xf]
      %v1497 = vld [vmem:[%s1 + $0x38] sm:$0xf]
      %v1498 = vld [vmem:[%s1 + $0x3c] sm:$0xf]
      %v1499 = vld [vmem:[%s1 + $0x40] sm:$0xf]
      %v1500 = vld [vmem:[%s1 + $0x44] sm:$0xf]
      %v1501 = vld [vmem:[%s1 + $0x48] sm:$0xf]
      %v1502 = vld [vmem:[%s1 + $0x4c] sm:$0xf]
      %v1503 = vld [vmem:[%s1 + $0x50] sm:$0xf]
      %v1504 = vld [vmem:[%s1 + $0x54] sm:$0xf]
      %v1505 = vld [vmem:[%s1 + $0x58] sm:$0xf]
      %v1506 = vld [vmem:[%s1 + $0x5c] sm:$0xf]
      %v1507 = vld [vmem:[#allocation2 + $0x100] sm:$0xff]
      %v1508 = vld [vmem:[#allocation2 + $0x108] sm:$0xff]
      %s1509 = scalar_lea.vmem %s1, 96
      %v1510 = vld [vmem:[%s1509] sm:$0xf]
      %v1511 = vld [vmem:[%s1509 + $0x4] sm:$0xf]
      %v1512 = vld [vmem:[%s1509 + $0x8] sm:$0xf]
      %v1513 = vld [vmem:[%s1509 + $0xc] sm:$0xf]
      %v1514 = vld [vmem:[%s1509 + $0x10] sm:$0xf]
      %v1515 = vld [vmem:[%s1509 + $0x14] sm:$0xf]
      %v1516 = vld [vmem:[%s1509 + $0x18] sm:$0xf]
      %v1517 = vld [vmem:[%s1509 + $0x1c] sm:$0xf]
      %v1518 = vld [vmem:[%s1509 + $0x20] sm:$0xf]
      %v1519 = vld [vmem:[%s1509 + $0x24] sm:$0xf]
      %v1520 = vld [vmem:[%s1509 + $0x28] sm:$0xf]
      %v1521 = vld [vmem:[%s1509 + $0x2c] sm:$0xf]
      %v1522 = vld [vmem:[%s1509 + $0x30] sm:$0xf]
      %v1523 = vld [vmem:[%s1509 + $0x34] sm:$0xf]
      %v1524 = vld [vmem:[%s1509 + $0x38] sm:$0xf]
      %v1525 = vld [vmem:[%s1509 + $0x3c] sm:$0xf]
      %v1526 = vld [vmem:[%s1509 + $0x40] sm:$0xf]
      %v1527 = vld [vmem:[%s1509 + $0x44] sm:$0xf]
      %v1528 = vld [vmem:[%s1509 + $0x48] sm:$0xf]
      %v1529 = vld [vmem:[%s1509 + $0x4c] sm:$0xf]
      %v1530 = vld [vmem:[%s1509 + $0x50] sm:$0xf]
      %v1531 = vld [vmem:[%s1509 + $0x54] sm:$0xf]
      %v1532 = vld [vmem:[%s1509 + $0x58] sm:$0xf]
      %v1533 = vld [vmem:[%s1509 + $0x5c] sm:$0xf]
      %v1566 = vunpack.c.l.b16 %v1453
      %v1567 = vunpack.c.h.b16 %v1453
      %v1568 = vunpack.c.l.b16 %v1454
      %v1569 = vunpack.c.h.b16 %v1454
      %v1570 = vunpack.c.l.b16 %v1455
      %v1571 = vunpack.c.h.b16 %v1455
      %v1572 = vunpack.c.l.b16 %v1456
      %v1573 = vunpack.c.h.b16 %v1456
      %v1574 = vunpack.c.l.b16 %v1457
      %v1575 = vunpack.c.h.b16 %v1457
      %v1576 = vunpack.c.l.b16 %v1458
      %v1577 = vunpack.c.h.b16 %v1458
      %v1578 = vunpack.c.l.b16 %v1459
      %v1579 = vunpack.c.h.b16 %v1459
      %v1580 = vunpack.c.l.b16 %v1460
      %v1581 = vunpack.c.h.b16 %v1460
      %v1582 = vunpack.c.l.b16 %v1461
      %v1583 = vunpack.c.h.b16 %v1461
      %v1584 = vunpack.c.l.b16 %v1462
      %v1585 = vunpack.c.h.b16 %v1462
      %v1586 = vunpack.c.l.b16 %v1463
      %v1587 = vunpack.c.h.b16 %v1463
      %v1588 = vunpack.c.l.b16 %v1464
      %v1589 = vunpack.c.h.b16 %v1464
      %v1590 = vunpack.c.l.b16 %v1465
      %v1591 = vunpack.c.h.b16 %v1465
      %v1592 = vunpack.c.l.b16 %v1466
      %v1593 = vunpack.c.h.b16 %v1466
      %v1594 = vunpack.c.l.b16 %v1467
      %v1595 = vunpack.c.h.b16 %v1467
      %v1596 = vunpack.c.l.b16 %v1468
      %v1597 = vunpack.c.h.b16 %v1468
      %v1598 = vunpack.c.l.b16 %v1469
      %v1599 = vunpack.c.h.b16 %v1469
      %v1600 = vunpack.c.l.b16 %v1470
      %v1601 = vunpack.c.h.b16 %v1470
      %v1602 = vunpack.c.l.b16 %v1471
      %v1603 = vunpack.c.h.b16 %v1471
      %v1604 = vunpack.c.l.b16 %v1472
      %v1605 = vunpack.c.h.b16 %v1472
      %v1606 = vunpack.c.l.b16 %v1473
      %v1607 = vunpack.c.h.b16 %v1473
      %v1608 = vunpack.c.l.b16 %v1474
      %v1609 = vunpack.c.h.b16 %v1474
      %v1610 = vunpack.c.l.b16 %v1475
      %v1611 = vunpack.c.h.b16 %v1475
      %v1612 = vunpack.c.l.b16 %v1476
      %v1613 = vunpack.c.h.b16 %v1476
      %v1614 = vunpack.c.l.b16 %v1477
      %v1615 = vunpack.c.h.b16 %v1477
      %v1616 = vunpack.c.l.b16 %v1478
      %v1617 = vunpack.c.h.b16 %v1478
      %v1618 = vunpack.c.l.b16 %v1479
      %v1619 = vunpack.c.h.b16 %v1479
      %v1620 = vunpack.c.l.b16 %v1480
      %v1621 = vunpack.c.h.b16 %v1480
      %v1622 = vunpack.c.l.b16 %v1481
      %v1623 = vunpack.c.h.b16 %v1481
      %v1624 = vunpack.c.l.b16 %v1482
      %v1625 = vunpack.c.h.b16 %v1482
      %v1626 = vunpack.c.l.b16 %v1507
      %v1627 = vunpack.c.h.b16 %v1507
      %v1628 = vunpack.c.l.b16 %v1508
      %v1629 = vunpack.c.h.b16 %v1508
      %v1630 = vpack.c.b16 %v1568, %v1566
      %v1631 = vpack.c.b16 %v1569, %v1567
      %v1632 = vpack.c.b16 %v1572, %v1570
      %v1633 = vpack.c.b16 %v1573, %v1571
      %v1634 = vpack.c.b16 %v1576, %v1574
      %v1635 = vpack.c.b16 %v1577, %v1575
      %v1636 = vpack.c.b16 %v1580, %v1578
      %v1637 = vpack.c.b16 %v1581, %v1579
      %v1638 = vpack.c.b16 %v1584, %v1582
      %v1639 = vpack.c.b16 %v1585, %v1583
      %v1640 = vpack.c.b16 %v1588, %v1586
      %v1641 = vpack.c.b16 %v1589, %v1587
      %v1642 = vpack.c.b16 %v1592, %v1590
      %v1643 = vpack.c.b16 %v1593, %v1591
      %v1644 = vpack.c.b16 %v1596, %v1594
      %v1645 = vpack.c.b16 %v1597, %v1595
      %v1646 = vpack.c.b16 %v1600, %v1598
      %v1647 = vpack.c.b16 %v1601, %v1599
      %v1648 = vpack.c.b16 %v1604, %v1602
      %v1649 = vpack.c.b16 %v1605, %v1603
      %v1650 = vpack.c.b16 %v1608, %v1606
      %v1651 = vpack.c.b16 %v1609, %v1607
      %v1652 = vpack.c.b16 %v1612, %v1610
      %v1653 = vpack.c.b16 %v1613, %v1611
      %v1654 = vpack.c.b16 %v1616, %v1614
      %v1655 = vpack.c.b16 %v1617, %v1615
      %v1656 = vpack.c.b16 %v1620, %v1618
      %v1657 = vpack.c.b16 %v1621, %v1619
      %v1658 = vpack.c.b16 %v1624, %v1622
      %v1659 = vpack.c.b16 %v1625, %v1623
      %v1660 = vpack.c.b16 %v1628, %v1626
      %v1661 = vpack.c.b16 %v1629, %v1627
      %v1702 = vunpack.c.l.b16 %v1510
      %v1703 = vunpack.c.l.b16 %v1511
      %v1704 = vunpack.c.l.b16 %v1512
      %v1705 = vunpack.c.l.b16 %v1513
      %v1706 = vunpack.c.l.b16 %v1514
      %v1707 = vunpack.c.l.b16 %v1515
      %v1708 = vunpack.c.l.b16 %v1516
      %v1709 = vunpack.c.l.b16 %v1517
      %v1710 = vunpack.c.l.b16 %v1518
      %v1711 = vunpack.c.l.b16 %v1519
      %v1712 = vunpack.c.l.b16 %v1520
      %v1713 = vunpack.c.l.b16 %v1521
      %v1714 = vunpack.c.l.b16 %v1522
      %v1715 = vunpack.c.l.b16 %v1523
      %v1716 = vunpack.c.l.b16 %v1524
      %v1717 = vunpack.c.l.b16 %v1525
      %v1718 = vunpack.c.l.b16 %v1526
      %v1719 = vunpack.c.l.b16 %v1527
      %v1720 = vunpack.c.l.b16 %v1528
      %v1721 = vunpack.c.l.b16 %v1529
      %v1722 = vunpack.c.l.b16 %v1530
      %v1723 = vunpack.c.l.b16 %v1531
      %v1724 = vunpack.c.l.b16 %v1532
      %v1725 = vunpack.c.l.b16 %v1533
      %v1726 = vpack.c.b16 %v1703, %v1702
      %v1727 = vpack.c.b16 %v1705, %v1704
      %v1728 = vpack.c.b16 %v1707, %v1706
      %v1729 = vpack.c.b16 %v1709, %v1708
      %v1730 = vpack.c.b16 %v1711, %v1710
      %v1731 = vpack.c.b16 %v1713, %v1712
      %v1732 = vpack.c.b16 %v1715, %v1714
      %v1733 = vpack.c.b16 %v1717, %v1716
      %v1734 = vpack.c.b16 %v1719, %v1718
      %v1735 = vpack.c.b16 %v1721, %v1720
      %v1736 = vpack.c.b16 %v1723, %v1722
      %v1737 = vpack.c.b16 %v1725, %v1724
      %v1751 = vsel %vm245, %v1631, 0
      %v1754 = vsel %vm245, %v1633, 0
      %v1757 = vsel %vm245, %v1635, 0
      %v1760 = vsel %vm245, %v1637, 0
      %v1763 = vsel %vm245, %v1639, 0
      %v1766 = vsel %vm245, %v1641, 0
      %v1769 = vsel %vm245, %v1643, 0
      %v1772 = vsel %vm245, %v1645, 0
      %v1775 = vsel %vm245, %v1647, 0
      %v1778 = vsel %vm245, %v1649, 0
      %v1781 = vsel %vm245, %v1651, 0
      %v1784 = vsel %vm245, %v1653, 0
      %v1787 = vsel %vm245, %v1655, 0
      %v1790 = vsel %vm245, %v1657, 0
      %v1793 = vsel %vm245, %v1659, 0
      %v1796 = vsel %vm245, %v1661, 0
      %1798 = vmatprep.subr.bf16.mxu0 0
      %1799 = vmatpush1.bf16.msra.mxu0 %v1733
      %1800 = vmatprep.subr.bf16.mxu0 0
      %1801 = vmatpush1.bf16.msra.mxu0 %v1732
      %1802 = vmatprep.subr.bf16.mxu0 0
      %1803 = vmatpush1.bf16.msra.mxu0 %v1731
      %1804 = vmatprep.subr.bf16.mxu0 0
      %1805 = vmatpush1.bf16.msra.mxu0 %v1730
      %1806 = vmatprep.subr.bf16.mxu0 0
      %1807 = vmatpush1.bf16.msra.mxu0 %v1729
      %1808 = vmatprep.subr.bf16.mxu0 0
      %1809 = vmatpush1.bf16.msra.mxu0 %v1728
      %1810 = vmatprep.subr.bf16.mxu0 0
      %1811 = vmatpush1.bf16.msra.mxu0 %v1727
      %1812 = vmatprep.subr.bf16.mxu0 0
      %1813 = vmatpush1.bf16.msra.mxu0 %v1726
      %1814 = vmatprep.subr.bf16.mxu0 0
      %1815 = vmatpush2.bf16.msra.mxu0 0
      %1816 = vmatprep.subr.bf16.mxu0 0
      %1817 = vmatpush2.bf16.msra.mxu0 0
      %1818 = vmatprep.subr.bf16.mxu0 0
      %1819 = vmatpush2.bf16.msra.mxu0 0
      %1820 = vmatprep.subr.bf16.mxu0 0
      %1821 = vmatpush2.bf16.msra.mxu0 0
      %1822 = vmatprep.subr.bf16.mxu0 0
      %1823 = vmatpush2.bf16.msra.mxu0 %v1737
      %1824 = vmatprep.subr.bf16.mxu0 0
      %1825 = vmatpush2.bf16.msra.mxu0 %v1736
      %1826 = vmatprep.subr.bf16.mxu0 0
      %1827 = vmatpush2.bf16.msra.mxu0 %v1735
      %1828 = vmatprep.subr.bf16.mxu0 0
      %1829 = vmatpush2.bf16.msra.mxu0 %v1734
      %1830 = vmatprep.mubr.bf16.mxu0 %v1751
      %1831 = vmatmul.mubr.bf16.gmra.mxu0 %v1630
      %v1832 = vpop.f32.mrf.mxu0
      %v1833 = vadd.f32 0.0, %v1832
      %v1834 = vpop.f32.mrf.mxu0
      %v1835 = vpop.f32.mrf.mxu0
      %v1836 = vadd.f32 0.0, %v1835
      %v1837 = vpop.f32.mrf.mxu0
      %1838 = vmatprep.mubr.bf16.mxu0 %v1754
      %1839 = vmatmul.mubr.bf16.gmra.mxu0 %v1632
      %v1840 = vpop.f32.mrf.mxu0
      %v1841 = vadd.f32 0.0, %v1840
      %v1842 = vpop.f32.mrf.mxu0
      %v1843 = vpop.f32.mrf.mxu0
      %v1844 = vadd.f32 0.0, %v1843
      %v1845 = vpop.f32.mrf.mxu0
      %1846 = vmatprep.mubr.bf16.mxu0 %v1757
      %1847 = vmatmul.mubr.bf16.gmra.mxu0 %v1634
      %v1848 = vpop.f32.mrf.mxu0
      %v1849 = vadd.f32 0.0, %v1848
      %v1850 = vpop.f32.mrf.mxu0
      %v1851 = vpop.f32.mrf.mxu0
      %v1852 = vadd.f32 0.0, %v1851
      %v1853 = vpop.f32.mrf.mxu0
      %1854 = vmatprep.mubr.bf16.mxu0 %v1760
      %1855 = vmatmul.mubr.bf16.gmra.mxu0 %v1636
      %v1856 = vpop.f32.mrf.mxu0
      %v1857 = vadd.f32 0.0, %v1856
      %v1858 = vpop.f32.mrf.mxu0
      %v1859 = vpop.f32.mrf.mxu0
      %v1860 = vadd.f32 0.0, %v1859
      %v1861 = vpop.f32.mrf.mxu0
      %1862 = vmatprep.mubr.bf16.mxu0 %v1763
      %1863 = vmatmul.mubr.bf16.gmra.mxu0 %v1638
      %v1864 = vpop.f32.mrf.mxu0
      %v1865 = vadd.f32 0.0, %v1864
      %v1866 = vpop.f32.mrf.mxu0
      %v1867 = vpop.f32.mrf.mxu0
      %v1868 = vadd.f32 0.0, %v1867
      %v1869 = vpop.f32.mrf.mxu0
      %1870 = vmatprep.mubr.bf16.mxu0 %v1766
      %1871 = vmatmul.mubr.bf16.gmra.mxu0 %v1640
      %v1872 = vpop.f32.mrf.mxu0
      %v1873 = vadd.f32 0.0, %v1872
      %v1874 = vpop.f32.mrf.mxu0
      %v1875 = vpop.f32.mrf.mxu0
      %v1876 = vadd.f32 0.0, %v1875
      %v1877 = vpop.f32.mrf.mxu0
      %1878 = vmatprep.mubr.bf16.mxu0 %v1769
      %1879 = vmatmul.mubr.bf16.gmra.mxu0 %v1642
      %v1880 = vpop.f32.mrf.mxu0
      %v1881 = vadd.f32 0.0, %v1880
      %v1882 = vpop.f32.mrf.mxu0
      %v1883 = vpop.f32.mrf.mxu0
      %v1884 = vadd.f32 0.0, %v1883
      %v1885 = vpop.f32.mrf.mxu0
      %1886 = vmatprep.mubr.bf16.mxu0 %v1772
      %1887 = vmatmul.mubr.bf16.gmra.mxu0 %v1644
      %v1888 = vpop.f32.mrf.mxu0
      %v1889 = vadd.f32 0.0, %v1888
      %v1890 = vpop.f32.mrf.mxu0
      %v1891 = vpop.f32.mrf.mxu0
      %v1892 = vadd.f32 0.0, %v1891
      %v1893 = vpop.f32.mrf.mxu0
      %1894 = vmatprep.mubr.bf16.mxu0 %v1775
      %1895 = vmatmul.mubr.bf16.gmra.mxu0 %v1646
      %v1896 = vpop.f32.mrf.mxu0
      %v1897 = vadd.f32 0.0, %v1896
      %v1898 = vpop.f32.mrf.mxu0
      %v1899 = vpop.f32.mrf.mxu0
      %v1900 = vadd.f32 0.0, %v1899
      %v1901 = vpop.f32.mrf.mxu0
      %1902 = vmatprep.mubr.bf16.mxu0 %v1778
      %1903 = vmatmul.mubr.bf16.gmra.mxu0 %v1648
      %v1904 = vpop.f32.mrf.mxu0
      %v1905 = vadd.f32 0.0, %v1904
      %v1906 = vpop.f32.mrf.mxu0
      %v1907 = vpop.f32.mrf.mxu0
      %v1908 = vadd.f32 0.0, %v1907
      %v1909 = vpop.f32.mrf.mxu0
      %1910 = vmatprep.mubr.bf16.mxu0 %v1781
      %1911 = vmatmul.mubr.bf16.gmra.mxu0 %v1650
      %v1912 = vpop.f32.mrf.mxu0
      %v1913 = vadd.f32 0.0, %v1912
      %v1914 = vpop.f32.mrf.mxu0
      %v1915 = vpop.f32.mrf.mxu0
      %v1916 = vadd.f32 0.0, %v1915
      %v1917 = vpop.f32.mrf.mxu0
      %1918 = vmatprep.mubr.bf16.mxu0 %v1784
      %1919 = vmatmul.mubr.bf16.gmra.mxu0 %v1652
      %v1920 = vpop.f32.mrf.mxu0
      %v1921 = vadd.f32 0.0, %v1920
      %v1922 = vpop.f32.mrf.mxu0
      %v1923 = vpop.f32.mrf.mxu0
      %v1924 = vadd.f32 0.0, %v1923
      %v1925 = vpop.f32.mrf.mxu0
      %1926 = vmatprep.mubr.bf16.mxu0 %v1787
      %1927 = vmatmul.mubr.bf16.gmra.mxu0 %v1654
      %v1928 = vpop.f32.mrf.mxu0
      %v1929 = vadd.f32 0.0, %v1928
      %v1930 = vpop.f32.mrf.mxu0
      %v1931 = vpop.f32.mrf.mxu0
      %v1932 = vadd.f32 0.0, %v1931
      %v1933 = vpop.f32.mrf.mxu0
      %1934 = vmatprep.mubr.bf16.mxu0 %v1790
      %1935 = vmatmul.mubr.bf16.gmra.mxu0 %v1656
      %v1936 = vpop.f32.mrf.mxu0
      %v1937 = vadd.f32 0.0, %v1936
      %v1938 = vpop.f32.mrf.mxu0
      %v1939 = vpop.f32.mrf.mxu0
      %v1940 = vadd.f32 0.0, %v1939
      %v1941 = vpop.f32.mrf.mxu0
      %1942 = vmatprep.mubr.bf16.mxu0 %v1793
      %1943 = vmatmul.mubr.bf16.gmra.mxu0 %v1658
      %v1944 = vpop.f32.mrf.mxu0
      %v1945 = vadd.f32 0.0, %v1944
      %v1946 = vpop.f32.mrf.mxu0
      %v1947 = vpop.f32.mrf.mxu0
      %v1948 = vadd.f32 0.0, %v1947
      %v1949 = vpop.f32.mrf.mxu0
      %1950 = vmatprep.mubr.bf16.mxu0 %v1796
      %1951 = vmatmul.mubr.bf16.gmra.mxu0 %v1660
      %v1952 = vpop.f32.mrf.mxu0
      %v1953 = vadd.f32 0.0, %v1952
      %v1954 = vpop.f32.mrf.mxu0
      %v1955 = vpop.f32.mrf.mxu0
      %v1956 = vadd.f32 0.0, %v1955
      %v1957 = vpop.f32.mrf.mxu0
      %1958 = vdwg.mxu0
      %v1961 = vunpack.c.l.b16 %v1451
      %v1962 = vunpack.c.h.b16 %v1451
      %v1963 = vunpack.c.l.b16 %v1452
      %v1964 = vunpack.c.h.b16 %v1452
      %v1965 = vpack.c.b16 %v1963, %v1961
      %v1966 = vpack.c.b16 %v1964, %v1962
      %v1992 = vunpack.c.l.b16 %v1483
      %v1993 = vunpack.c.l.b16 %v1484
      %v1994 = vunpack.c.l.b16 %v1485
      %v1995 = vunpack.c.l.b16 %v1486
      %v1996 = vunpack.c.l.b16 %v1487
      %v1997 = vunpack.c.l.b16 %v1488
      %v1998 = vunpack.c.l.b16 %v1489
      %v1999 = vunpack.c.l.b16 %v1490
      %v2000 = vunpack.c.l.b16 %v1491
      %v2001 = vunpack.c.l.b16 %v1492
      %v2002 = vunpack.c.l.b16 %v1493
      %v2003 = vunpack.c.l.b16 %v1494
      %v2004 = vunpack.c.l.b16 %v1495
      %v2005 = vunpack.c.l.b16 %v1496
      %v2006 = vunpack.c.l.b16 %v1497
      %v2007 = vunpack.c.l.b16 %v1498
      %v2008 = vunpack.c.l.b16 %v1499
      %v2009 = vunpack.c.l.b16 %v1500
      %v2010 = vunpack.c.l.b16 %v1501
      %v2011 = vunpack.c.l.b16 %v1502
      %v2012 = vunpack.c.l.b16 %v1503
      %v2013 = vunpack.c.l.b16 %v1504
      %v2014 = vunpack.c.l.b16 %v1505
      %v2015 = vunpack.c.l.b16 %v1506
      %v2016 = vpack.c.b16 %v1993, %v1992
      %v2017 = vpack.c.b16 %v1995, %v1994
      %v2018 = vpack.c.b16 %v1997, %v1996
      %v2019 = vpack.c.b16 %v1999, %v1998
      %v2020 = vpack.c.b16 %v2001, %v2000
      %v2021 = vpack.c.b16 %v2003, %v2002
      %v2022 = vpack.c.b16 %v2005, %v2004
      %v2023 = vpack.c.b16 %v2007, %v2006
      %v2024 = vpack.c.b16 %v2009, %v2008
      %v2025 = vpack.c.b16 %v2011, %v2010
      %v2026 = vpack.c.b16 %v2013, %v2012
      %v2027 = vpack.c.b16 %v2015, %v2014
      %v2041 = vsel %vm245, %v1966, 0
      %2043 = vmatprep.subr.bf16.mxu0 0
      %2044 = vmatpush1.bf16.msra.mxu0 %v2023
      %2045 = vmatprep.subr.bf16.mxu0 0
      %2046 = vmatpush1.bf16.msra.mxu0 %v2022
      %2047 = vmatprep.subr.bf16.mxu0 0
      %2048 = vmatpush1.bf16.msra.mxu0 %v2021
      %2049 = vmatprep.subr.bf16.mxu0 0
      %2050 = vmatpush1.bf16.msra.mxu0 %v2020
      %2051 = vmatprep.subr.bf16.mxu0 0
      %2052 = vmatpush1.bf16.msra.mxu0 %v2019
      %2053 = vmatprep.subr.bf16.mxu0 0
      %2054 = vmatpush1.bf16.msra.mxu0 %v2018
      %2055 = vmatprep.subr.bf16.mxu0 0
      %2056 = vmatpush1.bf16.msra.mxu0 %v2017
      %2057 = vmatprep.subr.bf16.mxu0 0
      %2058 = vmatpush1.bf16.msra.mxu0 %v2016
      %2059 = vmatprep.subr.bf16.mxu0 0
      %2060 = vmatpush2.bf16.msra.mxu0 0
      %2061 = vmatprep.subr.bf16.mxu0 0
      %2062 = vmatpush2.bf16.msra.mxu0 0
      %2063 = vmatprep.subr.bf16.mxu0 0
      %2064 = vmatpush2.bf16.msra.mxu0 0
      %2065 = vmatprep.subr.bf16.mxu0 0
      %2066 = vmatpush2.bf16.msra.mxu0 0
      %2067 = vmatprep.subr.bf16.mxu0 0
      %2068 = vmatpush2.bf16.msra.mxu0 %v2027
      %2069 = vmatprep.subr.bf16.mxu0 0
      %2070 = vmatpush2.bf16.msra.mxu0 %v2026
      %2071 = vmatprep.subr.bf16.mxu0 0
      %2072 = vmatpush2.bf16.msra.mxu0 %v2025
      %2073 = vmatprep.subr.bf16.mxu0 0
      %2074 = vmatpush2.bf16.msra.mxu0 %v2024
      %2075 = vmatprep.mubr.bf16.mxu0 %v2041
      %2076 = vmatmul.mubr.bf16.gmra.mxu0 %v1965
      %v2077 = vpop.f32.mrf.mxu0
      %v2078 = vadd.f32 %v1833, %v2077
      %v2079 = vpop.f32.mrf.mxu0
      %v2080 = vpop.f32.mrf.mxu0
      %v2081 = vadd.f32 %v1836, %v2080
      %v2082 = vpop.f32.mrf.mxu0
      %2083 = vmatprep.mubr.bf16.mxu0 %v1751
      %2084 = vmatmul.mubr.bf16.gmra.mxu0 %v1630
      %v2085 = vpop.f32.mrf.mxu0
      %v2086 = vadd.f32 %v1841, %v2085
      %v2087 = vpop.f32.mrf.mxu0
      %v2088 = vpop.f32.mrf.mxu0
      %v2089 = vadd.f32 %v1844, %v2088
      %v2090 = vpop.f32.mrf.mxu0
      %2091 = vmatprep.mubr.bf16.mxu0 %v1754
      %2092 = vmatmul.mubr.bf16.gmra.mxu0 %v1632
      %v2093 = vpop.f32.mrf.mxu0
      %v2094 = vadd.f32 %v1849, %v2093
      %v2095 = vpop.f32.mrf.mxu0
      %v2096 = vpop.f32.mrf.mxu0
      %v2097 = vadd.f32 %v1852, %v2096
      %v2098 = vpop.f32.mrf.mxu0
      %2099 = vmatprep.mubr.bf16.mxu0 %v1757
      %2100 = vmatmul.mubr.bf16.gmra.mxu0 %v1634
      %v2101 = vpop.f32.mrf.mxu0
      %v2102 = vadd.f32 %v1857, %v2101
      %v2103 = vpop.f32.mrf.mxu0
      %v2104 = vpop.f32.mrf.mxu0
      %v2105 = vadd.f32 %v1860, %v2104
      %v2106 = vpop.f32.mrf.mxu0
      %2107 = vmatprep.mubr.bf16.mxu0 %v1760
      %2108 = vmatmul.mubr.bf16.gmra.mxu0 %v1636
      %v2109 = vpop.f32.mrf.mxu0
      %v2110 = vadd.f32 %v1865, %v2109
      %v2111 = vpop.f32.mrf.mxu0
      %v2112 = vpop.f32.mrf.mxu0
      %v2113 = vadd.f32 %v1868, %v2112
      %v2114 = vpop.f32.mrf.mxu0
      %2115 = vmatprep.mubr.bf16.mxu0 %v1763
      %2116 = vmatmul.mubr.bf16.gmra.mxu0 %v1638
      %v2117 = vpop.f32.mrf.mxu0
      %v2118 = vadd.f32 %v1873, %v2117
      %v2119 = vpop.f32.mrf.mxu0
      %v2120 = vpop.f32.mrf.mxu0
      %v2121 = vadd.f32 %v1876, %v2120
      %v2122 = vpop.f32.mrf.mxu0
      %2123 = vmatprep.mubr.bf16.mxu0 %v1766
      %2124 = vmatmul.mubr.bf16.gmra.mxu0 %v1640
      %v2125 = vpop.f32.mrf.mxu0
      %v2126 = vadd.f32 %v1881, %v2125
      %v2127 = vpop.f32.mrf.mxu0
      %v2128 = vpop.f32.mrf.mxu0
      %v2129 = vadd.f32 %v1884, %v2128
      %v2130 = vpop.f32.mrf.mxu0
      %2131 = vmatprep.mubr.bf16.mxu0 %v1769
      %2132 = vmatmul.mubr.bf16.gmra.mxu0 %v1642
      %v2133 = vpop.f32.mrf.mxu0
      %v2134 = vadd.f32 %v1889, %v2133
      %v2135 = vpop.f32.mrf.mxu0
      %v2136 = vpop.f32.mrf.mxu0
      %v2137 = vadd.f32 %v1892, %v2136
      %v2138 = vpop.f32.mrf.mxu0
      %2139 = vmatprep.mubr.bf16.mxu0 %v1772
      %2140 = vmatmul.mubr.bf16.gmra.mxu0 %v1644
      %v2141 = vpop.f32.mrf.mxu0
      %v2142 = vadd.f32 %v1897, %v2141
      %v2143 = vpop.f32.mrf.mxu0
      %v2144 = vpop.f32.mrf.mxu0
      %v2145 = vadd.f32 %v1900, %v2144
      %v2146 = vpop.f32.mrf.mxu0
      %2147 = vmatprep.mubr.bf16.mxu0 %v1775
      %2148 = vmatmul.mubr.bf16.gmra.mxu0 %v1646
      %v2149 = vpop.f32.mrf.mxu0
      %v2150 = vadd.f32 %v1905, %v2149
      %v2151 = vpop.f32.mrf.mxu0
      %v2152 = vpop.f32.mrf.mxu0
      %v2153 = vadd.f32 %v1908, %v2152
      %v2154 = vpop.f32.mrf.mxu0
      %2155 = vmatprep.mubr.bf16.mxu0 %v1778
      %2156 = vmatmul.mubr.bf16.gmra.mxu0 %v1648
      %v2157 = vpop.f32.mrf.mxu0
      %v2158 = vadd.f32 %v1913, %v2157
      %v2159 = vpop.f32.mrf.mxu0
      %v2160 = vpop.f32.mrf.mxu0
      %v2161 = vadd.f32 %v1916, %v2160
      %v2162 = vpop.f32.mrf.mxu0
      %2163 = vmatprep.mubr.bf16.mxu0 %v1781
      %2164 = vmatmul.mubr.bf16.gmra.mxu0 %v1650
      %v2165 = vpop.f32.mrf.mxu0
      %v2166 = vadd.f32 %v1921, %v2165
      %v2167 = vpop.f32.mrf.mxu0
      %v2168 = vpop.f32.mrf.mxu0
      %v2169 = vadd.f32 %v1924, %v2168
      %v2170 = vpop.f32.mrf.mxu0
      %2171 = vmatprep.mubr.bf16.mxu0 %v1784
      %2172 = vmatmul.mubr.bf16.gmra.mxu0 %v1652
      %v2173 = vpop.f32.mrf.mxu0
      %v2174 = vadd.f32 %v1929, %v2173
      %v2175 = vpop.f32.mrf.mxu0
      %v2176 = vpop.f32.mrf.mxu0
      %v2177 = vadd.f32 %v1932, %v2176
      %v2178 = vpop.f32.mrf.mxu0
      %2179 = vmatprep.mubr.bf16.mxu0 %v1787
      %2180 = vmatmul.mubr.bf16.gmra.mxu0 %v1654
      %v2181 = vpop.f32.mrf.mxu0
      %v2182 = vadd.f32 %v1937, %v2181
      %v2183 = vpop.f32.mrf.mxu0
      %v2184 = vpop.f32.mrf.mxu0
      %v2185 = vadd.f32 %v1940, %v2184
      %v2186 = vpop.f32.mrf.mxu0
      %2187 = vmatprep.mubr.bf16.mxu0 %v1790
      %2188 = vmatmul.mubr.bf16.gmra.mxu0 %v1656
      %v2189 = vpop.f32.mrf.mxu0
      %v2190 = vadd.f32 %v1945, %v2189
      %v2191 = vpop.f32.mrf.mxu0
      %v2192 = vpop.f32.mrf.mxu0
      %v2193 = vadd.f32 %v1948, %v2192
      %v2194 = vpop.f32.mrf.mxu0
      %2195 = vmatprep.mubr.bf16.mxu0 %v1793
      %2196 = vmatmul.mubr.bf16.gmra.mxu0 %v1658
      %v2197 = vpop.f32.mrf.mxu0
      %v2198 = vadd.f32 %v1953, %v2197
      %v2199 = vpop.f32.mrf.mxu0
      %v2200 = vpop.f32.mrf.mxu0
      %v2201 = vadd.f32 %v1956, %v2200
      %v2202 = vpop.f32.mrf.mxu0
      %2203 = vdwg.mxu0
      %v2204 = vld [vmem:[#allocation2 + $0x20] sm:$0xff]
      %v2205 = vld [vmem:[#allocation2 + $0x28] sm:$0xff]
      %v2206 = vld [vmem:[#allocation2 + $0x30] sm:$0xff]
      %v2207 = vld [vmem:[#allocation2 + $0x38] sm:$0xff]
      %v2208 = vld [vmem:[#allocation2 + $0x40] sm:$0xff]
      %v2209 = vld [vmem:[#allocation2 + $0x48] sm:$0xff]
      %v2210 = vld [vmem:[#allocation2 + $0x50] sm:$0xff]
      %v2211 = vld [vmem:[#allocation2 + $0x58] sm:$0xff]
      %v2212 = vld [vmem:[#allocation2 + $0x60] sm:$0xff]
      %v2213 = vld [vmem:[#allocation2 + $0x68] sm:$0xff]
      %v2214 = vld [vmem:[#allocation2 + $0x70] sm:$0xff]
      %v2215 = vld [vmem:[#allocation2 + $0x78] sm:$0xff]
      %v2216 = vld [vmem:[#allocation2 + $0x80] sm:$0xff]
      %v2217 = vld [vmem:[#allocation2 + $0x88] sm:$0xff]
      %v2218 = vld [vmem:[#allocation2 + $0x90] sm:$0xff]
      %v2219 = vld [vmem:[#allocation2 + $0x98] sm:$0xff]
      %v2220 = vld [vmem:[#allocation2 + $0xa0] sm:$0xff]
      %v2221 = vld [vmem:[#allocation2 + $0xa8] sm:$0xff]
      %v2222 = vld [vmem:[#allocation2 + $0xb0] sm:$0xff]
      %v2223 = vld [vmem:[#allocation2 + $0xb8] sm:$0xff]
      %v2224 = vld [vmem:[#allocation2 + $0xc0] sm:$0xff]
      %v2225 = vld [vmem:[#allocation2 + $0xc8] sm:$0xff]
      %v2226 = vld [vmem:[#allocation2 + $0xd0] sm:$0xff]
      %v2227 = vld [vmem:[#allocation2 + $0xd8] sm:$0xff]
      %v2228 = vld [vmem:[#allocation2 + $0xe0] sm:$0xff]
      %v2229 = vld [vmem:[#allocation2 + $0xe8] sm:$0xff]
      %v2230 = vld [vmem:[#allocation2 + $0xf0] sm:$0xff]
      %v2231 = vld [vmem:[#allocation2 + $0xf8] sm:$0xff]
      %v2232 = vld [vmem:[#allocation2 + $0x100] sm:$0xff]
      %v2233 = vld [vmem:[#allocation2 + $0x108] sm:$0xff]
      %v2234 = vld [vmem:[#allocation2 + $0x110] sm:$0xff]
      %v2235 = vld [vmem:[#allocation2 + $0x118] sm:$0xff]
      %s2236 = scalar_lea.vmem %s1, 192
      %v2237 = vld [vmem:[%s2236] sm:$0xf]
      %v2238 = vld [vmem:[%s2236 + $0x4] sm:$0xf]
      %v2239 = vld [vmem:[%s2236 + $0x8] sm:$0xf]
      %v2240 = vld [vmem:[%s2236 + $0xc] sm:$0xf]
      %v2241 = vld [vmem:[%s2236 + $0x10] sm:$0xf]
      %v2242 = vld [vmem:[%s2236 + $0x14] sm:$0xf]
      %v2243 = vld [vmem:[%s2236 + $0x18] sm:$0xf]
      %v2244 = vld [vmem:[%s2236 + $0x1c] sm:$0xf]
      %v2245 = vld [vmem:[%s2236 + $0x20] sm:$0xf]
      %v2246 = vld [vmem:[%s2236 + $0x24] sm:$0xf]
      %v2247 = vld [vmem:[%s2236 + $0x28] sm:$0xf]
      %v2248 = vld [vmem:[%s2236 + $0x2c] sm:$0xf]
      %v2249 = vld [vmem:[%s2236 + $0x30] sm:$0xf]
      %v2250 = vld [vmem:[%s2236 + $0x34] sm:$0xf]
      %v2251 = vld [vmem:[%s2236 + $0x38] sm:$0xf]
      %v2252 = vld [vmem:[%s2236 + $0x3c] sm:$0xf]
      %v2253 = vld [vmem:[%s2236 + $0x40] sm:$0xf]
      %v2254 = vld [vmem:[%s2236 + $0x44] sm:$0xf]
      %v2255 = vld [vmem:[%s2236 + $0x48] sm:$0xf]
      %v2256 = vld [vmem:[%s2236 + $0x4c] sm:$0xf]
      %v2257 = vld [vmem:[%s2236 + $0x50] sm:$0xf]
      %v2258 = vld [vmem:[%s2236 + $0x54] sm:$0xf]
      %v2259 = vld [vmem:[%s2236 + $0x58] sm:$0xf]
      %v2260 = vld [vmem:[%s2236 + $0x5c] sm:$0xf]
      %v2293 = vunpack.c.l.b16 %v2204
      %v2294 = vunpack.c.h.b16 %v2204
      %v2295 = vunpack.c.l.b16 %v2205
      %v2296 = vunpack.c.h.b16 %v2205
      %v2297 = vunpack.c.l.b16 %v2206
      %v2298 = vunpack.c.h.b16 %v2206
      %v2299 = vunpack.c.l.b16 %v2207
      %v2300 = vunpack.c.h.b16 %v2207
      %v2301 = vunpack.c.l.b16 %v2208
      %v2302 = vunpack.c.h.b16 %v2208
      %v2303 = vunpack.c.l.b16 %v2209
      %v2304 = vunpack.c.h.b16 %v2209
      %v2305 = vunpack.c.l.b16 %v2210
      %v2306 = vunpack.c.h.b16 %v2210
      %v2307 = vunpack.c.l.b16 %v2211
      %v2308 = vunpack.c.h.b16 %v2211
      %v2309 = vunpack.c.l.b16 %v2212
      %v2310 = vunpack.c.h.b16 %v2212
      %v2311 = vunpack.c.l.b16 %v2213
      %v2312 = vunpack.c.h.b16 %v2213
      %v2313 = vunpack.c.l.b16 %v2214
      %v2314 = vunpack.c.h.b16 %v2214
      %v2315 = vunpack.c.l.b16 %v2215
      %v2316 = vunpack.c.h.b16 %v2215
      %v2317 = vunpack.c.l.b16 %v2216
      %v2318 = vunpack.c.h.b16 %v2216
      %v2319 = vunpack.c.l.b16 %v2217
      %v2320 = vunpack.c.h.b16 %v2217
      %v2321 = vunpack.c.l.b16 %v2218
      %v2322 = vunpack.c.h.b16 %v2218
      %v2323 = vunpack.c.l.b16 %v2219
      %v2324 = vunpack.c.h.b16 %v2219
      %v2325 = vunpack.c.l.b16 %v2220
      %v2326 = vunpack.c.h.b16 %v2220
      %v2327 = vunpack.c.l.b16 %v2221
      %v2328 = vunpack.c.h.b16 %v2221
      %v2329 = vunpack.c.l.b16 %v2222
      %v2330 = vunpack.c.h.b16 %v2222
      %v2331 = vunpack.c.l.b16 %v2223
      %v2332 = vunpack.c.h.b16 %v2223
      %v2333 = vunpack.c.l.b16 %v2224
      %v2334 = vunpack.c.h.b16 %v2224
      %v2335 = vunpack.c.l.b16 %v2225
      %v2336 = vunpack.c.h.b16 %v2225
      %v2337 = vunpack.c.l.b16 %v2226
      %v2338 = vunpack.c.h.b16 %v2226
      %v2339 = vunpack.c.l.b16 %v2227
      %v2340 = vunpack.c.h.b16 %v2227
      %v2341 = vunpack.c.l.b16 %v2228
      %v2342 = vunpack.c.h.b16 %v2228
      %v2343 = vunpack.c.l.b16 %v2229
      %v2344 = vunpack.c.h.b16 %v2229
      %v2345 = vunpack.c.l.b16 %v2230
      %v2346 = vunpack.c.h.b16 %v2230
      %v2347 = vunpack.c.l.b16 %v2231
      %v2348 = vunpack.c.h.b16 %v2231
      %v2349 = vunpack.c.l.b16 %v2232
      %v2350 = vunpack.c.h.b16 %v2232
      %v2351 = vunpack.c.l.b16 %v2233
      %v2352 = vunpack.c.h.b16 %v2233
      %v2353 = vunpack.c.l.b16 %v2234
      %v2354 = vunpack.c.h.b16 %v2234
      %v2355 = vunpack.c.l.b16 %v2235
      %v2356 = vunpack.c.h.b16 %v2235
      %v2357 = vpack.c.b16 %v2295, %v2293
      %v2358 = vpack.c.b16 %v2296, %v2294
      %v2359 = vpack.c.b16 %v2299, %v2297
      %v2360 = vpack.c.b16 %v2300, %v2298
      %v2361 = vpack.c.b16 %v2303, %v2301
      %v2362 = vpack.c.b16 %v2304, %v2302
      %v2363 = vpack.c.b16 %v2307, %v2305
      %v2364 = vpack.c.b16 %v2308, %v2306
      %v2365 = vpack.c.b16 %v2311, %v2309
      %v2366 = vpack.c.b16 %v2312, %v2310
      %v2367 = vpack.c.b16 %v2315, %v2313
      %v2368 = vpack.c.b16 %v2316, %v2314
      %v2369 = vpack.c.b16 %v2319, %v2317
      %v2370 = vpack.c.b16 %v2320, %v2318
      %v2371 = vpack.c.b16 %v2323, %v2321
      %v2372 = vpack.c.b16 %v2324, %v2322
      %v2373 = vpack.c.b16 %v2327, %v2325
      %v2374 = vpack.c.b16 %v2328, %v2326
      %v2375 = vpack.c.b16 %v2331, %v2329
      %v2376 = vpack.c.b16 %v2332, %v2330
      %v2377 = vpack.c.b16 %v2335, %v2333
      %v2378 = vpack.c.b16 %v2336, %v2334
      %v2379 = vpack.c.b16 %v2339, %v2337
      %v2380 = vpack.c.b16 %v2340, %v2338
      %v2381 = vpack.c.b16 %v2343, %v2341
      %v2382 = vpack.c.b16 %v2344, %v2342
      %v2383 = vpack.c.b16 %v2347, %v2345
      %v2384 = vpack.c.b16 %v2348, %v2346
      %v2385 = vpack.c.b16 %v2351, %v2349
      %v2386 = vpack.c.b16 %v2352, %v2350
      %v2387 = vpack.c.b16 %v2355, %v2353
      %v2388 = vpack.c.b16 %v2356, %v2354
      %v2429 = vunpack.c.l.b16 %v2237
      %v2430 = vunpack.c.l.b16 %v2238
      %v2431 = vunpack.c.l.b16 %v2239
      %v2432 = vunpack.c.l.b16 %v2240
      %v2433 = vunpack.c.l.b16 %v2241
      %v2434 = vunpack.c.l.b16 %v2242
      %v2435 = vunpack.c.l.b16 %v2243
      %v2436 = vunpack.c.l.b16 %v2244
      %v2437 = vunpack.c.l.b16 %v2245
      %v2438 = vunpack.c.l.b16 %v2246
      %v2439 = vunpack.c.l.b16 %v2247
      %v2440 = vunpack.c.l.b16 %v2248
      %v2441 = vunpack.c.l.b16 %v2249
      %v2442 = vunpack.c.l.b16 %v2250
      %v2443 = vunpack.c.l.b16 %v2251
      %v2444 = vunpack.c.l.b16 %v2252
      %v2445 = vunpack.c.l.b16 %v2253
      %v2446 = vunpack.c.l.b16 %v2254
      %v2447 = vunpack.c.l.b16 %v2255
      %v2448 = vunpack.c.l.b16 %v2256
      %v2449 = vunpack.c.l.b16 %v2257
      %v2450 = vunpack.c.l.b16 %v2258
      %v2451 = vunpack.c.l.b16 %v2259
      %v2452 = vunpack.c.l.b16 %v2260
      %v2453 = vpack.c.b16 %v2430, %v2429
      %v2454 = vpack.c.b16 %v2432, %v2431
      %v2455 = vpack.c.b16 %v2434, %v2433
      %v2456 = vpack.c.b16 %v2436, %v2435
      %v2457 = vpack.c.b16 %v2438, %v2437
      %v2458 = vpack.c.b16 %v2440, %v2439
      %v2459 = vpack.c.b16 %v2442, %v2441
      %v2460 = vpack.c.b16 %v2444, %v2443
      %v2461 = vpack.c.b16 %v2446, %v2445
      %v2462 = vpack.c.b16 %v2448, %v2447
      %v2463 = vpack.c.b16 %v2450, %v2449
      %v2464 = vpack.c.b16 %v2452, %v2451
      %v2478 = vsel %vm245, %v2358, 0
      %v2481 = vsel %vm245, %v2360, 0
      %v2484 = vsel %vm245, %v2362, 0
      %v2487 = vsel %vm245, %v2364, 0
      %v2490 = vsel %vm245, %v2366, 0
      %v2493 = vsel %vm245, %v2368, 0
      %v2496 = vsel %vm245, %v2370, 0
      %v2499 = vsel %vm245, %v2372, 0
      %v2502 = vsel %vm245, %v2374, 0
      %v2505 = vsel %vm245, %v2376, 0
      %v2508 = vsel %vm245, %v2378, 0
      %v2511 = vsel %vm245, %v2380, 0
      %v2514 = vsel %vm245, %v2382, 0
      %v2517 = vsel %vm245, %v2384, 0
      %v2520 = vsel %vm245, %v2386, 0
      %v2523 = vsel %vm245, %v2388, 0
      %2525 = vmatprep.subr.bf16.mxu0 0
      %2526 = vmatpush1.bf16.msra.mxu0 %v2460
      %2527 = vmatprep.subr.bf16.mxu0 0
      %2528 = vmatpush1.bf16.msra.mxu0 %v2459
      %2529 = vmatprep.subr.bf16.mxu0 0
      %2530 = vmatpush1.bf16.msra.mxu0 %v2458
      %2531 = vmatprep.subr.bf16.mxu0 0
      %2532 = vmatpush1.bf16.msra.mxu0 %v2457
      %2533 = vmatprep.subr.bf16.mxu0 0
      %2534 = vmatpush1.bf16.msra.mxu0 %v2456
      %2535 = vmatprep.subr.bf16.mxu0 0
      %2536 = vmatpush1.bf16.msra.mxu0 %v2455
      %2537 = vmatprep.subr.bf16.mxu0 0
      %2538 = vmatpush1.bf16.msra.mxu0 %v2454
      %2539 = vmatprep.subr.bf16.mxu0 0
      %2540 = vmatpush1.bf16.msra.mxu0 %v2453
      %2541 = vmatprep.subr.bf16.mxu0 0
      %2542 = vmatpush2.bf16.msra.mxu0 0
      %2543 = vmatprep.subr.bf16.mxu0 0
      %2544 = vmatpush2.bf16.msra.mxu0 0
      %2545 = vmatprep.subr.bf16.mxu0 0
      %2546 = vmatpush2.bf16.msra.mxu0 0
      %2547 = vmatprep.subr.bf16.mxu0 0
      %2548 = vmatpush2.bf16.msra.mxu0 0
      %2549 = vmatprep.subr.bf16.mxu0 0
      %2550 = vmatpush2.bf16.msra.mxu0 %v2464
      %2551 = vmatprep.subr.bf16.mxu0 0
      %2552 = vmatpush2.bf16.msra.mxu0 %v2463
      %2553 = vmatprep.subr.bf16.mxu0 0
      %2554 = vmatpush2.bf16.msra.mxu0 %v2462
      %2555 = vmatprep.subr.bf16.mxu0 0
      %2556 = vmatpush2.bf16.msra.mxu0 %v2461
      %2557 = vmatprep.mubr.bf16.mxu0 %v2478
      %2558 = vmatmul.mubr.bf16.gmra.mxu0 %v2357
      %v2559 = vpop.f32.mrf.mxu0
      %v2560 = vadd.f32 0.0, %v2559
      %v2561 = vpop.f32.mrf.mxu0
      %v2562 = vpop.f32.mrf.mxu0
      %v2563 = vadd.f32 0.0, %v2562
      %v2564 = vpop.f32.mrf.mxu0
      %2565 = vmatprep.mubr.bf16.mxu0 %v2481
      %2566 = vmatmul.mubr.bf16.gmra.mxu0 %v2359
      %v2567 = vpop.f32.mrf.mxu0
      %v2568 = vadd.f32 0.0, %v2567
      %v2569 = vpop.f32.mrf.mxu0
      %v2570 = vpop.f32.mrf.mxu0
      %v2571 = vadd.f32 0.0, %v2570
      %v2572 = vpop.f32.mrf.mxu0
      %2573 = vmatprep.mubr.bf16.mxu0 %v2484
      %2574 = vmatmul.mubr.bf16.gmra.mxu0 %v2361
      %v2575 = vpop.f32.mrf.mxu0
      %v2576 = vadd.f32 0.0, %v2575
      %v2577 = vpop.f32.mrf.mxu0
      %v2578 = vpop.f32.mrf.mxu0
      %v2579 = vadd.f32 0.0, %v2578
      %v2580 = vpop.f32.mrf.mxu0
      %2581 = vmatprep.mubr.bf16.mxu0 %v2487
      %2582 = vmatmul.mubr.bf16.gmra.mxu0 %v2363
      %v2583 = vpop.f32.mrf.mxu0
      %v2584 = vadd.f32 0.0, %v2583
      %v2585 = vpop.f32.mrf.mxu0
      %v2586 = vpop.f32.mrf.mxu0
      %v2587 = vadd.f32 0.0, %v2586
      %v2588 = vpop.f32.mrf.mxu0
      %2589 = vmatprep.mubr.bf16.mxu0 %v2490
      %2590 = vmatmul.mubr.bf16.gmra.mxu0 %v2365
      %v2591 = vpop.f32.mrf.mxu0
      %v2592 = vadd.f32 0.0, %v2591
      %v2593 = vpop.f32.mrf.mxu0
      %v2594 = vpop.f32.mrf.mxu0
      %v2595 = vadd.f32 0.0, %v2594
      %v2596 = vpop.f32.mrf.mxu0
      %2597 = vmatprep.mubr.bf16.mxu0 %v2493
      %2598 = vmatmul.mubr.bf16.gmra.mxu0 %v2367
      %v2599 = vpop.f32.mrf.mxu0
      %v2600 = vadd.f32 0.0, %v2599
      %v2601 = vpop.f32.mrf.mxu0
      %v2602 = vpop.f32.mrf.mxu0
      %v2603 = vadd.f32 0.0, %v2602
      %v2604 = vpop.f32.mrf.mxu0
      %2605 = vmatprep.mubr.bf16.mxu0 %v2496
      %2606 = vmatmul.mubr.bf16.gmra.mxu0 %v2369
      %v2607 = vpop.f32.mrf.mxu0
      %v2608 = vadd.f32 0.0, %v2607
      %v2609 = vpop.f32.mrf.mxu0
      %v2610 = vpop.f32.mrf.mxu0
      %v2611 = vadd.f32 0.0, %v2610
      %v2612 = vpop.f32.mrf.mxu0
      %2613 = vmatprep.mubr.bf16.mxu0 %v2499
      %2614 = vmatmul.mubr.bf16.gmra.mxu0 %v2371
      %v2615 = vpop.f32.mrf.mxu0
      %v2616 = vadd.f32 0.0, %v2615
      %v2617 = vpop.f32.mrf.mxu0
      %v2618 = vpop.f32.mrf.mxu0
      %v2619 = vadd.f32 0.0, %v2618
      %v2620 = vpop.f32.mrf.mxu0
      %2621 = vmatprep.mubr.bf16.mxu0 %v2502
      %2622 = vmatmul.mubr.bf16.gmra.mxu0 %v2373
      %v2623 = vpop.f32.mrf.mxu0
      %v2624 = vadd.f32 0.0, %v2623
      %v2625 = vpop.f32.mrf.mxu0
      %v2626 = vpop.f32.mrf.mxu0
      %v2627 = vadd.f32 0.0, %v2626
      %v2628 = vpop.f32.mrf.mxu0
      %2629 = vmatprep.mubr.bf16.mxu0 %v2505
      %2630 = vmatmul.mubr.bf16.gmra.mxu0 %v2375
      %v2631 = vpop.f32.mrf.mxu0
      %v2632 = vadd.f32 0.0, %v2631
      %v2633 = vpop.f32.mrf.mxu0
      %v2634 = vpop.f32.mrf.mxu0
      %v2635 = vadd.f32 0.0, %v2634
      %v2636 = vpop.f32.mrf.mxu0
      %2637 = vmatprep.mubr.bf16.mxu0 %v2508
      %2638 = vmatmul.mubr.bf16.gmra.mxu0 %v2377
      %v2639 = vpop.f32.mrf.mxu0
      %v2640 = vadd.f32 0.0, %v2639
      %v2641 = vpop.f32.mrf.mxu0
      %v2642 = vpop.f32.mrf.mxu0
      %v2643 = vadd.f32 0.0, %v2642
      %v2644 = vpop.f32.mrf.mxu0
      %2645 = vmatprep.mubr.bf16.mxu0 %v2511
      %2646 = vmatmul.mubr.bf16.gmra.mxu0 %v2379
      %v2647 = vpop.f32.mrf.mxu0
      %v2648 = vadd.f32 0.0, %v2647
      %v2649 = vpop.f32.mrf.mxu0
      %v2650 = vpop.f32.mrf.mxu0
      %v2651 = vadd.f32 0.0, %v2650
      %v2652 = vpop.f32.mrf.mxu0
      %2653 = vmatprep.mubr.bf16.mxu0 %v2514
      %2654 = vmatmul.mubr.bf16.gmra.mxu0 %v2381
      %v2655 = vpop.f32.mrf.mxu0
      %v2656 = vadd.f32 0.0, %v2655
      %v2657 = vpop.f32.mrf.mxu0
      %v2658 = vpop.f32.mrf.mxu0
      %v2659 = vadd.f32 0.0, %v2658
      %v2660 = vpop.f32.mrf.mxu0
      %2661 = vmatprep.mubr.bf16.mxu0 %v2517
      %2662 = vmatmul.mubr.bf16.gmra.mxu0 %v2383
      %v2663 = vpop.f32.mrf.mxu0
      %v2664 = vadd.f32 0.0, %v2663
      %v2665 = vpop.f32.mrf.mxu0
      %v2666 = vpop.f32.mrf.mxu0
      %v2667 = vadd.f32 0.0, %v2666
      %v2668 = vpop.f32.mrf.mxu0
      %2669 = vmatprep.mubr.bf16.mxu0 %v2520
      %2670 = vmatmul.mubr.bf16.gmra.mxu0 %v2385
      %v2671 = vpop.f32.mrf.mxu0
      %v2672 = vadd.f32 0.0, %v2671
      %v2673 = vpop.f32.mrf.mxu0
      %v2674 = vpop.f32.mrf.mxu0
      %v2675 = vadd.f32 0.0, %v2674
      %v2676 = vpop.f32.mrf.mxu0
      %2677 = vmatprep.mubr.bf16.mxu0 %v2523
      %2678 = vmatmul.mubr.bf16.gmra.mxu0 %v2387
      %v2679 = vpop.f32.mrf.mxu0
      %v2680 = vadd.f32 0.0, %v2679
      %v2681 = vpop.f32.mrf.mxu0
      %v2682 = vpop.f32.mrf.mxu0
      %v2683 = vadd.f32 0.0, %v2682
      %v2684 = vpop.f32.mrf.mxu0
      %2685 = vdwg.mxu0
      %v2686 = vadd.f32 %v2078, %v2560
      %v2687 = vadd.f32 %v2081, %v2563
      %v2688 = vadd.f32 %v2086, %v2568
      %v2689 = vadd.f32 %v2089, %v2571
      %v2690 = vadd.f32 %v2094, %v2576
      %v2691 = vadd.f32 %v2097, %v2579
      %v2692 = vadd.f32 %v2102, %v2584
      %v2693 = vadd.f32 %v2105, %v2587
      %v2694 = vadd.f32 %v2110, %v2592
      %v2695 = vadd.f32 %v2113, %v2595
      %v2696 = vadd.f32 %v2118, %v2600
      %v2697 = vadd.f32 %v2121, %v2603
      %v2698 = vadd.f32 %v2126, %v2608
      %v2699 = vadd.f32 %v2129, %v2611
      %v2700 = vadd.f32 %v2134, %v2616
      %v2701 = vadd.f32 %v2137, %v2619
      %v2702 = vadd.f32 %v2142, %v2624
      %v2703 = vadd.f32 %v2145, %v2627
      %v2704 = vadd.f32 %v2150, %v2632
      %v2705 = vadd.f32 %v2153, %v2635
      %v2706 = vadd.f32 %v2158, %v2640
      %v2707 = vadd.f32 %v2161, %v2643
      %v2708 = vadd.f32 %v2166, %v2648
      %v2709 = vadd.f32 %v2169, %v2651
      %v2710 = vadd.f32 %v2174, %v2656
      %v2711 = vadd.f32 %v2177, %v2659
      %v2712 = vadd.f32 %v2182, %v2664
      %v2713 = vadd.f32 %v2185, %v2667
      %v2714 = vadd.f32 %v2190, %v2672
      %v2715 = vadd.f32 %v2193, %v2675
      %v2716 = vadd.f32 %v2198, %v2680
      %v2717 = vadd.f32 %v2201, %v2683
      %v2718 = vlaneseq
      %v2719 = vshrl.u32 %v2718, 7
      %v2720 = vsub.s32 0, %v2719
      %v2721 = vrot.slane %v201, %v2720
      %v2722 = vmul.f32 %v2686, %v2721
      %v2723 = vmul.f32 %v2687, %v2721
      %v2724 = vmul.f32 %v2688, %v2721
      %v2725 = vmul.f32 %v2689, %v2721
      %v2726 = vmul.f32 %v2690, %v2721
      %v2727 = vmul.f32 %v2691, %v2721
      %v2728 = vmul.f32 %v2692, %v2721
      %v2729 = vmul.f32 %v2693, %v2721
      %v2730 = vmul.f32 %v2694, %v2721
      %v2731 = vmul.f32 %v2695, %v2721
      %v2732 = vmul.f32 %v2696, %v2721
      %v2733 = vmul.f32 %v2697, %v2721
      %v2734 = vmul.f32 %v2698, %v2721
      %v2735 = vmul.f32 %v2699, %v2721
      %v2736 = vmul.f32 %v2700, %v2721
      %v2737 = vmul.f32 %v2701, %v2721
      %v2738 = vmul.f32 %v2702, %v2721
      %v2739 = vmul.f32 %v2703, %v2721
      %v2740 = vmul.f32 %v2704, %v2721
      %v2741 = vmul.f32 %v2705, %v2721
      %v2742 = vmul.f32 %v2706, %v2721
      %v2743 = vmul.f32 %v2707, %v2721
      %v2744 = vmul.f32 %v2708, %v2721
      %v2745 = vmul.f32 %v2709, %v2721
      %v2746 = vmul.f32 %v2710, %v2721
      %v2747 = vmul.f32 %v2711, %v2721
      %v2748 = vmul.f32 %v2712, %v2721
      %v2749 = vmul.f32 %v2713, %v2721
      %v2750 = vmul.f32 %v2714, %v2721
      %v2751 = vmul.f32 %v2715, %v2721
      %v2752 = vmul.f32 %v2716, %v2721
      %v2753 = vmul.f32 %v2717, %v2721
      %v2754 = vlaneseq
      %v2755 = vshrl.u32 %v2754, 7
      %v2756 = vsub.s32 0, %v2755
      %v2757 = vrot.slane %v202, %v2756
      %v2758 = vadd.f32 %v2722, %v2757
      %v2759 = vadd.f32 %v2723, %v2757
      %v2760 = vadd.f32 %v2724, %v2757
      %v2761 = vadd.f32 %v2725, %v2757
      %v2762 = vadd.f32 %v2726, %v2757
      %v2763 = vadd.f32 %v2727, %v2757
      %v2764 = vadd.f32 %v2728, %v2757
      %v2765 = vadd.f32 %v2729, %v2757
      %v2766 = vadd.f32 %v2730, %v2757
      %v2767 = vadd.f32 %v2731, %v2757
      %v2768 = vadd.f32 %v2732, %v2757
      %v2769 = vadd.f32 %v2733, %v2757
      %v2770 = vadd.f32 %v2734, %v2757
      %v2771 = vadd.f32 %v2735, %v2757
      %v2772 = vadd.f32 %v2736, %v2757
      %v2773 = vadd.f32 %v2737, %v2757
      %v2774 = vadd.f32 %v2738, %v2757
      %v2775 = vadd.f32 %v2739, %v2757
      %v2776 = vadd.f32 %v2740, %v2757
      %v2777 = vadd.f32 %v2741, %v2757
      %v2778 = vadd.f32 %v2742, %v2757
      %v2779 = vadd.f32 %v2743, %v2757
      %v2780 = vadd.f32 %v2744, %v2757
      %v2781 = vadd.f32 %v2745, %v2757
      %v2782 = vadd.f32 %v2746, %v2757
      %v2783 = vadd.f32 %v2747, %v2757
      %v2784 = vadd.f32 %v2748, %v2757
      %v2785 = vadd.f32 %v2749, %v2757
      %v2786 = vadd.f32 %v2750, %v2757
      %v2787 = vadd.f32 %v2751, %v2757
      %v2788 = vadd.f32 %v2752, %v2757
      %v2789 = vadd.f32 %v2753, %v2757
      %vm2790 = vcmp.gt.f32.partialorder %v2758, 0.0
      %vm2791 = vcmp.gt.f32.partialorder %v2759, 0.0
      %vm2792 = vcmp.gt.f32.partialorder %v2760, 0.0
      %vm2793 = vcmp.gt.f32.partialorder %v2761, 0.0
      %vm2794 = vcmp.gt.f32.partialorder %v2762, 0.0
      %vm2795 = vcmp.gt.f32.partialorder %v2763, 0.0
      %vm2796 = vcmp.gt.f32.partialorder %v2764, 0.0
      %vm2797 = vcmp.gt.f32.partialorder %v2765, 0.0
      %vm2798 = vcmp.gt.f32.partialorder %v2766, 0.0
      %vm2799 = vcmp.gt.f32.partialorder %v2767, 0.0
      %vm2800 = vcmp.gt.f32.partialorder %v2768, 0.0
      %vm2801 = vcmp.gt.f32.partialorder %v2769, 0.0
      %vm2802 = vcmp.gt.f32.partialorder %v2770, 0.0
      %vm2803 = vcmp.gt.f32.partialorder %v2771, 0.0
      %vm2804 = vcmp.gt.f32.partialorder %v2772, 0.0
      %vm2805 = vcmp.gt.f32.partialorder %v2773, 0.0
      %vm2806 = vcmp.gt.f32.partialorder %v2774, 0.0
      %vm2807 = vcmp.gt.f32.partialorder %v2775, 0.0
      %vm2808 = vcmp.gt.f32.partialorder %v2776, 0.0
      %vm2809 = vcmp.gt.f32.partialorder %v2777, 0.0
      %vm2810 = vcmp.gt.f32.partialorder %v2778, 0.0
      %vm2811 = vcmp.gt.f32.partialorder %v2779, 0.0
      %vm2812 = vcmp.gt.f32.partialorder %v2780, 0.0
      %vm2813 = vcmp.gt.f32.partialorder %v2781, 0.0
      %vm2814 = vcmp.gt.f32.partialorder %v2782, 0.0
      %vm2815 = vcmp.gt.f32.partialorder %v2783, 0.0
      %vm2816 = vcmp.gt.f32.partialorder %v2784, 0.0
      %vm2817 = vcmp.gt.f32.partialorder %v2785, 0.0
      %vm2818 = vcmp.gt.f32.partialorder %v2786, 0.0
      %vm2819 = vcmp.gt.f32.partialorder %v2787, 0.0
      %vm2820 = vcmp.gt.f32.partialorder %v2788, 0.0
      %vm2821 = vcmp.gt.f32.partialorder %v2789, 0.0
      %v2822 = vlaneseq
      %v2823 = vshrl.u32 %v2822, 7
      %v2824 = vsub.s32 0, %v2823
      %v2825 = vrot.slane %v203, %v2824
      %v2826 = vmul.f32 %v2825, %v2758
      %v2827 = vmul.f32 %v2825, %v2759
      %v2828 = vmul.f32 %v2825, %v2760
      %v2829 = vmul.f32 %v2825, %v2761
      %v2830 = vmul.f32 %v2825, %v2762
      %v2831 = vmul.f32 %v2825, %v2763
      %v2832 = vmul.f32 %v2825, %v2764
      %v2833 = vmul.f32 %v2825, %v2765
      %v2834 = vmul.f32 %v2825, %v2766
      %v2835 = vmul.f32 %v2825, %v2767
      %v2836 = vmul.f32 %v2825, %v2768
      %v2837 = vmul.f32 %v2825, %v2769
      %v2838 = vmul.f32 %v2825, %v2770
      %v2839 = vmul.f32 %v2825, %v2771
      %v2840 = vmul.f32 %v2825, %v2772
      %v2841 = vmul.f32 %v2825, %v2773
      %v2842 = vmul.f32 %v2825, %v2774
      %v2843 = vmul.f32 %v2825, %v2775
      %v2844 = vmul.f32 %v2825, %v2776
      %v2845 = vmul.f32 %v2825, %v2777
      %v2846 = vmul.f32 %v2825, %v2778
      %v2847 = vmul.f32 %v2825, %v2779
      %v2848 = vmul.f32 %v2825, %v2780
      %v2849 = vmul.f32 %v2825, %v2781
      %v2850 = vmul.f32 %v2825, %v2782
      %v2851 = vmul.f32 %v2825, %v2783
      %v2852 = vmul.f32 %v2825, %v2784
      %v2853 = vmul.f32 %v2825, %v2785
      %v2854 = vmul.f32 %v2825, %v2786
      %v2855 = vmul.f32 %v2825, %v2787
      %v2856 = vmul.f32 %v2825, %v2788
      %v2857 = vmul.f32 %v2825, %v2789
      %v2858 = vsel %vm2790, %v2758, %v2826
      %v2859 = vsel %vm2791, %v2759, %v2827
      %v2860 = vsel %vm2792, %v2760, %v2828
      %v2861 = vsel %vm2793, %v2761, %v2829
      %v2862 = vsel %vm2794, %v2762, %v2830
      %v2863 = vsel %vm2795, %v2763, %v2831
      %v2864 = vsel %vm2796, %v2764, %v2832
      %v2865 = vsel %vm2797, %v2765, %v2833
      %v2866 = vsel %vm2798, %v2766, %v2834
      %v2867 = vsel %vm2799, %v2767, %v2835
      %v2868 = vsel %vm2800, %v2768, %v2836
      %v2869 = vsel %vm2801, %v2769, %v2837
      %v2870 = vsel %vm2802, %v2770, %v2838
      %v2871 = vsel %vm2803, %v2771, %v2839
      %v2872 = vsel %vm2804, %v2772, %v2840
      %v2873 = vsel %vm2805, %v2773, %v2841
      %v2874 = vsel %vm2806, %v2774, %v2842
      %v2875 = vsel %vm2807, %v2775, %v2843
      %v2876 = vsel %vm2808, %v2776, %v2844
      %v2877 = vsel %vm2809, %v2777, %v2845
      %v2878 = vsel %vm2810, %v2778, %v2846
      %v2879 = vsel %vm2811, %v2779, %v2847
      %v2880 = vsel %vm2812, %v2780, %v2848
      %v2881 = vsel %vm2813, %v2781, %v2849
      %v2882 = vsel %vm2814, %v2782, %v2850
      %v2883 = vsel %vm2815, %v2783, %v2851
      %v2884 = vsel %vm2816, %v2784, %v2852
      %v2885 = vsel %vm2817, %v2785, %v2853
      %v2886 = vsel %vm2818, %v2786, %v2854
      %v2887 = vsel %vm2819, %v2787, %v2855
      %v2888 = vsel %vm2820, %v2788, %v2856
      %v2889 = vsel %vm2821, %v2789, %v2857
      %2890 = vst.msk [vmem:[#allocation3] sm:$0xff] %vm240, 0
      %2891 = vst.msk [vmem:[#allocation3 + $0x8] sm:$0xff] %vm240, 0
      %2892 = vst.msk [vmem:[#allocation3 + $0x110] sm:$0xff] %vm240, 0
      %2893 = vst.msk [vmem:[#allocation3 + $0x118] sm:$0xff] %vm240, 0
      %2894 = vst.msk [vmem:[#allocation4] sm:$0xff] %vm245, 0.0
      %2895 = vst.msk [vmem:[#allocation4 + $0x8] sm:$0xff] %vm245, 0.0
      %2896 = vst.msk [vmem:[#allocation4 + $0x110] sm:$0xff] %vm245, 0.0
      %2897 = vst.msk [vmem:[#allocation4 + $0x118] sm:$0xff] %vm245, 0.0
      %2898 = vst.msk [vmem:[#allocation4 + $0x10] sm:$0xff] %vm245, %v2858
      %2899 = vst.msk [vmem:[#allocation4 + $0x18] sm:$0xff] %vm245, %v2859
      %2900 = vst.msk [vmem:[#allocation4 + $0x20] sm:$0xff] %vm245, %v2860
      %2901 = vst.msk [vmem:[#allocation4 + $0x28] sm:$0xff] %vm245, %v2861
      %2902 = vst.msk [vmem:[#allocation4 + $0x30] sm:$0xff] %vm245, %v2862
      %2903 = vst.msk [vmem:[#allocation4 + $0x38] sm:$0xff] %vm245, %v2863
      %2904 = vst.msk [vmem:[#allocation4 + $0x40] sm:$0xff] %vm245, %v2864
      %2905 = vst.msk [vmem:[#allocation4 + $0x48] sm:$0xff] %vm245, %v2865
      %2906 = vst.msk [vmem:[#allocation4 + $0x50] sm:$0xff] %vm245, %v2866
      %2907 = vst.msk [vmem:[#allocation4 + $0x58] sm:$0xff] %vm245, %v2867
      %2908 = vst.msk [vmem:[#allocation4 + $0x60] sm:$0xff] %vm245, %v2868
      %2909 = vst.msk [vmem:[#allocation4 + $0x68] sm:$0xff] %vm245, %v2869
      %2910 = vst.msk [vmem:[#allocation4 + $0x70] sm:$0xff] %vm245, %v2870
      %2911 = vst.msk [vmem:[#allocation4 + $0x78] sm:$0xff] %vm245, %v2871
      %2912 = vst.msk [vmem:[#allocation4 + $0x80] sm:$0xff] %vm245, %v2872
      %2913 = vst.msk [vmem:[#allocation4 + $0x88] sm:$0xff] %vm245, %v2873
      %2914 = vst.msk [vmem:[#allocation4 + $0x90] sm:$0xff] %vm245, %v2874
      %2915 = vst.msk [vmem:[#allocation4 + $0x98] sm:$0xff] %vm245, %v2875
      %2916 = vst.msk [vmem:[#allocation4 + $0xa0] sm:$0xff] %vm245, %v2876
      %2917 = vst.msk [vmem:[#allocation4 + $0xa8] sm:$0xff] %vm245, %v2877
      %2918 = vst.msk [vmem:[#allocation4 + $0xb0] sm:$0xff] %vm245, %v2878
      %2919 = vst.msk [vmem:[#allocation4 + $0xb8] sm:$0xff] %vm245, %v2879
      %2920 = vst.msk [vmem:[#allocation4 + $0xc0] sm:$0xff] %vm245, %v2880
      %2921 = vst.msk [vmem:[#allocation4 + $0xc8] sm:$0xff] %vm245, %v2881
      %2922 = vst.msk [vmem:[#allocation4 + $0xd0] sm:$0xff] %vm245, %v2882
      %2923 = vst.msk [vmem:[#allocation4 + $0xd8] sm:$0xff] %vm245, %v2883
      %2924 = vst.msk [vmem:[#allocation4 + $0xe0] sm:$0xff] %vm245, %v2884
      %2925 = vst.msk [vmem:[#allocation4 + $0xe8] sm:$0xff] %vm245, %v2885
      %2926 = vst.msk [vmem:[#allocation4 + $0xf0] sm:$0xff] %vm245, %v2886
      %2927 = vst.msk [vmem:[#allocation4 + $0xf8] sm:$0xff] %vm245, %v2887
      %2928 = vst.msk [vmem:[#allocation4 + $0x100] sm:$0xff] %vm245, %v2888
      %2929 = vst.msk [vmem:[#allocation4 + $0x108] sm:$0xff] %vm245, %v2889
      %v2930 = vpack.c.bf16 %v2859, %v2858
      %v2931 = vpack.c.bf16 %v2861, %v2860
      %v2932 = vpack.c.bf16 %v2863, %v2862
      %v2933 = vpack.c.bf16 %v2865, %v2864
      %v2934 = vpack.c.bf16 %v2867, %v2866
      %v2935 = vpack.c.bf16 %v2869, %v2868
      %v2936 = vpack.c.bf16 %v2871, %v2870
      %v2937 = vpack.c.bf16 %v2873, %v2872
      %v2938 = vpack.c.bf16 %v2875, %v2874
      %v2939 = vpack.c.bf16 %v2877, %v2876
      %v2940 = vpack.c.bf16 %v2879, %v2878
      %v2941 = vpack.c.bf16 %v2881, %v2880
      %v2942 = vpack.c.bf16 %v2883, %v2882
      %v2943 = vpack.c.bf16 %v2885, %v2884
      %v2944 = vpack.c.bf16 %v2887, %v2886
      %v2945 = vpack.c.bf16 %v2889, %v2888
      %v2946 = vld [vmem:[#allocation4 + $0xf] sm:$0xff]
      %v2947 = vld [vmem:[#allocation4 + $0x17] sm:$0xff]
      %v2948 = vld [vmem:[#allocation4 + $0x1f] sm:$0xff]
      %v2949 = vld [vmem:[#allocation4 + $0x27] sm:$0xff]
      %v2950 = vld [vmem:[#allocation4 + $0x2f] sm:$0xff]
      %v2951 = vld [vmem:[#allocation4 + $0x37] sm:$0xff]
      %v2952 = vld [vmem:[#allocation4 + $0x3f] sm:$0xff]
      %v2953 = vld [vmem:[#allocation4 + $0x47] sm:$0xff]
      %v2954 = vld [vmem:[#allocation4 + $0x4f] sm:$0xff]
      %v2955 = vld [vmem:[#allocation4 + $0x57] sm:$0xff]
      %v2956 = vld [vmem:[#allocation4 + $0x5f] sm:$0xff]
      %v2957 = vld [vmem:[#allocation4 + $0x67] sm:$0xff]
      %v2958 = vld [vmem:[#allocation4 + $0x6f] sm:$0xff]
      %v2959 = vld [vmem:[#allocation4 + $0x77] sm:$0xff]
      %v2960 = vld [vmem:[#allocation4 + $0x7f] sm:$0xff]
      %v2961 = vld [vmem:[#allocation4 + $0x87] sm:$0xff]
      %v2962 = vld [vmem:[#allocation4 + $0x8f] sm:$0xff]
      %v2963 = vld [vmem:[#allocation4 + $0x97] sm:$0xff]
      %v2964 = vld [vmem:[#allocation4 + $0x9f] sm:$0xff]
      %v2965 = vld [vmem:[#allocation4 + $0xa7] sm:$0xff]
      %v2966 = vld [vmem:[#allocation4 + $0xaf] sm:$0xff]
      %v2967 = vld [vmem:[#allocation4 + $0xb7] sm:$0xff]
      %v2968 = vld [vmem:[#allocation4 + $0xbf] sm:$0xff]
      %v2969 = vld [vmem:[#allocation4 + $0xc7] sm:$0xff]
      %v2970 = vld [vmem:[#allocation4 + $0xcf] sm:$0xff]
      %v2971 = vld [vmem:[#allocation4 + $0xd7] sm:$0xff]
      %v2972 = vld [vmem:[#allocation4 + $0xdf] sm:$0xff]
      %v2973 = vld [vmem:[#allocation4 + $0xe7] sm:$0xff]
      %v2974 = vld [vmem:[#allocation4 + $0xef] sm:$0xff]
      %v2975 = vld [vmem:[#allocation4 + $0xf7] sm:$0xff]
      %v2976 = vld [vmem:[#allocation4 + $0xff] sm:$0xff]
      %v2977 = vld [vmem:[#allocation4 + $0x107] sm:$0xff]
      %v2978 = vpack.c.bf16 %v2947, %v2946
      %v2979 = vpack.c.bf16 %v2949, %v2948
      %v2980 = vpack.c.bf16 %v2951, %v2950
      %v2981 = vpack.c.bf16 %v2953, %v2952
      %v2982 = vpack.c.bf16 %v2955, %v2954
      %v2983 = vpack.c.bf16 %v2957, %v2956
      %v2984 = vpack.c.bf16 %v2959, %v2958
      %v2985 = vpack.c.bf16 %v2961, %v2960
      %v2986 = vpack.c.bf16 %v2963, %v2962
      %v2987 = vpack.c.bf16 %v2965, %v2964
      %v2988 = vpack.c.bf16 %v2967, %v2966
      %v2989 = vpack.c.bf16 %v2969, %v2968
      %v2990 = vpack.c.bf16 %v2971, %v2970
      %v2991 = vpack.c.bf16 %v2973, %v2972
      %v2992 = vpack.c.bf16 %v2975, %v2974
      %v2993 = vpack.c.bf16 %v2977, %v2976
      %v2994 = vsel %vm907, 0, %v2978
      %v2995 = vsel %vm908, 0, %v2979
      %v2996 = vsel %vm909, 0, %v2980
      %v2997 = vsel %vm910, 0, %v2981
      %v2998 = vsel %vm911, 0, %v2982
      %v2999 = vsel %vm912, 0, %v2983
      %v3000 = vsel %vm913, 0, %v2984
      %v3001 = vsel %vm914, 0, %v2985
      %v3002 = vsel %vm915, 0, %v2986
      %v3003 = vsel %vm916, 0, %v2987
      %v3004 = vsel %vm917, 0, %v2988
      %v3005 = vsel %vm918, 0, %v2989
      %v3006 = vsel %vm919, 0, %v2990
      %v3007 = vsel %vm920, 0, %v2991
      %v3008 = vsel %vm921, 0, %v2992
      %v3009 = vsel %vm922, 0, %v2993
      %v3010 = vld [vmem:[#allocation4 + $0x11] sm:$0xff]
      %v3011 = vld [vmem:[#allocation4 + $0x19] sm:$0xff]
      %v3012 = vld [vmem:[#allocation4 + $0x21] sm:$0xff]
      %v3013 = vld [vmem:[#allocation4 + $0x29] sm:$0xff]
      %v3014 = vld [vmem:[#allocation4 + $0x31] sm:$0xff]
      %v3015 = vld [vmem:[#allocation4 + $0x39] sm:$0xff]
      %v3016 = vld [vmem:[#allocation4 + $0x41] sm:$0xff]
      %v3017 = vld [vmem:[#allocation4 + $0x49] sm:$0xff]
      %v3018 = vld [vmem:[#allocation4 + $0x51] sm:$0xff]
      %v3019 = vld [vmem:[#allocation4 + $0x59] sm:$0xff]
      %v3020 = vld [vmem:[#allocation4 + $0x61] sm:$0xff]
      %v3021 = vld [vmem:[#allocation4 + $0x69] sm:$0xff]
      %v3022 = vld [vmem:[#allocation4 + $0x71] sm:$0xff]
      %v3023 = vld [vmem:[#allocation4 + $0x79] sm:$0xff]
      %v3024 = vld [vmem:[#allocation4 + $0x81] sm:$0xff]
      %v3025 = vld [vmem:[#allocation4 + $0x89] sm:$0xff]
      %v3026 = vld [vmem:[#allocation4 + $0x91] sm:$0xff]
      %v3027 = vld [vmem:[#allocation4 + $0x99] sm:$0xff]
      %v3028 = vld [vmem:[#allocation4 + $0xa1] sm:$0xff]
      %v3029 = vld [vmem:[#allocation4 + $0xa9] sm:$0xff]
      %v3030 = vld [vmem:[#allocation4 + $0xb1] sm:$0xff]
      %v3031 = vld [vmem:[#allocation4 + $0xb9] sm:$0xff]
      %v3032 = vld [vmem:[#allocation4 + $0xc1] sm:$0xff]
      %v3033 = vld [vmem:[#allocation4 + $0xc9] sm:$0xff]
      %v3034 = vld [vmem:[#allocation4 + $0xd1] sm:$0xff]
      %v3035 = vld [vmem:[#allocation4 + $0xd9] sm:$0xff]
      %v3036 = vld [vmem:[#allocation4 + $0xe1] sm:$0xff]
      %v3037 = vld [vmem:[#allocation4 + $0xe9] sm:$0xff]
      %v3038 = vld [vmem:[#allocation4 + $0xf1] sm:$0xff]
      %v3039 = vld [vmem:[#allocation4 + $0xf9] sm:$0xff]
      %v3040 = vld [vmem:[#allocation4 + $0x101] sm:$0xff]
      %v3041 = vld [vmem:[#allocation4 + $0x109] sm:$0xff]
      %v3042 = vpack.c.bf16 %v3011, %v3010
      %v3043 = vpack.c.bf16 %v3013, %v3012
      %v3044 = vpack.c.bf16 %v3015, %v3014
      %v3045 = vpack.c.bf16 %v3017, %v3016
      %v3046 = vpack.c.bf16 %v3019, %v3018
      %v3047 = vpack.c.bf16 %v3021, %v3020
      %v3048 = vpack.c.bf16 %v3023, %v3022
      %v3049 = vpack.c.bf16 %v3025, %v3024
      %v3050 = vpack.c.bf16 %v3027, %v3026
      %v3051 = vpack.c.bf16 %v3029, %v3028
      %v3052 = vpack.c.bf16 %v3031, %v3030
      %v3053 = vpack.c.bf16 %v3033, %v3032
      %v3054 = vpack.c.bf16 %v3035, %v3034
      %v3055 = vpack.c.bf16 %v3037, %v3036
      %v3056 = vpack.c.bf16 %v3039, %v3038
      %v3057 = vpack.c.bf16 %v3041, %v3040
      %v3058 = vsel %vm1131, 0, %v3042
      %v3059 = vsel %vm1132, 0, %v3043
      %v3060 = vsel %vm1133, 0, %v3044
      %v3061 = vsel %vm1134, 0, %v3045
      %v3062 = vsel %vm1135, 0, %v3046
      %v3063 = vsel %vm1136, 0, %v3047
      %v3064 = vsel %vm1137, 0, %v3048
      %v3065 = vsel %vm1138, 0, %v3049
      %v3066 = vsel %vm1139, 0, %v3050
      %v3067 = vsel %vm1140, 0, %v3051
      %v3068 = vsel %vm1141, 0, %v3052
      %v3069 = vsel %vm1142, 0, %v3053
      %v3070 = vsel %vm1143, 0, %v3054
      %v3071 = vsel %vm1144, 0, %v3055
      %v3072 = vsel %vm1145, 0, %v3056
      %v3073 = vsel %vm1146, 0, %v3057
      %3090 = vrot.lane.b32.xlu0 %v2930, 64
      %v3091 = vpop.permute.xlu0 %3090
      %3092 = vrot.lane.b32.xlu0 %v2931, 64
      %v3093 = vpop.permute.xlu0 %3092
      %3094 = vrot.lane.b32.xlu0 %v2932, 64
      %v3095 = vpop.permute.xlu0 %3094
      %3096 = vrot.lane.b32.xlu0 %v2933, 64
      %v3097 = vpop.permute.xlu0 %3096
      %3098 = vrot.lane.b32.xlu0 %v2934, 64
      %v3099 = vpop.permute.xlu0 %3098
      %3100 = vrot.lane.b32.xlu0 %v2935, 64
      %v3101 = vpop.permute.xlu0 %3100
      %3102 = vrot.lane.b32.xlu0 %v2936, 64
      %v3103 = vpop.permute.xlu0 %3102
      %3104 = vrot.lane.b32.xlu0 %v2937, 64
      %v3105 = vpop.permute.xlu0 %3104
      %3106 = vrot.lane.b32.xlu0 %v2938, 64
      %v3107 = vpop.permute.xlu0 %3106
      %3108 = vrot.lane.b32.xlu0 %v2939, 64
      %v3109 = vpop.permute.xlu0 %3108
      %3110 = vrot.lane.b32.xlu0 %v2940, 64
      %v3111 = vpop.permute.xlu0 %3110
      %3112 = vrot.lane.b32.xlu0 %v2941, 64
      %v3113 = vpop.permute.xlu0 %3112
      %3114 = vrot.lane.b32.xlu0 %v2942, 64
      %v3115 = vpop.permute.xlu0 %3114
      %3116 = vrot.lane.b32.xlu0 %v2943, 64
      %v3117 = vpop.permute.xlu0 %3116
      %3118 = vrot.lane.b32.xlu0 %v2944, 64
      %v3119 = vpop.permute.xlu0 %3118
      %3120 = vrot.lane.b32.xlu0 %v2945, 64
      %v3121 = vpop.permute.xlu0 %3120
      %v3124 = vsel %vm245, %v2994, %v3091
      %v3127 = vsel %vm245, %v2995, %v3093
      %v3130 = vsel %vm245, %v2996, %v3095
      %v3133 = vsel %vm245, %v2997, %v3097
      %v3136 = vsel %vm245, %v2998, %v3099
      %v3139 = vsel %vm245, %v2999, %v3101
      %v3142 = vsel %vm245, %v3000, %v3103
      %v3145 = vsel %vm245, %v3001, %v3105
      %v3148 = vsel %vm245, %v3002, %v3107
      %v3151 = vsel %vm245, %v3003, %v3109
      %v3154 = vsel %vm245, %v3004, %v3111
      %v3157 = vsel %vm245, %v3005, %v3113
      %v3160 = vsel %vm245, %v3006, %v3115
      %v3163 = vsel %vm245, %v3007, %v3117
      %v3166 = vsel %vm245, %v3008, %v3119
      %v3169 = vsel %vm245, %v3009, %v3121
      %v3202 = vunpack.c.l.b16 %v3124
      %v3203 = vunpack.c.l.b16 %v3058
      %v3204 = vunpack.c.h.b16 %v3124
      %v3205 = vunpack.c.h.b16 %v3058
      %v3206 = vunpack.c.l.b16 %v3127
      %v3207 = vunpack.c.l.b16 %v3059
      %v3208 = vunpack.c.h.b16 %v3127
      %v3209 = vunpack.c.h.b16 %v3059
      %v3210 = vunpack.c.l.b16 %v3130
      %v3211 = vunpack.c.l.b16 %v3060
      %v3212 = vunpack.c.h.b16 %v3130
      %v3213 = vunpack.c.h.b16 %v3060
      %v3214 = vunpack.c.l.b16 %v3133
      %v3215 = vunpack.c.l.b16 %v3061
      %v3216 = vunpack.c.h.b16 %v3133
      %v3217 = vunpack.c.h.b16 %v3061
      %v3218 = vunpack.c.l.b16 %v3136
      %v3219 = vunpack.c.l.b16 %v3062
      %v3220 = vunpack.c.h.b16 %v3136
      %v3221 = vunpack.c.h.b16 %v3062
      %v3222 = vunpack.c.l.b16 %v3139
      %v3223 = vunpack.c.l.b16 %v3063
      %v3224 = vunpack.c.h.b16 %v3139
      %v3225 = vunpack.c.h.b16 %v3063
      %v3226 = vunpack.c.l.b16 %v3142
      %v3227 = vunpack.c.l.b16 %v3064
      %v3228 = vunpack.c.h.b16 %v3142
      %v3229 = vunpack.c.h.b16 %v3064
      %v3230 = vunpack.c.l.b16 %v3145
      %v3231 = vunpack.c.l.b16 %v3065
      %v3232 = vunpack.c.h.b16 %v3145
      %v3233 = vunpack.c.h.b16 %v3065
      %v3234 = vunpack.c.l.b16 %v3148
      %v3235 = vunpack.c.l.b16 %v3066
      %v3236 = vunpack.c.h.b16 %v3148
      %v3237 = vunpack.c.h.b16 %v3066
      %v3238 = vunpack.c.l.b16 %v3151
      %v3239 = vunpack.c.l.b16 %v3067
      %v3240 = vunpack.c.h.b16 %v3151
      %v3241 = vunpack.c.h.b16 %v3067
      %v3242 = vunpack.c.l.b16 %v3154
      %v3243 = vunpack.c.l.b16 %v3068
      %v3244 = vunpack.c.h.b16 %v3154
      %v3245 = vunpack.c.h.b16 %v3068
      %v3246 = vunpack.c.l.b16 %v3157
      %v3247 = vunpack.c.l.b16 %v3069
      %v3248 = vunpack.c.h.b16 %v3157
      %v3249 = vunpack.c.h.b16 %v3069
      %v3250 = vunpack.c.l.b16 %v3160
      %v3251 = vunpack.c.l.b16 %v3070
      %v3252 = vunpack.c.h.b16 %v3160
      %v3253 = vunpack.c.h.b16 %v3070
      %v3254 = vunpack.c.l.b16 %v3163
      %v3255 = vunpack.c.l.b16 %v3071
      %v3256 = vunpack.c.h.b16 %v3163
      %v3257 = vunpack.c.h.b16 %v3071
      %v3258 = vunpack.c.l.b16 %v3166
      %v3259 = vunpack.c.l.b16 %v3072
      %v3260 = vunpack.c.h.b16 %v3166
      %v3261 = vunpack.c.h.b16 %v3072
      %v3262 = vunpack.c.l.b16 %v3169
      %v3263 = vunpack.c.l.b16 %v3073
      %v3264 = vunpack.c.h.b16 %v3169
      %v3265 = vunpack.c.h.b16 %v3073
      %v3266 = vpack.c.b16 %v3203, %v3202
      %v3267 = vpack.c.b16 %v3205, %v3204
      %v3268 = vpack.c.b16 %v3207, %v3206
      %v3269 = vpack.c.b16 %v3209, %v3208
      %v3270 = vpack.c.b16 %v3211, %v3210
      %v3271 = vpack.c.b16 %v3213, %v3212
      %v3272 = vpack.c.b16 %v3215, %v3214
      %v3273 = vpack.c.b16 %v3217, %v3216
      %v3274 = vpack.c.b16 %v3219, %v3218
      %v3275 = vpack.c.b16 %v3221, %v3220
      %v3276 = vpack.c.b16 %v3223, %v3222
      %v3277 = vpack.c.b16 %v3225, %v3224
      %v3278 = vpack.c.b16 %v3227, %v3226
      %v3279 = vpack.c.b16 %v3229, %v3228
      %v3280 = vpack.c.b16 %v3231, %v3230
      %v3281 = vpack.c.b16 %v3233, %v3232
      %v3282 = vpack.c.b16 %v3235, %v3234
      %v3283 = vpack.c.b16 %v3237, %v3236
      %v3284 = vpack.c.b16 %v3239, %v3238
      %v3285 = vpack.c.b16 %v3241, %v3240
      %v3286 = vpack.c.b16 %v3243, %v3242
      %v3287 = vpack.c.b16 %v3245, %v3244
      %v3288 = vpack.c.b16 %v3247, %v3246
      %v3289 = vpack.c.b16 %v3249, %v3248
      %v3290 = vpack.c.b16 %v3251, %v3250
      %v3291 = vpack.c.b16 %v3253, %v3252
      %v3292 = vpack.c.b16 %v3255, %v3254
      %v3293 = vpack.c.b16 %v3257, %v3256
      %v3294 = vpack.c.b16 %v3259, %v3258
      %v3295 = vpack.c.b16 %v3261, %v3260
      %v3296 = vpack.c.b16 %v3263, %v3262
      %v3297 = vpack.c.b16 %v3265, %v3264
      %3330 = vst.msk [vmem:[#allocation3 + $0x10] sm:$0xff] %vm240, %v3266
      %3331 = vst.msk [vmem:[#allocation3 + $0x18] sm:$0xff] %vm240, %v3267
      %3332 = vst.msk [vmem:[#allocation3 + $0x20] sm:$0xff] %vm240, %v3268
      %3333 = vst.msk [vmem:[#allocation3 + $0x28] sm:$0xff] %vm240, %v3269
      %3334 = vst.msk [vmem:[#allocation3 + $0x30] sm:$0xff] %vm240, %v3270
      %3335 = vst.msk [vmem:[#allocation3 + $0x38] sm:$0xff] %vm240, %v3271
      %3336 = vst.msk [vmem:[#allocation3 + $0x40] sm:$0xff] %vm240, %v3272
      %3337 = vst.msk [vmem:[#allocation3 + $0x48] sm:$0xff] %vm240, %v3273
      %3338 = vst.msk [vmem:[#allocation3 + $0x50] sm:$0xff] %vm240, %v3274
      %3339 = vst.msk [vmem:[#allocation3 + $0x58] sm:$0xff] %vm240, %v3275
      %3340 = vst.msk [vmem:[#allocation3 + $0x60] sm:$0xff] %vm240, %v3276
      %3341 = vst.msk [vmem:[#allocation3 + $0x68] sm:$0xff] %vm240, %v3277
      %3342 = vst.msk [vmem:[#allocation3 + $0x70] sm:$0xff] %vm240, %v3278
      %3343 = vst.msk [vmem:[#allocation3 + $0x78] sm:$0xff] %vm240, %v3279
      %3344 = vst.msk [vmem:[#allocation3 + $0x80] sm:$0xff] %vm240, %v3280
      %3345 = vst.msk [vmem:[#allocation3 + $0x88] sm:$0xff] %vm240, %v3281
      %3346 = vst.msk [vmem:[#allocation3 + $0x90] sm:$0xff] %vm240, %v3282
      %3347 = vst.msk [vmem:[#allocation3 + $0x98] sm:$0xff] %vm240, %v3283
      %3348 = vst.msk [vmem:[#allocation3 + $0xa0] sm:$0xff] %vm240, %v3284
      %3349 = vst.msk [vmem:[#allocation3 + $0xa8] sm:$0xff] %vm240, %v3285
      %3350 = vst.msk [vmem:[#allocation3 + $0xb0] sm:$0xff] %vm240, %v3286
      %3351 = vst.msk [vmem:[#allocation3 + $0xb8] sm:$0xff] %vm240, %v3287
      %3352 = vst.msk [vmem:[#allocation3 + $0xc0] sm:$0xff] %vm240, %v3288
      %3353 = vst.msk [vmem:[#allocation3 + $0xc8] sm:$0xff] %vm240, %v3289
      %3354 = vst.msk [vmem:[#allocation3 + $0xd0] sm:$0xff] %vm240, %v3290
      %3355 = vst.msk [vmem:[#allocation3 + $0xd8] sm:$0xff] %vm240, %v3291
      %3356 = vst.msk [vmem:[#allocation3 + $0xe0] sm:$0xff] %vm240, %v3292
      %3357 = vst.msk [vmem:[#allocation3 + $0xe8] sm:$0xff] %vm240, %v3293
      %3358 = vst.msk [vmem:[#allocation3 + $0xf0] sm:$0xff] %vm240, %v3294
      %3359 = vst.msk [vmem:[#allocation3 + $0xf8] sm:$0xff] %vm240, %v3295
      %3360 = vst.msk [vmem:[#allocation3 + $0x100] sm:$0xff] %vm240, %v3296
      %3361 = vst.msk [vmem:[#allocation3 + $0x108] sm:$0xff] %vm240, %v3297
      %v3362 = vld [vmem:[#allocation3] sm:$0xff]
      %v3363 = vld [vmem:[#allocation3 + $0x8] sm:$0xff]
      %v3364 = vld [vmem:[#allocation3 + $0x10] sm:$0xff]
      %v3365 = vld [vmem:[#allocation3 + $0x18] sm:$0xff]
      %v3366 = vld [vmem:[#allocation3 + $0x20] sm:$0xff]
      %v3367 = vld [vmem:[#allocation3 + $0x28] sm:$0xff]
      %v3368 = vld [vmem:[#allocation3 + $0x30] sm:$0xff]
      %v3369 = vld [vmem:[#allocation3 + $0x38] sm:$0xff]
      %v3370 = vld [vmem:[#allocation3 + $0x40] sm:$0xff]
      %v3371 = vld [vmem:[#allocation3 + $0x48] sm:$0xff]
      %v3372 = vld [vmem:[#allocation3 + $0x50] sm:$0xff]
      %v3373 = vld [vmem:[#allocation3 + $0x58] sm:$0xff]
      %v3374 = vld [vmem:[#allocation3 + $0x60] sm:$0xff]
      %v3375 = vld [vmem:[#allocation3 + $0x68] sm:$0xff]
      %v3376 = vld [vmem:[#allocation3 + $0x70] sm:$0xff]
      %v3377 = vld [vmem:[#allocation3 + $0x78] sm:$0xff]
      %v3378 = vld [vmem:[#allocation3 + $0x80] sm:$0xff]
      %v3379 = vld [vmem:[#allocation3 + $0x88] sm:$0xff]
      %v3380 = vld [vmem:[#allocation3 + $0x90] sm:$0xff]
      %v3381 = vld [vmem:[#allocation3 + $0x98] sm:$0xff]
      %v3382 = vld [vmem:[#allocation3 + $0xa0] sm:$0xff]
      %v3383 = vld [vmem:[#allocation3 + $0xa8] sm:$0xff]
      %v3384 = vld [vmem:[#allocation3 + $0xb0] sm:$0xff]
      %v3385 = vld [vmem:[#allocation3 + $0xb8] sm:$0xff]
      %v3386 = vld [vmem:[#allocation3 + $0xc0] sm:$0xff]
      %v3387 = vld [vmem:[#allocation3 + $0xc8] sm:$0xff]
      %v3388 = vld [vmem:[#allocation3 + $0xd0] sm:$0xff]
      %v3389 = vld [vmem:[#allocation3 + $0xd8] sm:$0xff]
      %v3390 = vld [vmem:[#allocation3 + $0xe0] sm:$0xff]
      %v3391 = vld [vmem:[#allocation3 + $0xe8] sm:$0xff]
      %v3392 = vld [vmem:[#allocation3 + $0xf0] sm:$0xff]
      %v3393 = vld [vmem:[#allocation3 + $0xf8] sm:$0xff]
      %v3394 = vld [vmem:[%s2] sm:$0xf]
      %v3395 = vld [vmem:[%s2 + $0x4] sm:$0xf]
      %v3396 = vld [vmem:[%s2 + $0x8] sm:$0xf]
      %v3397 = vld [vmem:[%s2 + $0xc] sm:$0xf]
      %v3398 = vld [vmem:[%s2 + $0x10] sm:$0xf]
      %v3399 = vld [vmem:[%s2 + $0x14] sm:$0xf]
      %v3400 = vld [vmem:[%s2 + $0x18] sm:$0xf]
      %v3401 = vld [vmem:[%s2 + $0x1c] sm:$0xf]
      %v3402 = vld [vmem:[%s2 + $0x20] sm:$0xf]
      %v3403 = vld [vmem:[%s2 + $0x24] sm:$0xf]
      %v3404 = vld [vmem:[%s2 + $0x28] sm:$0xf]
      %v3405 = vld [vmem:[%s2 + $0x2c] sm:$0xf]
      %v3406 = vld [vmem:[%s2 + $0x30] sm:$0xf]
      %v3407 = vld [vmem:[%s2 + $0x34] sm:$0xf]
      %v3408 = vld [vmem:[%s2 + $0x38] sm:$0xf]
      %v3409 = vld [vmem:[%s2 + $0x3c] sm:$0xf]
      %v3410 = vld [vmem:[%s2 + $0x40] sm:$0xf]
      %v3411 = vld [vmem:[%s2 + $0x44] sm:$0xf]
      %v3412 = vld [vmem:[%s2 + $0x48] sm:$0xf]
      %v3413 = vld [vmem:[%s2 + $0x4c] sm:$0xf]
      %v3414 = vld [vmem:[%s2 + $0x50] sm:$0xf]
      %v3415 = vld [vmem:[%s2 + $0x54] sm:$0xf]
      %v3416 = vld [vmem:[%s2 + $0x58] sm:$0xf]
      %v3417 = vld [vmem:[%s2 + $0x5c] sm:$0xf]
      %v3418 = vld [vmem:[#allocation3 + $0x100] sm:$0xff]
      %v3419 = vld [vmem:[#allocation3 + $0x108] sm:$0xff]
      %s3420 = scalar_lea.vmem %s2, 96
      %v3421 = vld [vmem:[%s3420] sm:$0xf]
      %v3422 = vld [vmem:[%s3420 + $0x4] sm:$0xf]
      %v3423 = vld [vmem:[%s3420 + $0x8] sm:$0xf]
      %v3424 = vld [vmem:[%s3420 + $0xc] sm:$0xf]
      %v3425 = vld [vmem:[%s3420 + $0x10] sm:$0xf]
      %v3426 = vld [vmem:[%s3420 + $0x14] sm:$0xf]
      %v3427 = vld [vmem:[%s3420 + $0x18] sm:$0xf]
      %v3428 = vld [vmem:[%s3420 + $0x1c] sm:$0xf]
      %v3429 = vld [vmem:[%s3420 + $0x20] sm:$0xf]
      %v3430 = vld [vmem:[%s3420 + $0x24] sm:$0xf]
      %v3431 = vld [vmem:[%s3420 + $0x28] sm:$0xf]
      %v3432 = vld [vmem:[%s3420 + $0x2c] sm:$0xf]
      %v3433 = vld [vmem:[%s3420 + $0x30] sm:$0xf]
      %v3434 = vld [vmem:[%s3420 + $0x34] sm:$0xf]
      %v3435 = vld [vmem:[%s3420 + $0x38] sm:$0xf]
      %v3436 = vld [vmem:[%s3420 + $0x3c] sm:$0xf]
      %v3437 = vld [vmem:[%s3420 + $0x40] sm:$0xf]
      %v3438 = vld [vmem:[%s3420 + $0x44] sm:$0xf]
      %v3439 = vld [vmem:[%s3420 + $0x48] sm:$0xf]
      %v3440 = vld [vmem:[%s3420 + $0x4c] sm:$0xf]
      %v3441 = vld [vmem:[%s3420 + $0x50] sm:$0xf]
      %v3442 = vld [vmem:[%s3420 + $0x54] sm:$0xf]
      %v3443 = vld [vmem:[%s3420 + $0x58] sm:$0xf]
      %v3444 = vld [vmem:[%s3420 + $0x5c] sm:$0xf]
      %v3477 = vunpack.c.l.b16 %v3364
      %v3478 = vunpack.c.h.b16 %v3364
      %v3479 = vunpack.c.l.b16 %v3365
      %v3480 = vunpack.c.h.b16 %v3365
      %v3481 = vunpack.c.l.b16 %v3366
      %v3482 = vunpack.c.h.b16 %v3366
      %v3483 = vunpack.c.l.b16 %v3367
      %v3484 = vunpack.c.h.b16 %v3367
      %v3485 = vunpack.c.l.b16 %v3368
      %v3486 = vunpack.c.h.b16 %v3368
      %v3487 = vunpack.c.l.b16 %v3369
      %v3488 = vunpack.c.h.b16 %v3369
      %v3489 = vunpack.c.l.b16 %v3370
      %v3490 = vunpack.c.h.b16 %v3370
      %v3491 = vunpack.c.l.b16 %v3371
      %v3492 = vunpack.c.h.b16 %v3371
      %v3493 = vunpack.c.l.b16 %v3372
      %v3494 = vunpack.c.h.b16 %v3372
      %v3495 = vunpack.c.l.b16 %v3373
      %v3496 = vunpack.c.h.b16 %v3373
      %v3497 = vunpack.c.l.b16 %v3374
      %v3498 = vunpack.c.h.b16 %v3374
      %v3499 = vunpack.c.l.b16 %v3375
      %v3500 = vunpack.c.h.b16 %v3375
      %v3501 = vunpack.c.l.b16 %v3376
      %v3502 = vunpack.c.h.b16 %v3376
      %v3503 = vunpack.c.l.b16 %v3377
      %v3504 = vunpack.c.h.b16 %v3377
      %v3505 = vunpack.c.l.b16 %v3378
      %v3506 = vunpack.c.h.b16 %v3378
      %v3507 = vunpack.c.l.b16 %v3379
      %v3508 = vunpack.c.h.b16 %v3379
      %v3509 = vunpack.c.l.b16 %v3380
      %v3510 = vunpack.c.h.b16 %v3380
      %v3511 = vunpack.c.l.b16 %v3381
      %v3512 = vunpack.c.h.b16 %v3381
      %v3513 = vunpack.c.l.b16 %v3382
      %v3514 = vunpack.c.h.b16 %v3382
      %v3515 = vunpack.c.l.b16 %v3383
      %v3516 = vunpack.c.h.b16 %v3383
      %v3517 = vunpack.c.l.b16 %v3384
      %v3518 = vunpack.c.h.b16 %v3384
      %v3519 = vunpack.c.l.b16 %v3385
      %v3520 = vunpack.c.h.b16 %v3385
      %v3521 = vunpack.c.l.b16 %v3386
      %v3522 = vunpack.c.h.b16 %v3386
      %v3523 = vunpack.c.l.b16 %v3387
      %v3524 = vunpack.c.h.b16 %v3387
      %v3525 = vunpack.c.l.b16 %v3388
      %v3526 = vunpack.c.h.b16 %v3388
      %v3527 = vunpack.c.l.b16 %v3389
      %v3528 = vunpack.c.h.b16 %v3389
      %v3529 = vunpack.c.l.b16 %v3390
      %v3530 = vunpack.c.h.b16 %v3390
      %v3531 = vunpack.c.l.b16 %v3391
      %v3532 = vunpack.c.h.b16 %v3391
      %v3533 = vunpack.c.l.b16 %v3392
      %v3534 = vunpack.c.h.b16 %v3392
      %v3535 = vunpack.c.l.b16 %v3393
      %v3536 = vunpack.c.h.b16 %v3393
      %v3537 = vunpack.c.l.b16 %v3418
      %v3538 = vunpack.c.h.b16 %v3418
      %v3539 = vunpack.c.l.b16 %v3419
      %v3540 = vunpack.c.h.b16 %v3419
      %v3541 = vpack.c.b16 %v3479, %v3477
      %v3542 = vpack.c.b16 %v3480, %v3478
      %v3543 = vpack.c.b16 %v3483, %v3481
      %v3544 = vpack.c.b16 %v3484, %v3482
      %v3545 = vpack.c.b16 %v3487, %v3485
      %v3546 = vpack.c.b16 %v3488, %v3486
      %v3547 = vpack.c.b16 %v3491, %v3489
      %v3548 = vpack.c.b16 %v3492, %v3490
      %v3549 = vpack.c.b16 %v3495, %v3493
      %v3550 = vpack.c.b16 %v3496, %v3494
      %v3551 = vpack.c.b16 %v3499, %v3497
      %v3552 = vpack.c.b16 %v3500, %v3498
      %v3553 = vpack.c.b16 %v3503, %v3501
      %v3554 = vpack.c.b16 %v3504, %v3502
      %v3555 = vpack.c.b16 %v3507, %v3505
      %v3556 = vpack.c.b16 %v3508, %v3506
      %v3557 = vpack.c.b16 %v3511, %v3509
      %v3558 = vpack.c.b16 %v3512, %v3510
      %v3559 = vpack.c.b16 %v3515, %v3513
      %v3560 = vpack.c.b16 %v3516, %v3514
      %v3561 = vpack.c.b16 %v3519, %v3517
      %v3562 = vpack.c.b16 %v3520, %v3518
      %v3563 = vpack.c.b16 %v3523, %v3521
      %v3564 = vpack.c.b16 %v3524, %v3522
      %v3565 = vpack.c.b16 %v3527, %v3525
      %v3566 = vpack.c.b16 %v3528, %v3526
      %v3567 = vpack.c.b16 %v3531, %v3529
      %v3568 = vpack.c.b16 %v3532, %v3530
      %v3569 = vpack.c.b16 %v3535, %v3533
      %v3570 = vpack.c.b16 %v3536, %v3534
      %v3571 = vpack.c.b16 %v3539, %v3537
      %v3572 = vpack.c.b16 %v3540, %v3538
      %v3613 = vunpack.c.l.b16 %v3421
      %v3614 = vunpack.c.l.b16 %v3422
      %v3615 = vunpack.c.l.b16 %v3423
      %v3616 = vunpack.c.l.b16 %v3424
      %v3617 = vunpack.c.l.b16 %v3425
      %v3618 = vunpack.c.l.b16 %v3426
      %v3619 = vunpack.c.l.b16 %v3427
      %v3620 = vunpack.c.l.b16 %v3428
      %v3621 = vunpack.c.l.b16 %v3429
      %v3622 = vunpack.c.l.b16 %v3430
      %v3623 = vunpack.c.l.b16 %v3431
      %v3624 = vunpack.c.l.b16 %v3432
      %v3625 = vunpack.c.l.b16 %v3433
      %v3626 = vunpack.c.l.b16 %v3434
      %v3627 = vunpack.c.l.b16 %v3435
      %v3628 = vunpack.c.l.b16 %v3436
      %v3629 = vunpack.c.l.b16 %v3437
      %v3630 = vunpack.c.l.b16 %v3438
      %v3631 = vunpack.c.l.b16 %v3439
      %v3632 = vunpack.c.l.b16 %v3440
      %v3633 = vunpack.c.l.b16 %v3441
      %v3634 = vunpack.c.l.b16 %v3442
      %v3635 = vunpack.c.l.b16 %v3443
      %v3636 = vunpack.c.l.b16 %v3444
      %v3637 = vpack.c.b16 %v3614, %v3613
      %v3638 = vpack.c.b16 %v3616, %v3615
      %v3639 = vpack.c.b16 %v3618, %v3617
      %v3640 = vpack.c.b16 %v3620, %v3619
      %v3641 = vpack.c.b16 %v3622, %v3621
      %v3642 = vpack.c.b16 %v3624, %v3623
      %v3643 = vpack.c.b16 %v3626, %v3625
      %v3644 = vpack.c.b16 %v3628, %v3627
      %v3645 = vpack.c.b16 %v3630, %v3629
      %v3646 = vpack.c.b16 %v3632, %v3631
      %v3647 = vpack.c.b16 %v3634, %v3633
      %v3648 = vpack.c.b16 %v3636, %v3635
      %v3662 = vsel %vm245, %v3542, 0
      %v3665 = vsel %vm245, %v3544, 0
      %v3668 = vsel %vm245, %v3546, 0
      %v3671 = vsel %vm245, %v3548, 0
      %v3674 = vsel %vm245, %v3550, 0
      %v3677 = vsel %vm245, %v3552, 0
      %v3680 = vsel %vm245, %v3554, 0
      %v3683 = vsel %vm245, %v3556, 0
      %v3686 = vsel %vm245, %v3558, 0
      %v3689 = vsel %vm245, %v3560, 0
      %v3692 = vsel %vm245, %v3562, 0
      %v3695 = vsel %vm245, %v3564, 0
      %v3698 = vsel %vm245, %v3566, 0
      %v3701 = vsel %vm245, %v3568, 0
      %v3704 = vsel %vm245, %v3570, 0
      %v3707 = vsel %vm245, %v3572, 0
      %3709 = vmatprep.subr.bf16.mxu0 0
      %3710 = vmatpush1.bf16.msra.mxu0 %v3644
      %3711 = vmatprep.subr.bf16.mxu0 0
      %3712 = vmatpush1.bf16.msra.mxu0 %v3643
      %3713 = vmatprep.subr.bf16.mxu0 0
      %3714 = vmatpush1.bf16.msra.mxu0 %v3642
      %3715 = vmatprep.subr.bf16.mxu0 0
      %3716 = vmatpush1.bf16.msra.mxu0 %v3641
      %3717 = vmatprep.subr.bf16.mxu0 0
      %3718 = vmatpush1.bf16.msra.mxu0 %v3640
      %3719 = vmatprep.subr.bf16.mxu0 0
      %3720 = vmatpush1.bf16.msra.mxu0 %v3639
      %3721 = vmatprep.subr.bf16.mxu0 0
      %3722 = vmatpush1.bf16.msra.mxu0 %v3638
      %3723 = vmatprep.subr.bf16.mxu0 0
      %3724 = vmatpush1.bf16.msra.mxu0 %v3637
      %3725 = vmatprep.subr.bf16.mxu0 0
      %3726 = vmatpush2.bf16.msra.mxu0 0
      %3727 = vmatprep.subr.bf16.mxu0 0
      %3728 = vmatpush2.bf16.msra.mxu0 0
      %3729 = vmatprep.subr.bf16.mxu0 0
      %3730 = vmatpush2.bf16.msra.mxu0 0
      %3731 = vmatprep.subr.bf16.mxu0 0
      %3732 = vmatpush2.bf16.msra.mxu0 0
      %3733 = vmatprep.subr.bf16.mxu0 0
      %3734 = vmatpush2.bf16.msra.mxu0 %v3648
      %3735 = vmatprep.subr.bf16.mxu0 0
      %3736 = vmatpush2.bf16.msra.mxu0 %v3647
      %3737 = vmatprep.subr.bf16.mxu0 0
      %3738 = vmatpush2.bf16.msra.mxu0 %v3646
      %3739 = vmatprep.subr.bf16.mxu0 0
      %3740 = vmatpush2.bf16.msra.mxu0 %v3645
      %3741 = vmatprep.mubr.bf16.mxu0 %v3662
      %3742 = vmatmul.mubr.bf16.gmra.mxu0 %v3541
      %v3743 = vpop.f32.mrf.mxu0
      %v3744 = vadd.f32 0.0, %v3743
      %v3745 = vpop.f32.mrf.mxu0
      %v3746 = vpop.f32.mrf.mxu0
      %v3747 = vadd.f32 0.0, %v3746
      %v3748 = vpop.f32.mrf.mxu0
      %3749 = vmatprep.mubr.bf16.mxu0 %v3665
      %3750 = vmatmul.mubr.bf16.gmra.mxu0 %v3543
      %v3751 = vpop.f32.mrf.mxu0
      %v3752 = vadd.f32 0.0, %v3751
      %v3753 = vpop.f32.mrf.mxu0
      %v3754 = vpop.f32.mrf.mxu0
      %v3755 = vadd.f32 0.0, %v3754
      %v3756 = vpop.f32.mrf.mxu0
      %3757 = vmatprep.mubr.bf16.mxu0 %v3668
      %3758 = vmatmul.mubr.bf16.gmra.mxu0 %v3545
      %v3759 = vpop.f32.mrf.mxu0
      %v3760 = vadd.f32 0.0, %v3759
      %v3761 = vpop.f32.mrf.mxu0
      %v3762 = vpop.f32.mrf.mxu0
      %v3763 = vadd.f32 0.0, %v3762
      %v3764 = vpop.f32.mrf.mxu0
      %3765 = vmatprep.mubr.bf16.mxu0 %v3671
      %3766 = vmatmul.mubr.bf16.gmra.mxu0 %v3547
      %v3767 = vpop.f32.mrf.mxu0
      %v3768 = vadd.f32 0.0, %v3767
      %v3769 = vpop.f32.mrf.mxu0
      %v3770 = vpop.f32.mrf.mxu0
      %v3771 = vadd.f32 0.0, %v3770
      %v3772 = vpop.f32.mrf.mxu0
      %3773 = vmatprep.mubr.bf16.mxu0 %v3674
      %3774 = vmatmul.mubr.bf16.gmra.mxu0 %v3549
      %v3775 = vpop.f32.mrf.mxu0
      %v3776 = vadd.f32 0.0, %v3775
      %v3777 = vpop.f32.mrf.mxu0
      %v3778 = vpop.f32.mrf.mxu0
      %v3779 = vadd.f32 0.0, %v3778
      %v3780 = vpop.f32.mrf.mxu0
      %3781 = vmatprep.mubr.bf16.mxu0 %v3677
      %3782 = vmatmul.mubr.bf16.gmra.mxu0 %v3551
      %v3783 = vpop.f32.mrf.mxu0
      %v3784 = vadd.f32 0.0, %v3783
      %v3785 = vpop.f32.mrf.mxu0
      %v3786 = vpop.f32.mrf.mxu0
      %v3787 = vadd.f32 0.0, %v3786
      %v3788 = vpop.f32.mrf.mxu0
      %3789 = vmatprep.mubr.bf16.mxu0 %v3680
      %3790 = vmatmul.mubr.bf16.gmra.mxu0 %v3553
      %v3791 = vpop.f32.mrf.mxu0
      %v3792 = vadd.f32 0.0, %v3791
      %v3793 = vpop.f32.mrf.mxu0
      %v3794 = vpop.f32.mrf.mxu0
      %v3795 = vadd.f32 0.0, %v3794
      %v3796 = vpop.f32.mrf.mxu0
      %3797 = vmatprep.mubr.bf16.mxu0 %v3683
      %3798 = vmatmul.mubr.bf16.gmra.mxu0 %v3555
      %v3799 = vpop.f32.mrf.mxu0
      %v3800 = vadd.f32 0.0, %v3799
      %v3801 = vpop.f32.mrf.mxu0
      %v3802 = vpop.f32.mrf.mxu0
      %v3803 = vadd.f32 0.0, %v3802
      %v3804 = vpop.f32.mrf.mxu0
      %3805 = vmatprep.mubr.bf16.mxu0 %v3686
      %3806 = vmatmul.mubr.bf16.gmra.mxu0 %v3557
      %v3807 = vpop.f32.mrf.mxu0
      %v3808 = vadd.f32 0.0, %v3807
      %v3809 = vpop.f32.mrf.mxu0
      %v3810 = vpop.f32.mrf.mxu0
      %v3811 = vadd.f32 0.0, %v3810
      %v3812 = vpop.f32.mrf.mxu0
      %3813 = vmatprep.mubr.bf16.mxu0 %v3689
      %3814 = vmatmul.mubr.bf16.gmra.mxu0 %v3559
      %v3815 = vpop.f32.mrf.mxu0
      %v3816 = vadd.f32 0.0, %v3815
      %v3817 = vpop.f32.mrf.mxu0
      %v3818 = vpop.f32.mrf.mxu0
      %v3819 = vadd.f32 0.0, %v3818
      %v3820 = vpop.f32.mrf.mxu0
      %3821 = vmatprep.mubr.bf16.mxu0 %v3692
      %3822 = vmatmul.mubr.bf16.gmra.mxu0 %v3561
      %v3823 = vpop.f32.mrf.mxu0
      %v3824 = vadd.f32 0.0, %v3823
      %v3825 = vpop.f32.mrf.mxu0
      %v3826 = vpop.f32.mrf.mxu0
      %v3827 = vadd.f32 0.0, %v3826
      %v3828 = vpop.f32.mrf.mxu0
      %3829 = vmatprep.mubr.bf16.mxu0 %v3695
      %3830 = vmatmul.mubr.bf16.gmra.mxu0 %v3563
      %v3831 = vpop.f32.mrf.mxu0
      %v3832 = vadd.f32 0.0, %v3831
      %v3833 = vpop.f32.mrf.mxu0
      %v3834 = vpop.f32.mrf.mxu0
      %v3835 = vadd.f32 0.0, %v3834
      %v3836 = vpop.f32.mrf.mxu0
      %3837 = vmatprep.mubr.bf16.mxu0 %v3698
      %3838 = vmatmul.mubr.bf16.gmra.mxu0 %v3565
      %v3839 = vpop.f32.mrf.mxu0
      %v3840 = vadd.f32 0.0, %v3839
      %v3841 = vpop.f32.mrf.mxu0
      %v3842 = vpop.f32.mrf.mxu0
      %v3843 = vadd.f32 0.0, %v3842
      %v3844 = vpop.f32.mrf.mxu0
      %3845 = vmatprep.mubr.bf16.mxu0 %v3701
      %3846 = vmatmul.mubr.bf16.gmra.mxu0 %v3567
      %v3847 = vpop.f32.mrf.mxu0
      %v3848 = vadd.f32 0.0, %v3847
      %v3849 = vpop.f32.mrf.mxu0
      %v3850 = vpop.f32.mrf.mxu0
      %v3851 = vadd.f32 0.0, %v3850
      %v3852 = vpop.f32.mrf.mxu0
      %3853 = vmatprep.mubr.bf16.mxu0 %v3704
      %3854 = vmatmul.mubr.bf16.gmra.mxu0 %v3569
      %v3855 = vpop.f32.mrf.mxu0
      %v3856 = vadd.f32 0.0, %v3855
      %v3857 = vpop.f32.mrf.mxu0
      %v3858 = vpop.f32.mrf.mxu0
      %v3859 = vadd.f32 0.0, %v3858
      %v3860 = vpop.f32.mrf.mxu0
      %3861 = vmatprep.mubr.bf16.mxu0 %v3707
      %3862 = vmatmul.mubr.bf16.gmra.mxu0 %v3571
      %v3863 = vpop.f32.mrf.mxu0
      %v3864 = vadd.f32 0.0, %v3863
      %v3865 = vpop.f32.mrf.mxu0
      %v3866 = vpop.f32.mrf.mxu0
      %v3867 = vadd.f32 0.0, %v3866
      %v3868 = vpop.f32.mrf.mxu0
      %3869 = vdwg.mxu0
      %v3872 = vunpack.c.l.b16 %v3362
      %v3873 = vunpack.c.h.b16 %v3362
      %v3874 = vunpack.c.l.b16 %v3363
      %v3875 = vunpack.c.h.b16 %v3363
      %v3876 = vpack.c.b16 %v3874, %v3872
      %v3877 = vpack.c.b16 %v3875, %v3873
      %v3903 = vunpack.c.l.b16 %v3394
      %v3904 = vunpack.c.l.b16 %v3395
      %v3905 = vunpack.c.l.b16 %v3396
      %v3906 = vunpack.c.l.b16 %v3397
      %v3907 = vunpack.c.l.b16 %v3398
      %v3908 = vunpack.c.l.b16 %v3399
      %v3909 = vunpack.c.l.b16 %v3400
      %v3910 = vunpack.c.l.b16 %v3401
      %v3911 = vunpack.c.l.b16 %v3402
      %v3912 = vunpack.c.l.b16 %v3403
      %v3913 = vunpack.c.l.b16 %v3404
      %v3914 = vunpack.c.l.b16 %v3405
      %v3915 = vunpack.c.l.b16 %v3406
      %v3916 = vunpack.c.l.b16 %v3407
      %v3917 = vunpack.c.l.b16 %v3408
      %v3918 = vunpack.c.l.b16 %v3409
      %v3919 = vunpack.c.l.b16 %v3410
      %v3920 = vunpack.c.l.b16 %v3411
      %v3921 = vunpack.c.l.b16 %v3412
      %v3922 = vunpack.c.l.b16 %v3413
      %v3923 = vunpack.c.l.b16 %v3414
      %v3924 = vunpack.c.l.b16 %v3415
      %v3925 = vunpack.c.l.b16 %v3416
      %v3926 = vunpack.c.l.b16 %v3417
      %v3927 = vpack.c.b16 %v3904, %v3903
      %v3928 = vpack.c.b16 %v3906, %v3905
      %v3929 = vpack.c.b16 %v3908, %v3907
      %v3930 = vpack.c.b16 %v3910, %v3909
      %v3931 = vpack.c.b16 %v3912, %v3911
      %v3932 = vpack.c.b16 %v3914, %v3913
      %v3933 = vpack.c.b16 %v3916, %v3915
      %v3934 = vpack.c.b16 %v3918, %v3917
      %v3935 = vpack.c.b16 %v3920, %v3919
      %v3936 = vpack.c.b16 %v3922, %v3921
      %v3937 = vpack.c.b16 %v3924, %v3923
      %v3938 = vpack.c.b16 %v3926, %v3925
      %v3952 = vsel %vm245, %v3877, 0
      %3954 = vmatprep.subr.bf16.mxu0 0
      %3955 = vmatpush1.bf16.msra.mxu0 %v3934
      %3956 = vmatprep.subr.bf16.mxu0 0
      %3957 = vmatpush1.bf16.msra.mxu0 %v3933
      %3958 = vmatprep.subr.bf16.mxu0 0
      %3959 = vmatpush1.bf16.msra.mxu0 %v3932
      %3960 = vmatprep.subr.bf16.mxu0 0
      %3961 = vmatpush1.bf16.msra.mxu0 %v3931
      %3962 = vmatprep.subr.bf16.mxu0 0
      %3963 = vmatpush1.bf16.msra.mxu0 %v3930
      %3964 = vmatprep.subr.bf16.mxu0 0
      %3965 = vmatpush1.bf16.msra.mxu0 %v3929
      %3966 = vmatprep.subr.bf16.mxu0 0
      %3967 = vmatpush1.bf16.msra.mxu0 %v3928
      %3968 = vmatprep.subr.bf16.mxu0 0
      %3969 = vmatpush1.bf16.msra.mxu0 %v3927
      %3970 = vmatprep.subr.bf16.mxu0 0
      %3971 = vmatpush2.bf16.msra.mxu0 0
      %3972 = vmatprep.subr.bf16.mxu0 0
      %3973 = vmatpush2.bf16.msra.mxu0 0
      %3974 = vmatprep.subr.bf16.mxu0 0
      %3975 = vmatpush2.bf16.msra.mxu0 0
      %3976 = vmatprep.subr.bf16.mxu0 0
      %3977 = vmatpush2.bf16.msra.mxu0 0
      %3978 = vmatprep.subr.bf16.mxu0 0
      %3979 = vmatpush2.bf16.msra.mxu0 %v3938
      %3980 = vmatprep.subr.bf16.mxu0 0
      %3981 = vmatpush2.bf16.msra.mxu0 %v3937
      %3982 = vmatprep.subr.bf16.mxu0 0
      %3983 = vmatpush2.bf16.msra.mxu0 %v3936
      %3984 = vmatprep.subr.bf16.mxu0 0
      %3985 = vmatpush2.bf16.msra.mxu0 %v3935
      %3986 = vmatprep.mubr.bf16.mxu0 %v3952
      %3987 = vmatmul.mubr.bf16.gmra.mxu0 %v3876
      %v3988 = vpop.f32.mrf.mxu0
      %v3989 = vadd.f32 %v3744, %v3988
      %v3990 = vpop.f32.mrf.mxu0
      %v3991 = vpop.f32.mrf.mxu0
      %v3992 = vadd.f32 %v3747, %v3991
      %v3993 = vpop.f32.mrf.mxu0
      %3994 = vmatprep.mubr.bf16.mxu0 %v3662
      %3995 = vmatmul.mubr.bf16.gmra.mxu0 %v3541
      %v3996 = vpop.f32.mrf.mxu0
      %v3997 = vadd.f32 %v3752, %v3996
      %v3998 = vpop.f32.mrf.mxu0
      %v3999 = vpop.f32.mrf.mxu0
      %v4000 = vadd.f32 %v3755, %v3999
      %v4001 = vpop.f32.mrf.mxu0
      %4002 = vmatprep.mubr.bf16.mxu0 %v3665
      %4003 = vmatmul.mubr.bf16.gmra.mxu0 %v3543
      %v4004 = vpop.f32.mrf.mxu0
      %v4005 = vadd.f32 %v3760, %v4004
      %v4006 = vpop.f32.mrf.mxu0
      %v4007 = vpop.f32.mrf.mxu0
      %v4008 = vadd.f32 %v3763, %v4007
      %v4009 = vpop.f32.mrf.mxu0
      %4010 = vmatprep.mubr.bf16.mxu0 %v3668
      %4011 = vmatmul.mubr.bf16.gmra.mxu0 %v3545
      %v4012 = vpop.f32.mrf.mxu0
      %v4013 = vadd.f32 %v3768, %v4012
      %v4014 = vpop.f32.mrf.mxu0
      %v4015 = vpop.f32.mrf.mxu0
      %v4016 = vadd.f32 %v3771, %v4015
      %v4017 = vpop.f32.mrf.mxu0
      %4018 = vmatprep.mubr.bf16.mxu0 %v3671
      %4019 = vmatmul.mubr.bf16.gmra.mxu0 %v3547
      %v4020 = vpop.f32.mrf.mxu0
      %v4021 = vadd.f32 %v3776, %v4020
      %v4022 = vpop.f32.mrf.mxu0
      %v4023 = vpop.f32.mrf.mxu0
      %v4024 = vadd.f32 %v3779, %v4023
      %v4025 = vpop.f32.mrf.mxu0
      %4026 = vmatprep.mubr.bf16.mxu0 %v3674
      %4027 = vmatmul.mubr.bf16.gmra.mxu0 %v3549
      %v4028 = vpop.f32.mrf.mxu0
      %v4029 = vadd.f32 %v3784, %v4028
      %v4030 = vpop.f32.mrf.mxu0
      %v4031 = vpop.f32.mrf.mxu0
      %v4032 = vadd.f32 %v3787, %v4031
      %v4033 = vpop.f32.mrf.mxu0
      %4034 = vmatprep.mubr.bf16.mxu0 %v3677
      %4035 = vmatmul.mubr.bf16.gmra.mxu0 %v3551
      %v4036 = vpop.f32.mrf.mxu0
      %v4037 = vadd.f32 %v3792, %v4036
      %v4038 = vpop.f32.mrf.mxu0
      %v4039 = vpop.f32.mrf.mxu0
      %v4040 = vadd.f32 %v3795, %v4039
      %v4041 = vpop.f32.mrf.mxu0
      %4042 = vmatprep.mubr.bf16.mxu0 %v3680
      %4043 = vmatmul.mubr.bf16.gmra.mxu0 %v3553
      %v4044 = vpop.f32.mrf.mxu0
      %v4045 = vadd.f32 %v3800, %v4044
      %v4046 = vpop.f32.mrf.mxu0
      %v4047 = vpop.f32.mrf.mxu0
      %v4048 = vadd.f32 %v3803, %v4047
      %v4049 = vpop.f32.mrf.mxu0
      %4050 = vmatprep.mubr.bf16.mxu0 %v3683
      %4051 = vmatmul.mubr.bf16.gmra.mxu0 %v3555
      %v4052 = vpop.f32.mrf.mxu0
      %v4053 = vadd.f32 %v3808, %v4052
      %v4054 = vpop.f32.mrf.mxu0
      %v4055 = vpop.f32.mrf.mxu0
      %v4056 = vadd.f32 %v3811, %v4055
      %v4057 = vpop.f32.mrf.mxu0
      %4058 = vmatprep.mubr.bf16.mxu0 %v3686
      %4059 = vmatmul.mubr.bf16.gmra.mxu0 %v3557
      %v4060 = vpop.f32.mrf.mxu0
      %v4061 = vadd.f32 %v3816, %v4060
      %v4062 = vpop.f32.mrf.mxu0
      %v4063 = vpop.f32.mrf.mxu0
      %v4064 = vadd.f32 %v3819, %v4063
      %v4065 = vpop.f32.mrf.mxu0
      %4066 = vmatprep.mubr.bf16.mxu0 %v3689
      %4067 = vmatmul.mubr.bf16.gmra.mxu0 %v3559
      %v4068 = vpop.f32.mrf.mxu0
      %v4069 = vadd.f32 %v3824, %v4068
      %v4070 = vpop.f32.mrf.mxu0
      %v4071 = vpop.f32.mrf.mxu0
      %v4072 = vadd.f32 %v3827, %v4071
      %v4073 = vpop.f32.mrf.mxu0
      %4074 = vmatprep.mubr.bf16.mxu0 %v3692
      %4075 = vmatmul.mubr.bf16.gmra.mxu0 %v3561
      %v4076 = vpop.f32.mrf.mxu0
      %v4077 = vadd.f32 %v3832, %v4076
      %v4078 = vpop.f32.mrf.mxu0
      %v4079 = vpop.f32.mrf.mxu0
      %v4080 = vadd.f32 %v3835, %v4079
      %v4081 = vpop.f32.mrf.mxu0
      %4082 = vmatprep.mubr.bf16.mxu0 %v3695
      %4083 = vmatmul.mubr.bf16.gmra.mxu0 %v3563
      %v4084 = vpop.f32.mrf.mxu0
      %v4085 = vadd.f32 %v3840, %v4084
      %v4086 = vpop.f32.mrf.mxu0
      %v4087 = vpop.f32.mrf.mxu0
      %v4088 = vadd.f32 %v3843, %v4087
      %v4089 = vpop.f32.mrf.mxu0
      %4090 = vmatprep.mubr.bf16.mxu0 %v3698
      %4091 = vmatmul.mubr.bf16.gmra.mxu0 %v3565
      %v4092 = vpop.f32.mrf.mxu0
      %v4093 = vadd.f32 %v3848, %v4092
      %v4094 = vpop.f32.mrf.mxu0
      %v4095 = vpop.f32.mrf.mxu0
      %v4096 = vadd.f32 %v3851, %v4095
      %v4097 = vpop.f32.mrf.mxu0
      %4098 = vmatprep.mubr.bf16.mxu0 %v3701
      %4099 = vmatmul.mubr.bf16.gmra.mxu0 %v3567
      %v4100 = vpop.f32.mrf.mxu0
      %v4101 = vadd.f32 %v3856, %v4100
      %v4102 = vpop.f32.mrf.mxu0
      %v4103 = vpop.f32.mrf.mxu0
      %v4104 = vadd.f32 %v3859, %v4103
      %v4105 = vpop.f32.mrf.mxu0
      %4106 = vmatprep.mubr.bf16.mxu0 %v3704
      %4107 = vmatmul.mubr.bf16.gmra.mxu0 %v3569
      %v4108 = vpop.f32.mrf.mxu0
      %v4109 = vadd.f32 %v3864, %v4108
      %v4110 = vpop.f32.mrf.mxu0
      %v4111 = vpop.f32.mrf.mxu0
      %v4112 = vadd.f32 %v3867, %v4111
      %v4113 = vpop.f32.mrf.mxu0
      %4114 = vdwg.mxu0
      %v4115 = vld [vmem:[#allocation3 + $0x20] sm:$0xff]
      %v4116 = vld [vmem:[#allocation3 + $0x28] sm:$0xff]
      %v4117 = vld [vmem:[#allocation3 + $0x30] sm:$0xff]
      %v4118 = vld [vmem:[#allocation3 + $0x38] sm:$0xff]
      %v4119 = vld [vmem:[#allocation3 + $0x40] sm:$0xff]
      %v4120 = vld [vmem:[#allocation3 + $0x48] sm:$0xff]
      %v4121 = vld [vmem:[#allocation3 + $0x50] sm:$0xff]
      %v4122 = vld [vmem:[#allocation3 + $0x58] sm:$0xff]
      %v4123 = vld [vmem:[#allocation3 + $0x60] sm:$0xff]
      %v4124 = vld [vmem:[#allocation3 + $0x68] sm:$0xff]
      %v4125 = vld [vmem:[#allocation3 + $0x70] sm:$0xff]
      %v4126 = vld [vmem:[#allocation3 + $0x78] sm:$0xff]
      %v4127 = vld [vmem:[#allocation3 + $0x80] sm:$0xff]
      %v4128 = vld [vmem:[#allocation3 + $0x88] sm:$0xff]
      %v4129 = vld [vmem:[#allocation3 + $0x90] sm:$0xff]
      %v4130 = vld [vmem:[#allocation3 + $0x98] sm:$0xff]
      %v4131 = vld [vmem:[#allocation3 + $0xa0] sm:$0xff]
      %v4132 = vld [vmem:[#allocation3 + $0xa8] sm:$0xff]
      %v4133 = vld [vmem:[#allocation3 + $0xb0] sm:$0xff]
      %v4134 = vld [vmem:[#allocation3 + $0xb8] sm:$0xff]
      %v4135 = vld [vmem:[#allocation3 + $0xc0] sm:$0xff]
      %v4136 = vld [vmem:[#allocation3 + $0xc8] sm:$0xff]
      %v4137 = vld [vmem:[#allocation3 + $0xd0] sm:$0xff]
      %v4138 = vld [vmem:[#allocation3 + $0xd8] sm:$0xff]
      %v4139 = vld [vmem:[#allocation3 + $0xe0] sm:$0xff]
      %v4140 = vld [vmem:[#allocation3 + $0xe8] sm:$0xff]
      %v4141 = vld [vmem:[#allocation3 + $0xf0] sm:$0xff]
      %v4142 = vld [vmem:[#allocation3 + $0xf8] sm:$0xff]
      %v4143 = vld [vmem:[#allocation3 + $0x100] sm:$0xff]
      %v4144 = vld [vmem:[#allocation3 + $0x108] sm:$0xff]
      %v4145 = vld [vmem:[#allocation3 + $0x110] sm:$0xff]
      %v4146 = vld [vmem:[#allocation3 + $0x118] sm:$0xff]
      %s4147 = scalar_lea.vmem %s2, 192
      %v4148 = vld [vmem:[%s4147] sm:$0xf]
      %v4149 = vld [vmem:[%s4147 + $0x4] sm:$0xf]
      %v4150 = vld [vmem:[%s4147 + $0x8] sm:$0xf]
      %v4151 = vld [vmem:[%s4147 + $0xc] sm:$0xf]
      %v4152 = vld [vmem:[%s4147 + $0x10] sm:$0xf]
      %v4153 = vld [vmem:[%s4147 + $0x14] sm:$0xf]
      %v4154 = vld [vmem:[%s4147 + $0x18] sm:$0xf]
      %v4155 = vld [vmem:[%s4147 + $0x1c] sm:$0xf]
      %v4156 = vld [vmem:[%s4147 + $0x20] sm:$0xf]
      %v4157 = vld [vmem:[%s4147 + $0x24] sm:$0xf]
      %v4158 = vld [vmem:[%s4147 + $0x28] sm:$0xf]
      %v4159 = vld [vmem:[%s4147 + $0x2c] sm:$0xf]
      %v4160 = vld [vmem:[%s4147 + $0x30] sm:$0xf]
      %v4161 = vld [vmem:[%s4147 + $0x34] sm:$0xf]
      %v4162 = vld [vmem:[%s4147 + $0x38] sm:$0xf]
      %v4163 = vld [vmem:[%s4147 + $0x3c] sm:$0xf]
      %v4164 = vld [vmem:[%s4147 + $0x40] sm:$0xf]
      %v4165 = vld [vmem:[%s4147 + $0x44] sm:$0xf]
      %v4166 = vld [vmem:[%s4147 + $0x48] sm:$0xf]
      %v4167 = vld [vmem:[%s4147 + $0x4c] sm:$0xf]
      %v4168 = vld [vmem:[%s4147 + $0x50] sm:$0xf]
      %v4169 = vld [vmem:[%s4147 + $0x54] sm:$0xf]
      %v4170 = vld [vmem:[%s4147 + $0x58] sm:$0xf]
      %v4171 = vld [vmem:[%s4147 + $0x5c] sm:$0xf]
      %v4204 = vunpack.c.l.b16 %v4115
      %v4205 = vunpack.c.h.b16 %v4115
      %v4206 = vunpack.c.l.b16 %v4116
      %v4207 = vunpack.c.h.b16 %v4116
      %v4208 = vunpack.c.l.b16 %v4117
      %v4209 = vunpack.c.h.b16 %v4117
      %v4210 = vunpack.c.l.b16 %v4118
      %v4211 = vunpack.c.h.b16 %v4118
      %v4212 = vunpack.c.l.b16 %v4119
      %v4213 = vunpack.c.h.b16 %v4119
      %v4214 = vunpack.c.l.b16 %v4120
      %v4215 = vunpack.c.h.b16 %v4120
      %v4216 = vunpack.c.l.b16 %v4121
      %v4217 = vunpack.c.h.b16 %v4121
      %v4218 = vunpack.c.l.b16 %v4122
      %v4219 = vunpack.c.h.b16 %v4122
      %v4220 = vunpack.c.l.b16 %v4123
      %v4221 = vunpack.c.h.b16 %v4123
      %v4222 = vunpack.c.l.b16 %v4124
      %v4223 = vunpack.c.h.b16 %v4124
      %v4224 = vunpack.c.l.b16 %v4125
      %v4225 = vunpack.c.h.b16 %v4125
      %v4226 = vunpack.c.l.b16 %v4126
      %v4227 = vunpack.c.h.b16 %v4126
      %v4228 = vunpack.c.l.b16 %v4127
      %v4229 = vunpack.c.h.b16 %v4127
      %v4230 = vunpack.c.l.b16 %v4128
      %v4231 = vunpack.c.h.b16 %v4128
      %v4232 = vunpack.c.l.b16 %v4129
      %v4233 = vunpack.c.h.b16 %v4129
      %v4234 = vunpack.c.l.b16 %v4130
      %v4235 = vunpack.c.h.b16 %v4130
      %v4236 = vunpack.c.l.b16 %v4131
      %v4237 = vunpack.c.h.b16 %v4131
      %v4238 = vunpack.c.l.b16 %v4132
      %v4239 = vunpack.c.h.b16 %v4132
      %v4240 = vunpack.c.l.b16 %v4133
      %v4241 = vunpack.c.h.b16 %v4133
      %v4242 = vunpack.c.l.b16 %v4134
      %v4243 = vunpack.c.h.b16 %v4134
      %v4244 = vunpack.c.l.b16 %v4135
      %v4245 = vunpack.c.h.b16 %v4135
      %v4246 = vunpack.c.l.b16 %v4136
      %v4247 = vunpack.c.h.b16 %v4136
      %v4248 = vunpack.c.l.b16 %v4137
      %v4249 = vunpack.c.h.b16 %v4137
      %v4250 = vunpack.c.l.b16 %v4138
      %v4251 = vunpack.c.h.b16 %v4138
      %v4252 = vunpack.c.l.b16 %v4139
      %v4253 = vunpack.c.h.b16 %v4139
      %v4254 = vunpack.c.l.b16 %v4140
      %v4255 = vunpack.c.h.b16 %v4140
      %v4256 = vunpack.c.l.b16 %v4141
      %v4257 = vunpack.c.h.b16 %v4141
      %v4258 = vunpack.c.l.b16 %v4142
      %v4259 = vunpack.c.h.b16 %v4142
      %v4260 = vunpack.c.l.b16 %v4143
      %v4261 = vunpack.c.h.b16 %v4143
      %v4262 = vunpack.c.l.b16 %v4144
      %v4263 = vunpack.c.h.b16 %v4144
      %v4264 = vunpack.c.l.b16 %v4145
      %v4265 = vunpack.c.h.b16 %v4145
      %v4266 = vunpack.c.l.b16 %v4146
      %v4267 = vunpack.c.h.b16 %v4146
      %v4268 = vpack.c.b16 %v4206, %v4204
      %v4269 = vpack.c.b16 %v4207, %v4205
      %v4270 = vpack.c.b16 %v4210, %v4208
      %v4271 = vpack.c.b16 %v4211, %v4209
      %v4272 = vpack.c.b16 %v4214, %v4212
      %v4273 = vpack.c.b16 %v4215, %v4213
      %v4274 = vpack.c.b16 %v4218, %v4216
      %v4275 = vpack.c.b16 %v4219, %v4217
      %v4276 = vpack.c.b16 %v4222, %v4220
      %v4277 = vpack.c.b16 %v4223, %v4221
      %v4278 = vpack.c.b16 %v4226, %v4224
      %v4279 = vpack.c.b16 %v4227, %v4225
      %v4280 = vpack.c.b16 %v4230, %v4228
      %v4281 = vpack.c.b16 %v4231, %v4229
      %v4282 = vpack.c.b16 %v4234, %v4232
      %v4283 = vpack.c.b16 %v4235, %v4233
      %v4284 = vpack.c.b16 %v4238, %v4236
      %v4285 = vpack.c.b16 %v4239, %v4237
      %v4286 = vpack.c.b16 %v4242, %v4240
      %v4287 = vpack.c.b16 %v4243, %v4241
      %v4288 = vpack.c.b16 %v4246, %v4244
      %v4289 = vpack.c.b16 %v4247, %v4245
      %v4290 = vpack.c.b16 %v4250, %v4248
      %v4291 = vpack.c.b16 %v4251, %v4249
      %v4292 = vpack.c.b16 %v4254, %v4252
      %v4293 = vpack.c.b16 %v4255, %v4253
      %v4294 = vpack.c.b16 %v4258, %v4256
      %v4295 = vpack.c.b16 %v4259, %v4257
      %v4296 = vpack.c.b16 %v4262, %v4260
      %v4297 = vpack.c.b16 %v4263, %v4261
      %v4298 = vpack.c.b16 %v4266, %v4264
      %v4299 = vpack.c.b16 %v4267, %v4265
      %v4340 = vunpack.c.l.b16 %v4148
      %v4341 = vunpack.c.l.b16 %v4149
      %v4342 = vunpack.c.l.b16 %v4150
      %v4343 = vunpack.c.l.b16 %v4151
      %v4344 = vunpack.c.l.b16 %v4152
      %v4345 = vunpack.c.l.b16 %v4153
      %v4346 = vunpack.c.l.b16 %v4154
      %v4347 = vunpack.c.l.b16 %v4155
      %v4348 = vunpack.c.l.b16 %v4156
      %v4349 = vunpack.c.l.b16 %v4157
      %v4350 = vunpack.c.l.b16 %v4158
      %v4351 = vunpack.c.l.b16 %v4159
      %v4352 = vunpack.c.l.b16 %v4160
      %v4353 = vunpack.c.l.b16 %v4161
      %v4354 = vunpack.c.l.b16 %v4162
      %v4355 = vunpack.c.l.b16 %v4163
      %v4356 = vunpack.c.l.b16 %v4164
      %v4357 = vunpack.c.l.b16 %v4165
      %v4358 = vunpack.c.l.b16 %v4166
      %v4359 = vunpack.c.l.b16 %v4167
      %v4360 = vunpack.c.l.b16 %v4168
      %v4361 = vunpack.c.l.b16 %v4169
      %v4362 = vunpack.c.l.b16 %v4170
      %v4363 = vunpack.c.l.b16 %v4171
      %v4364 = vpack.c.b16 %v4341, %v4340
      %v4365 = vpack.c.b16 %v4343, %v4342
      %v4366 = vpack.c.b16 %v4345, %v4344
      %v4367 = vpack.c.b16 %v4347, %v4346
      %v4368 = vpack.c.b16 %v4349, %v4348
      %v4369 = vpack.c.b16 %v4351, %v4350
      %v4370 = vpack.c.b16 %v4353, %v4352
      %v4371 = vpack.c.b16 %v4355, %v4354
      %v4372 = vpack.c.b16 %v4357, %v4356
      %v4373 = vpack.c.b16 %v4359, %v4358
      %v4374 = vpack.c.b16 %v4361, %v4360
      %v4375 = vpack.c.b16 %v4363, %v4362
      %v4389 = vsel %vm245, %v4269, 0
      %v4392 = vsel %vm245, %v4271, 0
      %v4395 = vsel %vm245, %v4273, 0
      %v4398 = vsel %vm245, %v4275, 0
      %v4401 = vsel %vm245, %v4277, 0
      %v4404 = vsel %vm245, %v4279, 0
      %v4407 = vsel %vm245, %v4281, 0
      %v4410 = vsel %vm245, %v4283, 0
      %v4413 = vsel %vm245, %v4285, 0
      %v4416 = vsel %vm245, %v4287, 0
      %v4419 = vsel %vm245, %v4289, 0
      %v4422 = vsel %vm245, %v4291, 0
      %v4425 = vsel %vm245, %v4293, 0
      %v4428 = vsel %vm245, %v4295, 0
      %v4431 = vsel %vm245, %v4297, 0
      %v4434 = vsel %vm245, %v4299, 0
      %4436 = vmatprep.subr.bf16.mxu0 0
      %4437 = vmatpush1.bf16.msra.mxu0 %v4371
      %4438 = vmatprep.subr.bf16.mxu0 0
      %4439 = vmatpush1.bf16.msra.mxu0 %v4370
      %4440 = vmatprep.subr.bf16.mxu0 0
      %4441 = vmatpush1.bf16.msra.mxu0 %v4369
      %4442 = vmatprep.subr.bf16.mxu0 0
      %4443 = vmatpush1.bf16.msra.mxu0 %v4368
      %4444 = vmatprep.subr.bf16.mxu0 0
      %4445 = vmatpush1.bf16.msra.mxu0 %v4367
      %4446 = vmatprep.subr.bf16.mxu0 0
      %4447 = vmatpush1.bf16.msra.mxu0 %v4366
      %4448 = vmatprep.subr.bf16.mxu0 0
      %4449 = vmatpush1.bf16.msra.mxu0 %v4365
      %4450 = vmatprep.subr.bf16.mxu0 0
      %4451 = vmatpush1.bf16.msra.mxu0 %v4364
      %4452 = vmatprep.subr.bf16.mxu0 0
      %4453 = vmatpush2.bf16.msra.mxu0 0
      %4454 = vmatprep.subr.bf16.mxu0 0
      %4455 = vmatpush2.bf16.msra.mxu0 0
      %4456 = vmatprep.subr.bf16.mxu0 0
      %4457 = vmatpush2.bf16.msra.mxu0 0
      %4458 = vmatprep.subr.bf16.mxu0 0
      %4459 = vmatpush2.bf16.msra.mxu0 0
      %4460 = vmatprep.subr.bf16.mxu0 0
      %4461 = vmatpush2.bf16.msra.mxu0 %v4375
      %4462 = vmatprep.subr.bf16.mxu0 0
      %4463 = vmatpush2.bf16.msra.mxu0 %v4374
      %4464 = vmatprep.subr.bf16.mxu0 0
      %4465 = vmatpush2.bf16.msra.mxu0 %v4373
      %4466 = vmatprep.subr.bf16.mxu0 0
      %4467 = vmatpush2.bf16.msra.mxu0 %v4372
      %4468 = vmatprep.mubr.bf16.mxu0 %v4389
      %4469 = vmatmul.mubr.bf16.gmra.mxu0 %v4268
      %v4470 = vpop.f32.mrf.mxu0
      %v4471 = vadd.f32 0.0, %v4470
      %v4472 = vpop.f32.mrf.mxu0
      %v4473 = vpop.f32.mrf.mxu0
      %v4474 = vadd.f32 0.0, %v4473
      %v4475 = vpop.f32.mrf.mxu0
      %4476 = vmatprep.mubr.bf16.mxu0 %v4392
      %4477 = vmatmul.mubr.bf16.gmra.mxu0 %v4270
      %v4478 = vpop.f32.mrf.mxu0
      %v4479 = vadd.f32 0.0, %v4478
      %v4480 = vpop.f32.mrf.mxu0
      %v4481 = vpop.f32.mrf.mxu0
      %v4482 = vadd.f32 0.0, %v4481
      %v4483 = vpop.f32.mrf.mxu0
      %4484 = vmatprep.mubr.bf16.mxu0 %v4395
      %4485 = vmatmul.mubr.bf16.gmra.mxu0 %v4272
      %v4486 = vpop.f32.mrf.mxu0
      %v4487 = vadd.f32 0.0, %v4486
      %v4488 = vpop.f32.mrf.mxu0
      %v4489 = vpop.f32.mrf.mxu0
      %v4490 = vadd.f32 0.0, %v4489
      %v4491 = vpop.f32.mrf.mxu0
      %4492 = vmatprep.mubr.bf16.mxu0 %v4398
      %4493 = vmatmul.mubr.bf16.gmra.mxu0 %v4274
      %v4494 = vpop.f32.mrf.mxu0
      %v4495 = vadd.f32 0.0, %v4494
      %v4496 = vpop.f32.mrf.mxu0
      %v4497 = vpop.f32.mrf.mxu0
      %v4498 = vadd.f32 0.0, %v4497
      %v4499 = vpop.f32.mrf.mxu0
      %4500 = vmatprep.mubr.bf16.mxu0 %v4401
      %4501 = vmatmul.mubr.bf16.gmra.mxu0 %v4276
      %v4502 = vpop.f32.mrf.mxu0
      %v4503 = vadd.f32 0.0, %v4502
      %v4504 = vpop.f32.mrf.mxu0
      %v4505 = vpop.f32.mrf.mxu0
      %v4506 = vadd.f32 0.0, %v4505
      %v4507 = vpop.f32.mrf.mxu0
      %4508 = vmatprep.mubr.bf16.mxu0 %v4404
      %4509 = vmatmul.mubr.bf16.gmra.mxu0 %v4278
      %v4510 = vpop.f32.mrf.mxu0
      %v4511 = vadd.f32 0.0, %v4510
      %v4512 = vpop.f32.mrf.mxu0
      %v4513 = vpop.f32.mrf.mxu0
      %v4514 = vadd.f32 0.0, %v4513
      %v4515 = vpop.f32.mrf.mxu0
      %4516 = vmatprep.mubr.bf16.mxu0 %v4407
      %4517 = vmatmul.mubr.bf16.gmra.mxu0 %v4280
      %v4518 = vpop.f32.mrf.mxu0
      %v4519 = vadd.f32 0.0, %v4518
      %v4520 = vpop.f32.mrf.mxu0
      %v4521 = vpop.f32.mrf.mxu0
      %v4522 = vadd.f32 0.0, %v4521
      %v4523 = vpop.f32.mrf.mxu0
      %4524 = vmatprep.mubr.bf16.mxu0 %v4410
      %4525 = vmatmul.mubr.bf16.gmra.mxu0 %v4282
      %v4526 = vpop.f32.mrf.mxu0
      %v4527 = vadd.f32 0.0, %v4526
      %v4528 = vpop.f32.mrf.mxu0
      %v4529 = vpop.f32.mrf.mxu0
      %v4530 = vadd.f32 0.0, %v4529
      %v4531 = vpop.f32.mrf.mxu0
      %4532 = vmatprep.mubr.bf16.mxu0 %v4413
      %4533 = vmatmul.mubr.bf16.gmra.mxu0 %v4284
      %v4534 = vpop.f32.mrf.mxu0
      %v4535 = vadd.f32 0.0, %v4534
      %v4536 = vpop.f32.mrf.mxu0
      %v4537 = vpop.f32.mrf.mxu0
      %v4538 = vadd.f32 0.0, %v4537
      %v4539 = vpop.f32.mrf.mxu0
      %4540 = vmatprep.mubr.bf16.mxu0 %v4416
      %4541 = vmatmul.mubr.bf16.gmra.mxu0 %v4286
      %v4542 = vpop.f32.mrf.mxu0
      %v4543 = vadd.f32 0.0, %v4542
      %v4544 = vpop.f32.mrf.mxu0
      %v4545 = vpop.f32.mrf.mxu0
      %v4546 = vadd.f32 0.0, %v4545
      %v4547 = vpop.f32.mrf.mxu0
      %4548 = vmatprep.mubr.bf16.mxu0 %v4419
      %4549 = vmatmul.mubr.bf16.gmra.mxu0 %v4288
      %v4550 = vpop.f32.mrf.mxu0
      %v4551 = vadd.f32 0.0, %v4550
      %v4552 = vpop.f32.mrf.mxu0
      %v4553 = vpop.f32.mrf.mxu0
      %v4554 = vadd.f32 0.0, %v4553
      %v4555 = vpop.f32.mrf.mxu0
      %4556 = vmatprep.mubr.bf16.mxu0 %v4422
      %4557 = vmatmul.mubr.bf16.gmra.mxu0 %v4290
      %v4558 = vpop.f32.mrf.mxu0
      %v4559 = vadd.f32 0.0, %v4558
      %v4560 = vpop.f32.mrf.mxu0
      %v4561 = vpop.f32.mrf.mxu0
      %v4562 = vadd.f32 0.0, %v4561
      %v4563 = vpop.f32.mrf.mxu0
      %4564 = vmatprep.mubr.bf16.mxu0 %v4425
      %4565 = vmatmul.mubr.bf16.gmra.mxu0 %v4292
      %v4566 = vpop.f32.mrf.mxu0
      %v4567 = vadd.f32 0.0, %v4566
      %v4568 = vpop.f32.mrf.mxu0
      %v4569 = vpop.f32.mrf.mxu0
      %v4570 = vadd.f32 0.0, %v4569
      %v4571 = vpop.f32.mrf.mxu0
      %4572 = vmatprep.mubr.bf16.mxu0 %v4428
      %4573 = vmatmul.mubr.bf16.gmra.mxu0 %v4294
      %v4574 = vpop.f32.mrf.mxu0
      %v4575 = vadd.f32 0.0, %v4574
      %v4576 = vpop.f32.mrf.mxu0
      %v4577 = vpop.f32.mrf.mxu0
      %v4578 = vadd.f32 0.0, %v4577
      %v4579 = vpop.f32.mrf.mxu0
      %4580 = vmatprep.mubr.bf16.mxu0 %v4431
      %4581 = vmatmul.mubr.bf16.gmra.mxu0 %v4296
      %v4582 = vpop.f32.mrf.mxu0
      %v4583 = vadd.f32 0.0, %v4582
      %v4584 = vpop.f32.mrf.mxu0
      %v4585 = vpop.f32.mrf.mxu0
      %v4586 = vadd.f32 0.0, %v4585
      %v4587 = vpop.f32.mrf.mxu0
      %4588 = vmatprep.mubr.bf16.mxu0 %v4434
      %4589 = vmatmul.mubr.bf16.gmra.mxu0 %v4298
      %v4590 = vpop.f32.mrf.mxu0
      %v4591 = vadd.f32 0.0, %v4590
      %v4592 = vpop.f32.mrf.mxu0
      %v4593 = vpop.f32.mrf.mxu0
      %v4594 = vadd.f32 0.0, %v4593
      %v4595 = vpop.f32.mrf.mxu0
      %4596 = vdwg.mxu0
      %v4597 = vadd.f32 %v3989, %v4471
      %v4598 = vadd.f32 %v3992, %v4474
      %v4599 = vadd.f32 %v3997, %v4479
      %v4600 = vadd.f32 %v4000, %v4482
      %v4601 = vadd.f32 %v4005, %v4487
      %v4602 = vadd.f32 %v4008, %v4490
      %v4603 = vadd.f32 %v4013, %v4495
      %v4604 = vadd.f32 %v4016, %v4498
      %v4605 = vadd.f32 %v4021, %v4503
      %v4606 = vadd.f32 %v4024, %v4506
      %v4607 = vadd.f32 %v4029, %v4511
      %v4608 = vadd.f32 %v4032, %v4514
      %v4609 = vadd.f32 %v4037, %v4519
      %v4610 = vadd.f32 %v4040, %v4522
      %v4611 = vadd.f32 %v4045, %v4527
      %v4612 = vadd.f32 %v4048, %v4530
      %v4613 = vadd.f32 %v4053, %v4535
      %v4614 = vadd.f32 %v4056, %v4538
      %v4615 = vadd.f32 %v4061, %v4543
      %v4616 = vadd.f32 %v4064, %v4546
      %v4617 = vadd.f32 %v4069, %v4551
      %v4618 = vadd.f32 %v4072, %v4554
      %v4619 = vadd.f32 %v4077, %v4559
      %v4620 = vadd.f32 %v4080, %v4562
      %v4621 = vadd.f32 %v4085, %v4567
      %v4622 = vadd.f32 %v4088, %v4570
      %v4623 = vadd.f32 %v4093, %v4575
      %v4624 = vadd.f32 %v4096, %v4578
      %v4625 = vadd.f32 %v4101, %v4583
      %v4626 = vadd.f32 %v4104, %v4586
      %v4627 = vadd.f32 %v4109, %v4591
      %v4628 = vadd.f32 %v4112, %v4594
      %v4629 = vlaneseq
      %v4630 = vshrl.u32 %v4629, 7
      %v4631 = vsub.s32 0, %v4630
      %v4632 = vrot.slane %v204, %v4631
      %v4633 = vmul.f32 %v4597, %v4632
      %v4634 = vmul.f32 %v4598, %v4632
      %v4635 = vmul.f32 %v4599, %v4632
      %v4636 = vmul.f32 %v4600, %v4632
      %v4637 = vmul.f32 %v4601, %v4632
      %v4638 = vmul.f32 %v4602, %v4632
      %v4639 = vmul.f32 %v4603, %v4632
      %v4640 = vmul.f32 %v4604, %v4632
      %v4641 = vmul.f32 %v4605, %v4632
      %v4642 = vmul.f32 %v4606, %v4632
      %v4643 = vmul.f32 %v4607, %v4632
      %v4644 = vmul.f32 %v4608, %v4632
      %v4645 = vmul.f32 %v4609, %v4632
      %v4646 = vmul.f32 %v4610, %v4632
      %v4647 = vmul.f32 %v4611, %v4632
      %v4648 = vmul.f32 %v4612, %v4632
      %v4649 = vmul.f32 %v4613, %v4632
      %v4650 = vmul.f32 %v4614, %v4632
      %v4651 = vmul.f32 %v4615, %v4632
      %v4652 = vmul.f32 %v4616, %v4632
      %v4653 = vmul.f32 %v4617, %v4632
      %v4654 = vmul.f32 %v4618, %v4632
      %v4655 = vmul.f32 %v4619, %v4632
      %v4656 = vmul.f32 %v4620, %v4632
      %v4657 = vmul.f32 %v4621, %v4632
      %v4658 = vmul.f32 %v4622, %v4632
      %v4659 = vmul.f32 %v4623, %v4632
      %v4660 = vmul.f32 %v4624, %v4632
      %v4661 = vmul.f32 %v4625, %v4632
      %v4662 = vmul.f32 %v4626, %v4632
      %v4663 = vmul.f32 %v4627, %v4632
      %v4664 = vmul.f32 %v4628, %v4632
      %v4665 = vlaneseq
      %v4666 = vshrl.u32 %v4665, 7
      %v4667 = vsub.s32 0, %v4666
      %v4668 = vrot.slane %v205, %v4667
      %v4669 = vadd.f32 %v4633, %v4668
      %v4670 = vadd.f32 %v4634, %v4668
      %v4671 = vadd.f32 %v4635, %v4668
      %v4672 = vadd.f32 %v4636, %v4668
      %v4673 = vadd.f32 %v4637, %v4668
      %v4674 = vadd.f32 %v4638, %v4668
      %v4675 = vadd.f32 %v4639, %v4668
      %v4676 = vadd.f32 %v4640, %v4668
      %v4677 = vadd.f32 %v4641, %v4668
      %v4678 = vadd.f32 %v4642, %v4668
      %v4679 = vadd.f32 %v4643, %v4668
      %v4680 = vadd.f32 %v4644, %v4668
      %v4681 = vadd.f32 %v4645, %v4668
      %v4682 = vadd.f32 %v4646, %v4668
      %v4683 = vadd.f32 %v4647, %v4668
      %v4684 = vadd.f32 %v4648, %v4668
      %v4685 = vadd.f32 %v4649, %v4668
      %v4686 = vadd.f32 %v4650, %v4668
      %v4687 = vadd.f32 %v4651, %v4668
      %v4688 = vadd.f32 %v4652, %v4668
      %v4689 = vadd.f32 %v4653, %v4668
      %v4690 = vadd.f32 %v4654, %v4668
      %v4691 = vadd.f32 %v4655, %v4668
      %v4692 = vadd.f32 %v4656, %v4668
      %v4693 = vadd.f32 %v4657, %v4668
      %v4694 = vadd.f32 %v4658, %v4668
      %v4695 = vadd.f32 %v4659, %v4668
      %v4696 = vadd.f32 %v4660, %v4668
      %v4697 = vadd.f32 %v4661, %v4668
      %v4698 = vadd.f32 %v4662, %v4668
      %v4699 = vadd.f32 %v4663, %v4668
      %v4700 = vadd.f32 %v4664, %v4668
      %v4701 = vld [vmem:[%s192] sm:$0xff]
      %v4702 = vld [vmem:[%s192 + $0x8] sm:$0xff]
      %v4703 = vld [vmem:[%s192 + $0x10] sm:$0xff]
      %v4704 = vld [vmem:[%s192 + $0x18] sm:$0xff]
      %v4705 = vld [vmem:[%s192 + $0x20] sm:$0xff]
      %v4706 = vld [vmem:[%s192 + $0x28] sm:$0xff]
      %v4707 = vld [vmem:[%s192 + $0x30] sm:$0xff]
      %v4708 = vld [vmem:[%s192 + $0x38] sm:$0xff]
      %v4709 = vld [vmem:[%s192 + $0x40] sm:$0xff]
      %v4710 = vld [vmem:[%s192 + $0x48] sm:$0xff]
      %v4711 = vld [vmem:[%s192 + $0x50] sm:$0xff]
      %v4712 = vld [vmem:[%s192 + $0x58] sm:$0xff]
      %v4713 = vld [vmem:[%s192 + $0x60] sm:$0xff]
      %v4714 = vld [vmem:[%s192 + $0x68] sm:$0xff]
      %v4715 = vld [vmem:[%s192 + $0x70] sm:$0xff]
      %v4716 = vld [vmem:[%s192 + $0x78] sm:$0xff]
      %v4717 = vld [vmem:[%s192 + $0x80] sm:$0xff]
      %v4718 = vld [vmem:[%s192 + $0x88] sm:$0xff]
      %v4719 = vld [vmem:[%s192 + $0x90] sm:$0xff]
      %v4720 = vld [vmem:[%s192 + $0x98] sm:$0xff]
      %v4721 = vld [vmem:[%s192 + $0xa0] sm:$0xff]
      %v4722 = vld [vmem:[%s192 + $0xa8] sm:$0xff]
      %v4723 = vld [vmem:[%s192 + $0xb0] sm:$0xff]
      %v4724 = vld [vmem:[%s192 + $0xb8] sm:$0xff]
      %v4725 = vld [vmem:[%s192 + $0xc0] sm:$0xff]
      %v4726 = vld [vmem:[%s192 + $0xc8] sm:$0xff]
      %v4727 = vld [vmem:[%s192 + $0xd0] sm:$0xff]
      %v4728 = vld [vmem:[%s192 + $0xd8] sm:$0xff]
      %v4729 = vld [vmem:[%s192 + $0xe0] sm:$0xff]
      %v4730 = vld [vmem:[%s192 + $0xe8] sm:$0xff]
      %v4731 = vld [vmem:[%s192 + $0xf0] sm:$0xff]
      %v4732 = vld [vmem:[%s192 + $0xf8] sm:$0xff]
      %v4733 = vadd.f32 %v4669, %v4701
      %v4734 = vadd.f32 %v4670, %v4702
      %v4735 = vadd.f32 %v4671, %v4703
      %v4736 = vadd.f32 %v4672, %v4704
      %v4737 = vadd.f32 %v4673, %v4705
      %v4738 = vadd.f32 %v4674, %v4706
      %v4739 = vadd.f32 %v4675, %v4707
      %v4740 = vadd.f32 %v4676, %v4708
      %v4741 = vadd.f32 %v4677, %v4709
      %v4742 = vadd.f32 %v4678, %v4710
      %v4743 = vadd.f32 %v4679, %v4711
      %v4744 = vadd.f32 %v4680, %v4712
      %v4745 = vadd.f32 %v4681, %v4713
      %v4746 = vadd.f32 %v4682, %v4714
      %v4747 = vadd.f32 %v4683, %v4715
      %v4748 = vadd.f32 %v4684, %v4716
      %v4749 = vadd.f32 %v4685, %v4717
      %v4750 = vadd.f32 %v4686, %v4718
      %v4751 = vadd.f32 %v4687, %v4719
      %v4752 = vadd.f32 %v4688, %v4720
      %v4753 = vadd.f32 %v4689, %v4721
      %v4754 = vadd.f32 %v4690, %v4722
      %v4755 = vadd.f32 %v4691, %v4723
      %v4756 = vadd.f32 %v4692, %v4724
      %v4757 = vadd.f32 %v4693, %v4725
      %v4758 = vadd.f32 %v4694, %v4726
      %v4759 = vadd.f32 %v4695, %v4727
      %v4760 = vadd.f32 %v4696, %v4728
      %v4761 = vadd.f32 %v4697, %v4729
      %v4762 = vadd.f32 %v4698, %v4730
      %v4763 = vadd.f32 %v4699, %v4731
      %v4764 = vadd.f32 %v4700, %v4732
      %4765 = vst.msk [vmem:[%s197] sm:$0xff] %vm245, %v4733
      %4766 = vst.msk [vmem:[%s197 + $0x8] sm:$0xff] %vm245, %v4734
      %4767 = vst.msk [vmem:[%s197 + $0x10] sm:$0xff] %vm245, %v4735
      %4768 = vst.msk [vmem:[%s197 + $0x18] sm:$0xff] %vm245, %v4736
      %4769 = vst.msk [vmem:[%s197 + $0x20] sm:$0xff] %vm245, %v4737
      %4770 = vst.msk [vmem:[%s197 + $0x28] sm:$0xff] %vm245, %v4738
      %4771 = vst.msk [vmem:[%s197 + $0x30] sm:$0xff] %vm245, %v4739
      %4772 = vst.msk [vmem:[%s197 + $0x38] sm:$0xff] %vm245, %v4740
      %4773 = vst.msk [vmem:[%s197 + $0x40] sm:$0xff] %vm245, %v4741
      %4774 = vst.msk [vmem:[%s197 + $0x48] sm:$0xff] %vm245, %v4742
      %4775 = vst.msk [vmem:[%s197 + $0x50] sm:$0xff] %vm245, %v4743
      %4776 = vst.msk [vmem:[%s197 + $0x58] sm:$0xff] %vm245, %v4744
      %4777 = vst.msk [vmem:[%s197 + $0x60] sm:$0xff] %vm245, %v4745
      %4778 = vst.msk [vmem:[%s197 + $0x68] sm:$0xff] %vm245, %v4746
      %4779 = vst.msk [vmem:[%s197 + $0x70] sm:$0xff] %vm245, %v4747
      %4780 = vst.msk [vmem:[%s197 + $0x78] sm:$0xff] %vm245, %v4748
      %4781 = vst.msk [vmem:[%s197 + $0x80] sm:$0xff] %vm245, %v4749
      %4782 = vst.msk [vmem:[%s197 + $0x88] sm:$0xff] %vm245, %v4750
      %4783 = vst.msk [vmem:[%s197 + $0x90] sm:$0xff] %vm245, %v4751
      %4784 = vst.msk [vmem:[%s197 + $0x98] sm:$0xff] %vm245, %v4752
      %4785 = vst.msk [vmem:[%s197 + $0xa0] sm:$0xff] %vm245, %v4753
      %4786 = vst.msk [vmem:[%s197 + $0xa8] sm:$0xff] %vm245, %v4754
      %4787 = vst.msk [vmem:[%s197 + $0xb0] sm:$0xff] %vm245, %v4755
      %4788 = vst.msk [vmem:[%s197 + $0xb8] sm:$0xff] %vm245, %v4756
      %4789 = vst.msk [vmem:[%s197 + $0xc0] sm:$0xff] %vm245, %v4757
      %4790 = vst.msk [vmem:[%s197 + $0xc8] sm:$0xff] %vm245, %v4758
      %4791 = vst.msk [vmem:[%s197 + $0xd0] sm:$0xff] %vm245, %v4759
      %4792 = vst.msk [vmem:[%s197 + $0xd8] sm:$0xff] %vm245, %v4760
      %4793 = vst.msk [vmem:[%s197 + $0xe0] sm:$0xff] %vm245, %v4761
      %4794 = vst.msk [vmem:[%s197 + $0xe8] sm:$0xff] %vm245, %v4762
      %4795 = vst.msk [vmem:[%s197 + $0xf0] sm:$0xff] %vm245, %v4763
      %4796 = vst.msk [vmem:[%s197 + $0xf8] sm:$0xff] %vm245, %v4764
      %p4797 = scmp.lt.s32.totalorder %s15, 1
      %s4798 = scalar_select %p4797, %s15, 1
      %s4799 = smul.addr %s4798, 32
      %s4800 = smul.addr %s4799, 8
      %s4801 = scalar_lea.vmem %s4, %s4800
      // Predicated region
      $region37: #{tpu_custom_call.1} parent=35 // pred_check
        %p4802 = pneg %p122
      $region38: #{tpu_custom_call.1} parent=35 // pred_check_branch
        %4804 = sbr.rel (%p4802) target = $region40
      $region39: #{tpu_custom_call.1} parent=35 // pred_region
        _
      $region40: #{tpu_custom_call.1} parent=35 // pred_fallthru
        _
    $region36: #{tpu_custom_call.1} parent=5 // pred_fallthru
      _
    %p4805 = scmp.le.s32.totalorder 2, %s10
    // Predicated region
    $region41: #{tpu_custom_call.1} parent=5 // pred_check
      %p4806 = pneg %p4805
    $region42: #{tpu_custom_call.1} parent=5 // pred_check_branch
      %4808 = sbr.rel (%p4806) target = $region44
    $region43: #{tpu_custom_call.1} parent=5 // pred_region
      %s4809 = ssub.s32 %s10, 2
      // Predicated region
      $region45: #{tpu_custom_call.1} parent=43 // pred_check
        %p4810 = pneg %p128
      $region46: #{tpu_custom_call.1} parent=43 // pred_check_branch
        %4812 = sbr.rel (%p4810) target = $region48
      $region47: #{tpu_custom_call.1} parent=43 // pred_region
        %p4813 = scmp.lt.s32.totalorder %s16, 1
        %s4814 = scalar_select %p4813, %s16, 1
        %s4815 = smul.addr %s4814, 32
        %s4816 = smul.addr %s4815, 8
        %s4817 = scalar_lea.vmem %s4, %s4816
      $region48: #{tpu_custom_call.1} parent=43 // pred_fallthru
        _
    $region44: #{tpu_custom_call.1} parent=5 // pred_fallthru
      _
  $region6: #{tpu_custom_call.1} parent=0 // loop_footer
    %s14 = sadd.s32 1, %s10
  $region7: #{tpu_custom_call.1} parent=0 // loop_footer_branch
    %9 = sbr.rel target = $region3
  $region8: #{tpu_custom_call.1} parent=0 // loop_exit
    _

</llo_original>
